<compile_context>
chip_gen: v6e
topology: v6e:2x2x1
jax: 0.10.0
libtpu: 0.0.40
codegen_flags: <defaults>
</compile_context>

<pallas_src>
import functools
import math

import jax
import jax.numpy as jnp
from jax import lax
from jax.experimental import pallas as pl
from jax.experimental.pallas import tpu as pltpu


def _mha_kernel(x_ref, wq_ref, bq_ref, wkv_ref, bkv_ref, wproj_ref, bproj_ref,
                o_ref, k_scr, v_scr, attn_scr,
                *, heads: int, head_dim: int, seq_len: int, s_pad: int, tq: int):
    # x_ref:   (S_pad, W)      wq_ref: (W, W)    bq_ref: (1, W)
    # wkv_ref: (W, 2W)         bkv_ref: (1, 2W)
    # wproj_ref: (W, W)        bproj_ref: (1, W)
    # o_ref:   (TQ, W)
    # k_scr/v_scr: (S_pad, W) bf16 scratch     attn_scr: (TQ, W) bf16 scratch
    W = heads * head_dim
    cdt = k_scr.dtype                        # bf16 MXU compute dtype
    qi = pl.program_id(1)

    # ---- K / V projection for the whole sequence, once per batch element ----
    @pl.when(qi == 0)
    def _():
        bkv = bkv_ref[...].astype(jnp.float32)
        wkv = wkv_ref[...]
        for c in range(s_pad // tq):         # static chunk loop bounds VMEM use
            r0 = c * tq
            xc = x_ref[pl.ds(r0, tq), :].astype(cdt)
            kv = jnp.dot(xc, wkv, preferred_element_type=jnp.float32) + bkv
            k_scr[pl.ds(r0, tq), :] = kv[:, :W].astype(cdt)
            v_scr[pl.ds(r0, tq), :] = kv[:, W:].astype(cdt)

    # ---- Q projection for this query tile ----
    row0 = pl.multiple_of(qi * tq, tq)
    xq = x_ref[pl.ds(row0, tq), :].astype(cdt)
    q = jnp.dot(xq, wq_ref[...], preferred_element_type=jnp.float32)
    q = q + bq_ref[...].astype(jnp.float32)
    # torch applies scale=1/sqrt(sqrt(d)) to both q and k; apply scale^2 to q.
    q = (q * (1.0 / math.sqrt(head_dim))).astype(cdt)       # (TQ, W) bf16

    need_mask = s_pad > seq_len
    if need_mask:
        valid = lax.broadcasted_iota(jnp.int32, (1, s_pad), 1) < seq_len

    # ---- per-head attention; outputs written straight into VMEM scratch ----
    for h in range(heads):                   # static unroll over heads
        lo = h * head_dim
        qh = q[:, lo:lo + head_dim]                          # (TQ, d)  bf16
        kh = k_scr[:, lo:lo + head_dim]                      # (S_pad, d) bf16
        vh = v_scr[:, lo:lo + head_dim]                      # (S_pad, d) bf16

        # scores = q @ k^T, bf16 operands, f32 accumulation.
        s = lax.dot_general(qh, kh, (((1,), (1,)), ((), ())),
                            preferred_element_type=jnp.float32)   # (TQ, S_pad)
        if need_mask:
            s = jnp.where(valid, s, -1e30)

        # Numerically stable softmax in f32 with deferred normalization.
        m = jnp.max(s, axis=-1, keepdims=True)
        p = jnp.exp(s - m)                                   # (TQ, S_pad) f32
        l = jnp.sum(p, axis=-1, keepdims=True)               # (TQ, 1)     f32
        o = jnp.dot(p.astype(cdt), vh, preferred_element_type=jnp.float32)
        o = o * pl.reciprocal(l, approx=True)                # (TQ, d)     f32
        attn_scr[:, lo:lo + head_dim] = o.astype(cdt)

    # ---- output projection (c_proj); resid_dropout(p=0.0) is identity ----
    y = jnp.dot(attn_scr[...], wproj_ref[...], preferred_element_type=jnp.float32)
    y = y + bproj_ref[...].astype(jnp.float32)
    o_ref[...] = y.astype(o_ref.dtype)


def _vmem_limit_bytes(s_pad, width, tq, x_itemsize):
    """Rough working-set estimate with margin, capped for v7x's 64 MiB VMEM."""
    cdt = 2  # bf16
    weights = (width * width + width * 2 * width + width * width) * cdt + 4 * width * 4
    x_buf = 2 * s_pad * width * x_itemsize            # double-buffered input
    out_buf = 2 * tq * width * x_itemsize             # double-buffered output
    scratch = (2 * s_pad * width + tq * width) * cdt  # K/V cache + attn accumulator
    inter = (3 * tq * s_pad + tq * 3 * width + tq * 2 * width) * 4
    est = weights + x_buf + out_buf + scratch + inter
    return int(min(max(2 * est, 32 * 2 ** 20), 48 * 2 ** 20))


def multihead_attention_pallas(x, wqkv, bqkv, wproj, bproj, *, heads, tq=128,
                               compute_dtype=jnp.bfloat16):
    """x: (B, S, width) -> (B, S, width). Fused qkv + attention + proj kernel.

    Weights are (in_features, out_features) with PyTorch's interleaved per-head
    [q|k|v] column layout for wqkv / bqkv.
    """
    B, S, W = x.shape
    assert W % heads == 0, "width must be divisible by heads"
    head_dim = W // heads

    # Pad the sequence to a multiple of the query tile (lane/sublane friendly).
    S_pad = max(tq, -(-S // tq) * tq)
    if S_pad != S:
        x = jnp.pad(x, ((0, 0), (0, S_pad - S), (0, 0)))
    nq = S_pad // tq

    # Regroup torch's interleaved per-head [q|k|v] columns into [Q | K | V]
    # blocks so in-kernel head slices are contiguous and lane aligned.
    base = jnp.arange(heads)[:, None] * (3 * head_dim) + jnp.arange(head_dim)[None, :]
    perm = jnp.concatenate([(base + s * head_dim).reshape(-1) for s in range(3)])
    wqkv_g = wqkv[:, perm]
    bqkv_g = bqkv[perm]

    # bf16 weights for the MXU (f32 accumulation in-kernel); f32 biases.
    wq = wqkv_g[:, :W].astype(compute_dtype)
    wkv = wqkv_g[:, W:].astype(compute_dtype)
    bq = bqkv_g[:W].reshape(1, W).astype(jnp.float32)
    bkv = bqkv_g[W:].reshape(1, 2 * W).astype(jnp.float32)
    wp = wproj.astype(compute_dtype)
    bp = bproj.reshape(1, W).astype(jnp.float32)

    kernel = functools.partial(_mha_kernel, heads=heads, head_dim=head_dim,
                               seq_len=S, s_pad=S_pad, tq=tq)

    def _resident(shape):
        # Constant index map -> fetched once; single-buffered to halve VMEM.
        return pl.BlockSpec(shape, lambda b, qi: (0,) * len(shape),
                            pipeline_mode=pl.Buffered(1))

    out = pl.pallas_call(
        kernel,
        out_shape=jax.ShapeDtypeStruct((B, S_pad, W), x.dtype),
        grid_spec=pltpu.PrefetchScalarGridSpec(
            num_scalar_prefetch=0,
            grid=(B, nq),
            in_specs=[
                pl.BlockSpec((None, S_pad, W), lambda b, qi: (b, 0, 0)),  # x (batch b)
                _resident((W, W)),          # W_q
                _resident((1, W)),          # b_q
                _resident((W, 2 * W)),      # W_kv
                _resident((1, 2 * W)),      # b_kv
                _resident((W, W)),          # W_proj
                _resident((1, W)),          # b_proj
            ],
            out_specs=pl.BlockSpec((None, tq, W), lambda b, qi: (b, qi, 0)),
            scratch_shapes=[
                pltpu.VMEM((S_pad, W), compute_dtype),   # K cache (all heads)
                pltpu.VMEM((S_pad, W), compute_dtype),   # V cache (all heads)
                pltpu.VMEM((tq, W), compute_dtype),      # per-tile attention output
            ],
        ),
        compiler_params=pltpu.CompilerParams(
            # qi axis carries the K/V scratch state -> must stay "arbitrary".
            dimension_semantics=("parallel", "arbitrary"),
            vmem_limit_bytes=_vmem_limit_bytes(S_pad, W, tq, x.dtype.itemsize),
        ),
    )(x, wq, bq, wkv, bkv, wp, bp)

    if S_pad != S:
        out = out[:, :S, :]
    return out


def init_mha_params(key, width, init_scale=1.0, dtype=jnp.float32):
    """Matches init_linear: weight ~ normal(std=init_scale), bias = 0."""
    k1, k2 = jax.random.split(key)
    wqkv = (jax.random.normal(k1, (width, 3 * width)) * init_scale).astype(dtype)
    bqkv = jnp.zeros((3 * width,), dtype)
    wproj = (jax.random.normal(k2, (width, width)) * init_scale).astype(dtype)
    bproj = jnp.zeros((width,), dtype)
    return wqkv, bqkv, wproj, bproj


def mha_reference(x, wqkv, bqkv, wproj, bproj, *, heads):
    """Pure-JAX mirror of the PyTorch module (non-flash path, exact softmax)."""
    B, S, W = x.shape
    head_dim = W // heads
    qkv = x @ wqkv + bqkv                              # (B, S, 3W)
    qkv = qkv.reshape(B, S, heads, 3 * head_dim)
    q, k, v = (qkv[..., :head_dim],
               qkv[..., head_dim:2 * head_dim],
               qkv[..., 2 * head_dim:])
    scale = 1.0 / math.sqrt(math.sqrt(head_dim))
    w = jnp.einsum('bthc,bshc->bhts', q * scale, k * scale)
    w = jax.nn.softmax(w, axis=-1)
    out = jnp.einsum('bhts,bshc->bthc', w, v).reshape(B, S, W)
    return out @ wproj + bproj


if __name__ == "__main__":
    key = jax.random.PRNGKey(0)
    kx, kp = jax.random.split(key)

    # Small but TPU-friendly shapes: lane-dense width (multiple of 128),
    # seq = one full query tile.  head_dim = 128.
    batch, seq, width, heads = 2, 128, 256, 2
    init_scale = 1.0 / math.sqrt(width)

    x = jax.random.normal(kx, (batch, seq, width), dtype=jnp.float32)
    wqkv, bqkv, wproj, bproj = init_mha_params(kp, width, init_scale=init_scale)

    out = multihead_attention_pallas(x, wqkv, bqkv, wproj, bproj, heads=heads)
    out = jax.block_until_ready(out)

    ref = mha_reference(x, wqkv, bqkv, wproj, bproj, heads=heads)
    assert out.shape == x.shape
    # bf16 MXU operands + approximate reciprocal -> loosened tolerance vs f32 ref.
    assert jnp.allclose(out, ref, atol=2e-2, rtol=2e-2), "mismatch vs reference"

    print("KERNEL_OK")
</pallas_src>

<mosaic_0001>
module attributes {stable_mosaic.version = 11 : i64} {
  func.func @_mha_kernel(%arg0: i32, %arg1: i32, %arg2: memref<1x128x256xf32, #tpu.memory_space<vmem>>, %arg3: memref<256x256xbf16, #tpu.memory_space<vmem>>, %arg4: memref<1x256xf32, #tpu.memory_space<vmem>>, %arg5: memref<256x512xbf16, #tpu.memory_space<vmem>>, %arg6: memref<1x512xf32, #tpu.memory_space<vmem>>, %arg7: memref<256x256xbf16, #tpu.memory_space<vmem>>, %arg8: memref<1x256xf32, #tpu.memory_space<vmem>>, %arg9: memref<1x128x256xf32, #tpu.memory_space<vmem>>, %arg10: memref<128x256xbf16, #tpu.memory_space<vmem>>, %arg11: memref<128x256xbf16, #tpu.memory_space<vmem>>, %arg12: memref<128x256xbf16, #tpu.memory_space<vmem>>) attributes {dimension_semantics = [#tpu.dimension_semantics<parallel>, #tpu.dimension_semantics<arbitrary>], iteration_bounds = array<i64: 2, 1>, scalar_prefetch = 0 : i64, scratch_operands = 3 : i64, tpu.core_type = #tpu.core_type<tc>, window_params = [{transform_indices = @transform_0, window_bounds = array<i64: 1, 128, 256>}, {pipeline_mode = #tpu.pipeline_mode<synchronous>, transform_indices = @transform_1, window_bounds = array<i64: 256, 256>}, {pipeline_mode = #tpu.pipeline_mode<synchronous>, transform_indices = @transform_2, window_bounds = array<i64: 1, 256>}, {pipeline_mode = #tpu.pipeline_mode<synchronous>, transform_indices = @transform_3, window_bounds = array<i64: 256, 512>}, {pipeline_mode = #tpu.pipeline_mode<synchronous>, transform_indices = @transform_4, window_bounds = array<i64: 1, 512>}, {pipeline_mode = #tpu.pipeline_mode<synchronous>, transform_indices = @transform_5, window_bounds = array<i64: 256, 256>}, {pipeline_mode = #tpu.pipeline_mode<synchronous>, transform_indices = @transform_6, window_bounds = array<i64: 1, 256>}, {transform_indices = @transform_7, window_bounds = array<i64: 1, 128, 256>}]} {
    %c0_i32 = arith.constant 0 : i32
    %0 = arith.cmpi eq, %arg1, %c0_i32 : i32
    %1 = arith.extui %0 : i1 to i32
    %c0_i32_0 = arith.constant 0 : i32
    %2 = arith.cmpi ne, %1, %c0_i32_0 : i32
    scf.if %2 {
      %c0_36 = arith.constant 0 : index
      %c0_37 = arith.constant 0 : index
      %62 = vector.load %arg6[%c0_36, %c0_37] : memref<1x512xf32, #tpu.memory_space<vmem>>, vector<1x512xf32>
      %c0_38 = arith.constant 0 : index
      %c0_39 = arith.constant 0 : index
      %63 = vector.load %arg5[%c0_38, %c0_39] : memref<256x512xbf16, #tpu.memory_space<vmem>>, vector<256x512xbf16>
      %c0_40 = arith.constant 0 : index
      %c0_41 = arith.constant 0 : index
      %c0_42 = arith.constant 0 : index
      %64 = vector.load %arg2[%c0_40, %c0_41, %c0_42] : memref<1x128x256xf32, #tpu.memory_space<vmem>>, vector<1x128x256xf32>
      %65 = vector.shape_cast %64 : vector<1x128x256xf32> to vector<128x256xf32>
      %66 = arith.truncf %65 : vector<128x256xf32> to vector<128x256xbf16>
      %cst_43 = arith.constant dense<0.000000e+00> : vector<128x512xf32>
      %67 = tpu.matmul %66, %63, %cst_43 {dimension_numbers = #tpu.dot_dimension_numbers<[1], [0], [0], [1], [0, 0, 1, 1], [], []>} : vector<128x256xbf16>, vector<256x512xbf16>, vector<128x512xf32> -> vector<128x512xf32>
      %68 = vector.broadcast %62 : vector<1x512xf32> to vector<128x512xf32>
      %69 = arith.addf %67, %68 : vector<128x512xf32>
      %70 = vector.extract_strided_slice %69 {offsets = [0, 0], sizes = [128, 256], strides = [1, 1]} : vector<128x512xf32> to vector<128x256xf32>
      %71 = arith.truncf %70 : vector<128x256xf32> to vector<128x256xbf16>
      %c0_44 = arith.constant 0 : index
      %c0_45 = arith.constant 0 : index
      %72 = vector.load %arg10[%c0_44, %c0_45] : memref<128x256xbf16, #tpu.memory_space<vmem>>, vector<128x256xbf16>
      tpu.vector_store %arg10[%c0_44, %c0_45], %71 {strides = array<i32>} : memref<128x256xbf16, #tpu.memory_space<vmem>>, vector<128x256xbf16>,
      %73 = vector.extract_strided_slice %69 {offsets = [0, 256], sizes = [128, 256], strides = [1, 1]} : vector<128x512xf32> to vector<128x256xf32>
      %74 = arith.truncf %73 : vector<128x256xf32> to vector<128x256xbf16>
      %c0_46 = arith.constant 0 : index
      %c0_47 = arith.constant 0 : index
      %75 = vector.load %arg11[%c0_46, %c0_47] : memref<128x256xbf16, #tpu.memory_space<vmem>>, vector<128x256xbf16>
      tpu.vector_store %arg11[%c0_46, %c0_47], %74 {strides = array<i32>} : memref<128x256xbf16, #tpu.memory_space<vmem>>, vector<128x256xbf16>,
    } else {
    }
    %c128_i32 = arith.constant 128 : i32
    %3 = arith.muli %arg1, %c128_i32 : i32
    %4 = tpu.assume_multiple %3, 128 : i32
    %c0 = arith.constant 0 : index
    %5 = arith.index_cast %4 : i32 to index
    %c0_1 = arith.constant 0 : index
    %6 = vector.load %arg2[%c0, %5, %c0_1] : memref<1x128x256xf32, #tpu.memory_space<vmem>>, vector<1x128x256xf32>
    %7 = vector.shape_cast %6 : vector<1x128x256xf32> to vector<128x256xf32>
    %8 = arith.truncf %7 : vector<128x256xf32> to vector<128x256xbf16>
    %c0_2 = arith.constant 0 : index
    %c0_3 = arith.constant 0 : index
    %9 = vector.load %arg3[%c0_2, %c0_3] : memref<256x256xbf16, #tpu.memory_space<vmem>>, vector<256x256xbf16>
    %cst = arith.constant dense<0.000000e+00> : vector<128x256xf32>
    %10 = tpu.matmul %8, %9, %cst {dimension_numbers = #tpu.dot_dimension_numbers<[1], [0], [0], [1], [0, 0, 1, 1], [], []>} : vector<128x256xbf16>, vector<256x256xbf16>, vector<128x256xf32> -> vector<128x256xf32>
    %c0_4 = arith.constant 0 : index
    %c0_5 = arith.constant 0 : index
    %11 = vector.load %arg4[%c0_4, %c0_5] : memref<1x256xf32, #tpu.memory_space<vmem>>, vector<1x256xf32>
    %12 = vector.broadcast %11 : vector<1x256xf32> to vector<128x256xf32>
    %13 = arith.addf %10, %12 : vector<128x256xf32>
    %cst_6 = arith.constant 0.0883883461 : f32
    %14 = vector.broadcast %cst_6 : f32 to vector<128x256xf32>
    %15 = arith.mulf %13, %14 : vector<128x256xf32>
    %16 = arith.truncf %15 : vector<128x256xf32> to vector<128x256xbf16>
    %17 = vector.extract_strided_slice %16 {offsets = [0, 0], sizes = [128, 128], strides = [1, 1]} : vector<128x256xbf16> to vector<128x128xbf16>
    %c0_7 = arith.constant 0 : index
    %c0_8 = arith.constant 0 : index
    %18 = vector.load %arg10[%c0_7, %c0_8] : memref<128x256xbf16, #tpu.memory_space<vmem>>, vector<128x128xbf16>
    %c0_9 = arith.constant 0 : index
    %c0_10 = arith.constant 0 : index
    %19 = vector.load %arg11[%c0_9, %c0_10] : memref<128x256xbf16, #tpu.memory_space<vmem>>, vector<128x128xbf16>
    %cst_11 = arith.constant dense<0.000000e+00> : vector<128x128xf32>
    %20 = tpu.matmul %17, %18, %cst_11 {dimension_numbers = #tpu.dot_dimension_numbers<[1], [1], [0], [0], [0, 0, 1, 0], [], []>} : vector<128x128xbf16>, vector<128x128xbf16>, vector<128x128xf32> -> vector<128x128xf32>
    %cst_12 = arith.constant dense<0xFF800000> : vector<128xf32>
    %21 = vector.multi_reduction <maximumf>, %20, %cst_12 [1] : vector<128x128xf32> to vector<128xf32>
    %22 = vector.shape_cast %21 : vector<128xf32> to vector<128x1xf32>
    %23 = vector.broadcast %22 : vector<128x1xf32> to vector<128x128xf32>
    %24 = arith.subf %20, %23 : vector<128x128xf32>
    %25 = math.exp %24 : vector<128x128xf32>
    %cst_13 = arith.constant dense<0.000000e+00> : vector<128xf32>
    %26 = vector.multi_reduction <add>, %25, %cst_13 [1] : vector<128x128xf32> to vector<128xf32>
    %27 = vector.shape_cast %26 : vector<128xf32> to vector<128x1xf32>
    %28 = arith.truncf %25 : vector<128x128xf32> to vector<128x128xbf16>
    %cst_14 = arith.constant dense<0.000000e+00> : vector<128x128xf32>
    %29 = tpu.matmul %28, %19, %cst_14 {dimension_numbers = #tpu.dot_dimension_numbers<[1], [0], [0], [1], [0, 0, 1, 1], [], []>} : vector<128x128xbf16>, vector<128x128xbf16>, vector<128x128xf32> -> vector<128x128xf32>
    %30 = tpu.reciprocal %27 {approx = true} : vector<128x1xf32> -> vector<128x1xf32>
    %31 = vector.broadcast %30 : vector<128x1xf32> to vector<128x128xf32>
    %32 = arith.mulf %29, %31 : vector<128x128xf32>
    %33 = arith.truncf %32 : vector<128x128xf32> to vector<128x128xbf16>
    %c0_15 = arith.constant 0 : index
    %c0_16 = arith.constant 0 : index
    %34 = vector.load %arg12[%c0_15, %c0_16] : memref<128x256xbf16, #tpu.memory_space<vmem>>, vector<128x128xbf16>
    tpu.vector_store %arg12[%c0_15, %c0_16], %33 {strides = array<i32>} : memref<128x256xbf16, #tpu.memory_space<vmem>>, vector<128x128xbf16>,
    %35 = vector.extract_strided_slice %16 {offsets = [0, 128], sizes = [128, 128], strides = [1, 1]} : vector<128x256xbf16> to vector<128x128xbf16>
    %c0_17 = arith.constant 0 : index
    %c128 = arith.constant 128 : index
    %36 = vector.load %arg10[%c0_17, %c128] : memref<128x256xbf16, #tpu.memory_space<vmem>>, vector<128x128xbf16>
    %c0_18 = arith.constant 0 : index
    %c128_19 = arith.constant 128 : index
    %37 = vector.load %arg11[%c0_18, %c128_19] : memref<128x256xbf16, #tpu.memory_space<vmem>>, vector<128x128xbf16>
    %cst_20 = arith.constant dense<0.000000e+00> : vector<128x128xf32>
    %38 = tpu.matmul %35, %36, %cst_20 {dimension_numbers = #tpu.dot_dimension_numbers<[1], [1], [0], [0], [0, 0, 1, 0], [], []>} : vector<128x128xbf16>, vector<128x128xbf16>, vector<128x128xf32> -> vector<128x128xf32>
    %cst_21 = arith.constant dense<0xFF800000> : vector<128xf32>
    %39 = vector.multi_reduction <maximumf>, %38, %cst_21 [1] : vector<128x128xf32> to vector<128xf32>
    %40 = vector.shape_cast %39 : vector<128xf32> to vector<128x1xf32>
    %41 = vector.broadcast %40 : vector<128x1xf32> to vector<128x128xf32>
    %42 = arith.subf %38, %41 : vector<128x128xf32>
    %43 = math.exp %42 : vector<128x128xf32>
    %cst_22 = arith.constant dense<0.000000e+00> : vector<128xf32>
    %44 = vector.multi_reduction <add>, %43, %cst_22 [1] : vector<128x128xf32> to vector<128xf32>
    %45 = vector.shape_cast %44 : vector<128xf32> to vector<128x1xf32>
    %46 = arith.truncf %43 : vector<128x128xf32> to vector<128x128xbf16>
    %cst_23 = arith.constant dense<0.000000e+00> : vector<128x128xf32>
    %47 = tpu.matmul %46, %37, %cst_23 {dimension_numbers = #tpu.dot_dimension_numbers<[1], [0], [0], [1], [0, 0, 1, 1], [], []>} : vector<128x128xbf16>, vector<128x128xbf16>, vector<128x128xf32> -> vector<128x128xf32>
    %48 = tpu.reciprocal %45 {approx = true} : vector<128x1xf32> -> vector<128x1xf32>
    %49 = vector.broadcast %48 : vector<128x1xf32> to vector<128x128xf32>
    %50 = arith.mulf %47, %49 : vector<128x128xf32>
    %51 = arith.truncf %50 : vector<128x128xf32> to vector<128x128xbf16>
    %c0_24 = arith.constant 0 : index
    %c128_25 = arith.constant 128 : index
    %52 = vector.load %arg12[%c0_24, %c128_25] : memref<128x256xbf16, #tpu.memory_space<vmem>>, vector<128x128xbf16>
    tpu.vector_store %arg12[%c0_24, %c128_25], %51 {strides = array<i32>} : memref<128x256xbf16, #tpu.memory_space<vmem>>, vector<128x128xbf16>,
    %c0_26 = arith.constant 0 : index
    %c0_27 = arith.constant 0 : index
    %53 = vector.load %arg12[%c0_26, %c0_27] : memref<128x256xbf16, #tpu.memory_space<vmem>>, vector<128x256xbf16>
    %c0_28 = arith.constant 0 : index
    %c0_29 = arith.constant 0 : index
    %54 = vector.load %arg7[%c0_28, %c0_29] : memref<256x256xbf16, #tpu.memory_space<vmem>>, vector<256x256xbf16>
    %cst_30 = arith.constant dense<0.000000e+00> : vector<128x256xf32>
    %55 = tpu.matmul %53, %54, %cst_30 {dimension_numbers = #tpu.dot_dimension_numbers<[1], [0], [0], [1], [0, 0, 1, 1], [], []>} : vector<128x256xbf16>, vector<256x256xbf16>, vector<128x256xf32> -> vector<128x256xf32>
    %c0_31 = arith.constant 0 : index
    %c0_32 = arith.constant 0 : index
    %56 = vector.load %arg8[%c0_31, %c0_32] : memref<1x256xf32, #tpu.memory_space<vmem>>, vector<1x256xf32>
    %57 = vector.broadcast %56 : vector<1x256xf32> to vector<128x256xf32>
    %58 = arith.addf %55, %57 : vector<128x256xf32>
    %c0_33 = arith.constant 0 : index
    %c0_34 = arith.constant 0 : index
    %c0_35 = arith.constant 0 : index
    %59 = vector.load %arg9[%c0_33, %c0_34, %c0_35] : memref<1x128x256xf32, #tpu.memory_space<vmem>>, vector<1x128x256xf32>
    %60 = vector.shape_cast %59 : vector<1x128x256xf32> to vector<128x256xf32>
    %61 = vector.shape_cast %58 : vector<128x256xf32> to vector<1x128x256xf32>
    tpu.vector_store %arg9[%c0_33, %c0_34, %c0_35], %61 {strides = array<i32>} : memref<1x128x256xf32, #tpu.memory_space<vmem>>, vector<1x128x256xf32>,
    return
  }
  func.func @transform_0(%arg0: i32, %arg1: i32) -> (i32, i32, i32) {
    %c0_i32 = arith.constant 0 : i32
    %c0_i32_0 = arith.constant 0 : i32
    %c0_i32_1 = arith.constant 0 : i32
    return %arg0, %c0_i32, %c0_i32_0 : i32, i32, i32
  }
  func.func @transform_1(%arg0: i32, %arg1: i32) -> (i32, i32) {
    %c0_i32 = arith.constant 0 : i32
    %c0_i32_0 = arith.constant 0 : i32
    %c0_i32_1 = arith.constant 0 : i32
    return %c0_i32, %c0_i32_0 : i32, i32
  }
  func.func @transform_2(%arg0: i32, %arg1: i32) -> (i32, i32) {
    %c0_i32 = arith.constant 0 : i32
    %c0_i32_0 = arith.constant 0 : i32
    %c0_i32_1 = arith.constant 0 : i32
    return %c0_i32, %c0_i32_0 : i32, i32
  }
  func.func @transform_3(%arg0: i32, %arg1: i32) -> (i32, i32) {
    %c0_i32 = arith.constant 0 : i32
    %c0_i32_0 = arith.constant 0 : i32
    %c0_i32_1 = arith.constant 0 : i32
    return %c0_i32, %c0_i32_0 : i32, i32
  }
  func.func @transform_4(%arg0: i32, %arg1: i32) -> (i32, i32) {
    %c0_i32 = arith.constant 0 : i32
    %c0_i32_0 = arith.constant 0 : i32
    %c0_i32_1 = arith.constant 0 : i32
    return %c0_i32, %c0_i32_0 : i32, i32
  }
  func.func @transform_5(%arg0: i32, %arg1: i32) -> (i32, i32) {
    %c0_i32 = arith.constant 0 : i32
    %c0_i32_0 = arith.constant 0 : i32
    %c0_i32_1 = arith.constant 0 : i32
    return %c0_i32, %c0_i32_0 : i32, i32
  }
  func.func @transform_6(%arg0: i32, %arg1: i32) -> (i32, i32) {
    %c0_i32 = arith.constant 0 : i32
    %c0_i32_0 = arith.constant 0 : i32
    %c0_i32_1 = arith.constant 0 : i32
    return %c0_i32, %c0_i32_0 : i32, i32
  }
  func.func @transform_7(%arg0: i32, %arg1: i32) -> (i32, i32, i32) {
    %c0_i32 = arith.constant 0 : i32
    %c0_i32_0 = arith.constant 0 : i32
    return %arg0, %arg1, %c0_i32 : i32, i32, i32
  }
}

</mosaic_0001>

<llo_original>
// kernel: tpu_custom_call.1
$region0: #{tpu_custom_call.1}
  #allocation0 [shape = 'u32[]', space=smem, size = 0x4, offset = 0x4, fixed_abs, tag = 'smem constant byte address 0x4 - core index']
  #allocation1 [shape = 'u32[144,128]{1,0:T(1,128)}', space=vmem, size = 0x12000, scoped, tag = 'internal scratch']
  #allocation2 [shape = 'bf16[128,256]{1,0:T(8,128)(2,1)}', space=vmem, size = 0x10000, scoped, tag = 'scratch operand']
  #allocation3 [shape = 'bf16[128,256]{1,0:T(8,128)(2,1)}', space=vmem, size = 0x10000, scoped, tag = 'scratch operand']
  #allocation4 [shape = 'bf16[128,256]{1,0:T(8,128)(2,1)}', space=vmem, size = 0x10000, scoped, tag = 'scratch operand']
  %s0 = inlined_call_operand.hbm [shape: f32[2,128,256], index: 0, kind: input, shape index: {}]
  %s1 = inlined_call_operand.hbm [shape: bf16[256,256], index: 1, kind: input, shape index: {}]
  %s2 = inlined_call_operand.vmem [shape: f32[1,256], index: 2, kind: input, shape index: {}]
  %s3 = inlined_call_operand.hbm [shape: bf16[256,512], index: 3, kind: input, shape index: {}]
  %s4 = inlined_call_operand.vmem [shape: f32[1,512], index: 4, kind: input, shape index: {}]
  %s5 = inlined_call_operand.hbm [shape: bf16[256,256], index: 5, kind: input, shape index: {}]
  %s6 = inlined_call_operand.vmem [shape: f32[1,256], index: 6, kind: input, shape index: {}]
  %s7 = inlined_call_operand.hbm [shape: f32[2,128,256], index: 7, kind: output, shape index: {}]
  %s8 = sld [smem:[#allocation0]]
  $region81: #{tpu_custom_call.1} parent=0
    _
  %s10 = ssub.s32 1, %s8
  %s11 = scalar_select 0, %s10, %s8
  $region1: #{tpu_custom_call.1} parent=0
    #allocation5 [shape = 'u8[262144]{0}', space=vmem, size = 0x40000, scoped, tag = 'input window, operand 0']
    #allocation6 [shape = 's32[2]{0}', space=sflag, size = 0x8, scoped, tag = 'scoped memory for tpu_custom_call.1']
    #allocation7 [shape = 's32[2]{0}', space=sflag, size = 0x8, scoped, tag = 'scoped memory for tpu_custom_call.1']
    #allocation8 [shape = 'u8[131072]{0}', space=vmem, size = 0x20000, scoped, tag = 'input window, operand 1, single buffered']
    #allocation9 [shape = 's32[1]{0}', space=sflag, size = 0x4, scoped, tag = 'scoped memory for tpu_custom_call.1']
    #allocation10 [shape = 'u8[262144]{0}', space=vmem, size = 0x40000, scoped, tag = 'input window, operand 3, single buffered']
    #allocation11 [shape = 'u8[131072]{0}', space=vmem, size = 0x20000, scoped, tag = 'input window, operand 5, single buffered']
    #allocation12 [shape = 's32[1]{0}', space=sflag, size = 0x4, scoped, tag = 'scoped memory for tpu_custom_call.1']
    #allocation13 [shape = 'u8[262144]{0}', space=vmem, size = 0x40000, scoped, tag = 'output window, operand 0']
    %12 = vsyncpa [#allocation6], 0
    %s13 = scalar_lea.sflag [#allocation6], 1
    %14 = vsyncpa %s13, 0
    %15 = vsyncpa [#allocation9], 0
    %16 = vsyncpa [#allocation12], 0
    %17 = vsyncpa [#allocation7], 0
    %s18 = scalar_lea.sflag [#allocation7], 1
    %19 = vsyncpa %s18, 0
    loop: start=0, step=1, limit=4
    $region2: #{tpu_custom_call.1} parent=1 // loop_pre_header
      _
    $region3: #{tpu_custom_call.1} parent=1 // loop_header
      %s21 = sphi 0, %s25
      %p22 = scmp.ge.s32.totalorder %s21, 4
      %s28 = sphi 0, %s40
      %s29 = sphi 0, %s36
      %s30 = sphi 0, %s28
      %s31 = sphi 0, %s29
      %s32 = sphi 0, %s30
      %s33 = sphi 0, %s31
      %s43 = sphi 0, %s45
      %s46 = sphi 0, %s43
      %s47 = sphi 0, %s46
      %s63 = sphi 0, %s47
      %s67 = sphi 0, %s67
      %s69 = sphi 0, %s67
      %s70 = sphi 0, %s69
      %s84 = sphi 0, %s70
      %s88 = sphi 0, %s88
      %s90 = sphi 0, %s88
      %s91 = sphi 0, %s90
      %s105 = sphi 0, %s91
      %s109 = sphi 0, %s109
      %s111 = sphi 0, %s109
      %s112 = sphi 0, %s111
      %s126 = sphi 0, %s112
      %s130 = sphi 0, %s130
      %s132 = sphi 0, %s130
      %s133 = sphi 0, %s132
      %s147 = sphi 0, %s133
      %s151 = sphi 0, %s151
      %s153 = sphi 0, %s151
      %s154 = sphi 0, %s153
      %s168 = sphi 0, %s154
      %s172 = sphi 0, %s172
      %s174 = sphi 0, %s172
      %s175 = sphi 0, %s174
      %s189 = sphi 0, %s175
      %s197 = sphi 0, %s199
      %s200 = sphi 0, %s197
      %s201 = sphi 0, %s200
      %s217 = sphi 0, %s201
    $region4: #{tpu_custom_call.1} parent=1 // loop_header_branch
      %24 = sbr.rel (%p22) target = $region8
    $region5: #{tpu_custom_call.1} parent=1 // loop_body
      %s26 = ssub.s32 %s21, 1
      %s27 = ssub.s32 %s21, 2
      %s34 = sadd.s32 1, %s29
      %p35 = scmp.ge.s32.totalorder %s34, 1
      %s36 = scalar_select %p35, 0, %s34
      %s37 = sadd.s32 1, %s28
      %s38 = scalar_select %p35, %s37, %s28
      %p39 = scmp.ge.s32.totalorder %s38, 2
      %s40 = scalar_select %p39, 0, %s38
      %s41 = ssub.s32 %s28, %s40
      %p42 = scmp.eq.s32.totalorder %s41, 0
      %s44 = sadd.s32 %s43, 1
      %s45 = scalar_select %p42, %s43, %s44
      %p48 = pneg %p42
      %p49 = scmp.eq.s32.totalorder %s21, 1
      %p50 = por %p48, %p49
      %p51 = scmp.ne.s32.totalorder %s43, %s46
      %p52 = scmp.eq.s32.totalorder %s21, 0
      %p53 = por %p51, %p52
      %p54 = scmp.ne.s32.totalorder %s43, %s46
      %p55 = scmp.eq.s32.totalorder %s26, 1
      %p56 = por %p54, %p55
      %p57 = scmp.ne.s32.totalorder %s46, %s47
      %p58 = scmp.eq.s32.totalorder %s26, 0
      %p59 = por %p57, %p58
      %p60 = scmp.ne.s32.totalorder %s46, %s47
      %p61 = scmp.eq.s32.totalorder %s27, 1
      %p62 = por %p60, %p61
      %p64 = scmp.ne.s32.totalorder %s47, %s63
      %p65 = scmp.eq.s32.totalorder %s27, 0
      %p66 = por %p64, %p65
      %s68 = sadd.s32 %s67, 1
      %p71 = scmp.eq.s32.totalorder %s21, 1
      %p72 = scmp.ne.s32.totalorder %s67, %s69
      %p73 = scmp.eq.s32.totalorder %s21, 0
      %p74 = por %p72, %p73
      %p75 = scmp.ne.s32.totalorder %s67, %s69
      %p76 = scmp.eq.s32.totalorder %s26, 1
      %p77 = por %p75, %p76
      %p78 = scmp.ne.s32.totalorder %s69, %s70
      %p79 = scmp.eq.s32.totalorder %s26, 0
      %p80 = por %p78, %p79
      %p81 = scmp.ne.s32.totalorder %s69, %s70
      %p82 = scmp.eq.s32.totalorder %s27, 1
      %p83 = por %p81, %p82
      %p85 = scmp.ne.s32.totalorder %s70, %s84
      %p86 = scmp.eq.s32.totalorder %s27, 0
      %p87 = por %p85, %p86
      %s89 = sadd.s32 %s88, 1
      %p92 = scmp.eq.s32.totalorder %s21, 1
      %p93 = scmp.ne.s32.totalorder %s88, %s90
      %p94 = scmp.eq.s32.totalorder %s21, 0
      %p95 = por %p93, %p94
      %p96 = scmp.ne.s32.totalorder %s88, %s90
      %p97 = scmp.eq.s32.totalorder %s26, 1
      %p98 = por %p96, %p97
      %p99 = scmp.ne.s32.totalorder %s90, %s91
      %p100 = scmp.eq.s32.totalorder %s26, 0
      %p101 = por %p99, %p100
      %p102 = scmp.ne.s32.totalorder %s90, %s91
      %p103 = scmp.eq.s32.totalorder %s27, 1
      %p104 = por %p102, %p103
      %p106 = scmp.ne.s32.totalorder %s91, %s105
      %p107 = scmp.eq.s32.totalorder %s27, 0
      %p108 = por %p106, %p107
      %s110 = sadd.s32 %s109, 1
      %p113 = scmp.eq.s32.totalorder %s21, 1
      %p114 = scmp.ne.s32.totalorder %s109, %s111
      %p115 = scmp.eq.s32.totalorder %s21, 0
      %p116 = por %p114, %p115
      %p117 = scmp.ne.s32.totalorder %s109, %s111
      %p118 = scmp.eq.s32.totalorder %s26, 1
      %p119 = por %p117, %p118
      %p120 = scmp.ne.s32.totalorder %s111, %s112
      %p121 = scmp.eq.s32.totalorder %s26, 0
      %p122 = por %p120, %p121
      %p123 = scmp.ne.s32.totalorder %s111, %s112
      %p124 = scmp.eq.s32.totalorder %s27, 1
      %p125 = por %p123, %p124
      %p127 = scmp.ne.s32.totalorder %s112, %s126
      %p128 = scmp.eq.s32.totalorder %s27, 0
      %p129 = por %p127, %p128
      %s131 = sadd.s32 %s130, 1
      %p134 = scmp.eq.s32.totalorder %s21, 1
      %p135 = scmp.ne.s32.totalorder %s130, %s132
      %p136 = scmp.eq.s32.totalorder %s21, 0
      %p137 = por %p135, %p136
      %p138 = scmp.ne.s32.totalorder %s130, %s132
      %p139 = scmp.eq.s32.totalorder %s26, 1
      %p140 = por %p138, %p139
      %p141 = scmp.ne.s32.totalorder %s132, %s133
      %p142 = scmp.eq.s32.totalorder %s26, 0
      %p143 = por %p141, %p142
      %p144 = scmp.ne.s32.totalorder %s132, %s133
      %p145 = scmp.eq.s32.totalorder %s27, 1
      %p146 = por %p144, %p145
      %p148 = scmp.ne.s32.totalorder %s133, %s147
      %p149 = scmp.eq.s32.totalorder %s27, 0
      %p150 = por %p148, %p149
      %s152 = sadd.s32 %s151, 1
      %p155 = scmp.eq.s32.totalorder %s21, 1
      %p156 = scmp.ne.s32.totalorder %s151, %s153
      %p157 = scmp.eq.s32.totalorder %s21, 0
      %p158 = por %p156, %p157
      %p159 = scmp.ne.s32.totalorder %s151, %s153
      %p160 = scmp.eq.s32.totalorder %s26, 1
      %p161 = por %p159, %p160
      %p162 = scmp.ne.s32.totalorder %s153, %s154
      %p163 = scmp.eq.s32.totalorder %s26, 0
      %p164 = por %p162, %p163
      %p165 = scmp.ne.s32.totalorder %s153, %s154
      %p166 = scmp.eq.s32.totalorder %s27, 1
      %p167 = por %p165, %p166
      %p169 = scmp.ne.s32.totalorder %s154, %s168
      %p170 = scmp.eq.s32.totalorder %s27, 0
      %p171 = por %p169, %p170
      %s173 = sadd.s32 %s172, 1
      %p176 = scmp.eq.s32.totalorder %s21, 1
      %p177 = scmp.ne.s32.totalorder %s172, %s174
      %p178 = scmp.eq.s32.totalorder %s21, 0
      %p179 = por %p177, %p178
      %p180 = scmp.ne.s32.totalorder %s172, %s174
      %p181 = scmp.eq.s32.totalorder %s26, 1
      %p182 = por %p180, %p181
      %p183 = scmp.ne.s32.totalorder %s174, %s175
      %p184 = scmp.eq.s32.totalorder %s26, 0
      %p185 = por %p183, %p184
      %p186 = scmp.ne.s32.totalorder %s174, %s175
      %p187 = scmp.eq.s32.totalorder %s27, 1
      %p188 = por %p186, %p187
      %p190 = scmp.ne.s32.totalorder %s175, %s189
      %p191 = scmp.eq.s32.totalorder %s27, 0
      %p192 = por %p190, %p191
      %s193 = ssub.s32 %s28, %s40
      %s194 = ssub.s32 %s29, %s36
      %s195 = sor.u32 %s193, %s194
      %p196 = scmp.eq.s32.totalorder %s195, 0
      %s198 = sadd.s32 %s197, 1
      %s199 = scalar_select %p196, %s197, %s198
      %p202 = pneg %p196
      %p203 = scmp.eq.s32.totalorder %s21, 1
      %p204 = por %p202, %p203
      %p205 = scmp.ne.s32.totalorder %s197, %s200
      %p206 = scmp.eq.s32.totalorder %s21, 0
      %p207 = por %p205, %p206
      %p208 = scmp.ne.s32.totalorder %s197, %s200
      %p209 = scmp.eq.s32.totalorder %s26, 1
      %p210 = por %p208, %p209
      %p211 = scmp.ne.s32.totalorder %s200, %s201
      %p212 = scmp.eq.s32.totalorder %s26, 0
      %p213 = por %p211, %p212
      %p214 = scmp.ne.s32.totalorder %s200, %s201
      %p215 = scmp.eq.s32.totalorder %s27, 1
      %p216 = por %p214, %p215
      %p218 = scmp.ne.s32.totalorder %s201, %s217
      %p219 = scmp.eq.s32.totalorder %s27, 0
      %p220 = por %p218, %p219
      %p221 = scmp.le.s32.totalorder 1, %s21
      %p222 = scmp.lt.s32.totalorder %s21, 3
      %p223 = pnand %p221, %p222
      %p224 = pneg %p223
      // Predicated region
      $region9: #{tpu_custom_call.1} parent=5 // pred_check
        _
      $region10: #{tpu_custom_call.1} parent=5 // pred_check_branch
        %226 = sbr.rel (%p223) target = $region12
      $region11: #{tpu_custom_call.1} parent=5 // pred_region
        %s227 = ssub.s32 %s21, 1
        // Predicated region
        $region13: #{tpu_custom_call.1} parent=11 // pred_check
          %p228 = pneg %p80
        $region14: #{tpu_custom_call.1} parent=11 // pred_check_branch
          %230 = sbr.rel (%p228) target = $region16
        $region15: #{tpu_custom_call.1} parent=11 // pred_region
          %s232 = ssub.s32 4096, 4096
          %233 = vsyncadd [#allocation9], %s232
          %s234 = sshll.u32 [#allocation8], 4
          %s235 = int_to_ptr.vmem [resolvable:$true] %s234
          %240 = dma.hbm_to_vmem [thread:$0]  %s1, 4096, %s235, [#allocation9], 128, 128, 8
        $region16: #{tpu_custom_call.1} parent=11 // pred_fallthru
          _
        // Predicated region
        $region17: #{tpu_custom_call.1} parent=11 // pred_check
          %p241 = pneg %p101
        $region18: #{tpu_custom_call.1} parent=11 // pred_check_branch
          %243 = sbr.rel (%p241) target = $region20
        $region19: #{tpu_custom_call.1} parent=11 // pred_region
          _
        $region20: #{tpu_custom_call.1} parent=11 // pred_fallthru
          _
        // Predicated region
        $region21: #{tpu_custom_call.1} parent=11 // pred_check
          %p244 = pneg %p122
        $region22: #{tpu_custom_call.1} parent=11 // pred_check_branch
          %246 = sbr.rel (%p244) target = $region24
        $region23: #{tpu_custom_call.1} parent=11 // pred_region
          %s248 = ssub.s32 8192, 8192
          %249 = vsyncadd [#allocation9], %s248
          %s250 = sshll.u32 [#allocation10], 4
          %s251 = int_to_ptr.vmem [resolvable:$true] %s250
          %256 = dma.hbm_to_vmem [thread:$0]  %s3, 8192, %s251, [#allocation9], 256, 256, 16
        $region24: #{tpu_custom_call.1} parent=11 // pred_fallthru
          _
        // Predicated region
        $region25: #{tpu_custom_call.1} parent=11 // pred_check
          %p257 = pneg %p143
        $region26: #{tpu_custom_call.1} parent=11 // pred_check_branch
          %259 = sbr.rel (%p257) target = $region28
        $region27: #{tpu_custom_call.1} parent=11 // pred_region
          _
        $region28: #{tpu_custom_call.1} parent=11 // pred_fallthru
          _
        // Predicated region
        $region29: #{tpu_custom_call.1} parent=11 // pred_check
          %p260 = pneg %p164
        $region30: #{tpu_custom_call.1} parent=11 // pred_check_branch
          %262 = sbr.rel (%p260) target = $region32
        $region31: #{tpu_custom_call.1} parent=11 // pred_region
          %s264 = ssub.s32 4096, 4096
          %265 = vsyncadd [#allocation12], %s264
          %s266 = sshll.u32 [#allocation11], 4
          %s267 = int_to_ptr.vmem [resolvable:$true] %s266
          %272 = dma.hbm_to_vmem [thread:$0]  %s5, 4096, %s267, [#allocation12], 128, 128, 8
        $region32: #{tpu_custom_call.1} parent=11 // pred_fallthru
          _
        // Predicated region
        $region33: #{tpu_custom_call.1} parent=11 // pred_check
          %p273 = pneg %p185
        $region34: #{tpu_custom_call.1} parent=11 // pred_check_branch
          %275 = sbr.rel (%p273) target = $region36
        $region35: #{tpu_custom_call.1} parent=11 // pred_region
          _
        $region36: #{tpu_custom_call.1} parent=11 // pred_fallthru
          _
      $region12: #{tpu_custom_call.1} parent=5 // pred_fallthru
        _
      %p276 = scmp.lt.s32.totalorder %s21, 2
      // Predicated region
      $region37: #{tpu_custom_call.1} parent=5 // pred_check
        %p277 = pneg %p276
      $region38: #{tpu_custom_call.1} parent=5 // pred_check_branch
        %279 = sbr.rel (%p277) target = $region40
      $region39: #{tpu_custom_call.1} parent=5 // pred_region
        // Predicated region
        $region41: #{tpu_custom_call.1} parent=39 // pred_check
          %p280 = pneg %p53
        $region42: #{tpu_custom_call.1} parent=39 // pred_check_branch
          %282 = sbr.rel (%p280) target = $region44
        $region43: #{tpu_custom_call.1} parent=39 // pred_region
          %s283 = sand.u32 %s43, 1
          %s284 = scalar_lea.sflag [#allocation6], %s283
          %s285 = sand.u32 %s43, 1
          %s286 = smul.addr %s285, 256
          %s287 = scalar_lea.vmem [#allocation5], %s286
          %s289 = ssub.s32 4096, 4096
          %290 = vsyncadd %s284, %s289
          %s291 = smul.addr %s28, 32
          %s292 = smul.addr %s291, 128
          %s293 = scalar_lea.hbm %s0, %s292
          %s294 = sshll.u32 %s287, 4
          %s295 = int_to_ptr.vmem [resolvable:$true] %s294
          %300 = dma.hbm_to_vmem [thread:$0]  %s293, 4096, %s295, %s284, 256, 256, 16
        $region44: #{tpu_custom_call.1} parent=39 // pred_fallthru
          _
      $region40: #{tpu_custom_call.1} parent=5 // pred_fallthru
        _
      %p301 = scmp.le.s32.totalorder 1, %s21
      %p302 = scmp.lt.s32.totalorder %s21, 3
      %p303 = pnand %p301, %p302
      %p304 = pneg %p303
      // Predicated region
      $region45: #{tpu_custom_call.1} parent=5 // pred_check
        _
      $region46: #{tpu_custom_call.1} parent=5 // pred_check_branch
        %306 = sbr.rel (%p303) target = $region48
      $region47: #{tpu_custom_call.1} parent=5 // pred_region
        %s307 = ssub.s32 %s21, 1
        %s308 = sand.u32 %s46, 1
        %s309 = scalar_lea.sflag [#allocation6], %s308
        %s310 = sand.u32 %s46, 1
        %s311 = smul.addr %s310, 256
        %s312 = scalar_lea.vmem [#allocation5], %s311
        // Predicated region
        $region49: #{tpu_custom_call.1} parent=47 // pred_check
          %p313 = pneg %p59
        $region50: #{tpu_custom_call.1} parent=47 // pred_check_branch
          %315 = sbr.rel (%p313) target = $region52
        $region51: #{tpu_custom_call.1} parent=47 // pred_region
          %316 = dma.done %s309, 4096
        $region52: #{tpu_custom_call.1} parent=47 // pred_fallthru
          _
        // Predicated region
        $region53: #{tpu_custom_call.1} parent=47 // pred_check
          %p317 = pneg %p80
        $region54: #{tpu_custom_call.1} parent=47 // pred_check_branch
          %319 = sbr.rel (%p317) target = $region56
        $region55: #{tpu_custom_call.1} parent=47 // pred_region
          %320 = dma.done [#allocation9], 4096
        $region56: #{tpu_custom_call.1} parent=47 // pred_fallthru
          _
        // Predicated region
        $region57: #{tpu_custom_call.1} parent=47 // pred_check
          %p321 = pneg %p122
        $region58: #{tpu_custom_call.1} parent=47 // pred_check_branch
          %323 = sbr.rel (%p321) target = $region60
        $region59: #{tpu_custom_call.1} parent=47 // pred_region
          %324 = dma.done [#allocation9], 8192
        $region60: #{tpu_custom_call.1} parent=47 // pred_fallthru
          _
        // Predicated region
        $region61: #{tpu_custom_call.1} parent=47 // pred_check
          %p325 = pneg %p164
        $region62: #{tpu_custom_call.1} parent=47 // pred_check_branch
          %327 = sbr.rel (%p325) target = $region64
        $region63: #{tpu_custom_call.1} parent=47 // pred_region
          %328 = dma.done [#allocation12], 4096
        $region64: #{tpu_custom_call.1} parent=47 // pred_fallthru
          _
        %s329 = sand.u32 %s46, 1
        %s330 = scalar_lea.sflag [#allocation6], %s329
        %s331 = sand.u32 %s46, 1
        %s332 = smul.addr %s331, 256
        %s333 = scalar_lea.vmem [#allocation5], %s332
        %p334 = pneg %p59
        %p335 = pneg %p56
        %p336 = pneg %p80
        %p337 = pneg %p77
        %p338 = pneg %p101
        %p339 = pneg %p98
        %p340 = pneg %p122
        %p341 = pneg %p119
        %p342 = pneg %p143
        %p343 = pneg %p140
        %p344 = pneg %p164
        %p345 = pneg %p161
        %p346 = pneg %p185
        %p347 = pneg %p182
        %p348 = pneg %p213
        %p349 = pneg %p210
        %s350 = sand.u32 %s200, 1
        %s351 = scalar_lea.sflag [#allocation7], %s350
        %s352 = sand.u32 %s200, 1
        %s353 = smul.addr %s352, 256
        %s354 = scalar_lea.vmem [#allocation13], %s353
        %s355 = smul.u32 16, %s31
        %p357 = scmp.eq.s32.totalorder %s31, 0
        // Predicated region
        $region65: #{tpu_custom_call.1} parent=47 // pred_check
          %p358 = pneg %p357
        $region66: #{tpu_custom_call.1} parent=47 // pred_check_branch
          %360 = sbr.rel (%p358) target = $region68
        $region67: #{tpu_custom_call.1} parent=47 // pred_region
          %v361 = vld [vmem:[%s4] sm:$0xf]
          %v362 = vld [vmem:[#allocation10] sm:$0xff]
          %v363 = vld [vmem:[#allocation10 + $0x8] sm:$0xff]
          %v364 = vld [vmem:[#allocation10 + $0x10] sm:$0xff]
          %v365 = vld [vmem:[#allocation10 + $0x18] sm:$0xff]
          %v366 = vld [vmem:[#allocation10 + $0x20] sm:$0xff]
          %v367 = vld [vmem:[#allocation10 + $0x28] sm:$0xff]
          %v368 = vld [vmem:[#allocation10 + $0x30] sm:$0xff]
          %v369 = vld [vmem:[#allocation10 + $0x38] sm:$0xff]
          %v370 = vld [vmem:[#allocation10 + $0x40] sm:$0xff]
          %v371 = vld [vmem:[#allocation10 + $0x48] sm:$0xff]
          %v372 = vld [vmem:[#allocation10 + $0x50] sm:$0xff]
          %v373 = vld [vmem:[#allocation10 + $0x58] sm:$0xff]
          %v374 = vld [vmem:[#allocation10 + $0x60] sm:$0xff]
          %v375 = vld [vmem:[#allocation10 + $0x68] sm:$0xff]
          %v376 = vld [vmem:[#allocation10 + $0x70] sm:$0xff]
          %v377 = vld [vmem:[#allocation10 + $0x78] sm:$0xff]
          %v378 = vld [vmem:[#allocation10 + $0x80] sm:$0xff]
          %v379 = vld [vmem:[#allocation10 + $0x88] sm:$0xff]
          %v380 = vld [vmem:[#allocation10 + $0x90] sm:$0xff]
          %v381 = vld [vmem:[#allocation10 + $0x98] sm:$0xff]
          %v382 = vld [vmem:[#allocation10 + $0xa0] sm:$0xff]
          %v383 = vld [vmem:[#allocation10 + $0xa8] sm:$0xff]
          %v384 = vld [vmem:[#allocation10 + $0xb0] sm:$0xff]
          %v385 = vld [vmem:[#allocation10 + $0xb8] sm:$0xff]
          %v386 = vld [vmem:[#allocation10 + $0xc0] sm:$0xff]
          %v387 = vld [vmem:[#allocation10 + $0xc8] sm:$0xff]
          %v388 = vld [vmem:[#allocation10 + $0xd0] sm:$0xff]
          %v389 = vld [vmem:[#allocation10 + $0xd8] sm:$0xff]
          %v390 = vld [vmem:[#allocation10 + $0xe0] sm:$0xff]
          %v391 = vld [vmem:[#allocation10 + $0xe8] sm:$0xff]
          %v392 = vld [vmem:[#allocation10 + $0xf0] sm:$0xff]
          %v393 = vld [vmem:[#allocation10 + $0xf8] sm:$0xff]
          %v394 = vld [vmem:[#allocation10 + $0x100] sm:$0xff]
          %v395 = vld [vmem:[#allocation10 + $0x108] sm:$0xff]
          %v396 = vld [vmem:[#allocation10 + $0x110] sm:$0xff]
          %v397 = vld [vmem:[#allocation10 + $0x118] sm:$0xff]
          %v398 = vld [vmem:[#allocation10 + $0x120] sm:$0xff]
          %v399 = vld [vmem:[#allocation10 + $0x128] sm:$0xff]
          %v400 = vld [vmem:[#allocation10 + $0x130] sm:$0xff]
          %v401 = vld [vmem:[#allocation10 + $0x138] sm:$0xff]
          %v402 = vld [vmem:[#allocation10 + $0x140] sm:$0xff]
          %v403 = vld [vmem:[#allocation10 + $0x148] sm:$0xff]
          %v404 = vld [vmem:[#allocation10 + $0x150] sm:$0xff]
          %v405 = vld [vmem:[#allocation10 + $0x158] sm:$0xff]
          %v406 = vld [vmem:[#allocation10 + $0x160] sm:$0xff]
          %v407 = vld [vmem:[#allocation10 + $0x168] sm:$0xff]
          %v408 = vld [vmem:[#allocation10 + $0x170] sm:$0xff]
          %v409 = vld [vmem:[#allocation10 + $0x178] sm:$0xff]
          %v410 = vld [vmem:[#allocation10 + $0x180] sm:$0xff]
          %v411 = vld [vmem:[#allocation10 + $0x188] sm:$0xff]
          %v412 = vld [vmem:[#allocation10 + $0x190] sm:$0xff]
          %v413 = vld [vmem:[#allocation10 + $0x198] sm:$0xff]
          %v414 = vld [vmem:[#allocation10 + $0x1a0] sm:$0xff]
          %v415 = vld [vmem:[#allocation10 + $0x1a8] sm:$0xff]
          %v416 = vld [vmem:[#allocation10 + $0x1b0] sm:$0xff]
          %v417 = vld [vmem:[#allocation10 + $0x1b8] sm:$0xff]
          %v418 = vld [vmem:[#allocation10 + $0x1c0] sm:$0xff]
          %v419 = vld [vmem:[#allocation10 + $0x1c8] sm:$0xff]
          %v420 = vld [vmem:[#allocation10 + $0x1d0] sm:$0xff]
          %v421 = vld [vmem:[#allocation10 + $0x1d8] sm:$0xff]
          %v422 = vld [vmem:[#allocation10 + $0x1e0] sm:$0xff]
          %v423 = vld [vmem:[#allocation10 + $0x1e8] sm:$0xff]
          %v424 = vld [vmem:[#allocation10 + $0x1f0] sm:$0xff]
          %v425 = vld [vmem:[#allocation10 + $0x1f8] sm:$0xff]
          %v426 = vld [vmem:[%s312] sm:$0xff]
          %v427 = vld [vmem:[%s312 + $0x8] sm:$0xff]
          %v428 = vld [vmem:[%s312 + $0x10] sm:$0xff]
          %v429 = vld [vmem:[%s312 + $0x18] sm:$0xff]
          %v430 = vld [vmem:[%s312 + $0x20] sm:$0xff]
          %v431 = vld [vmem:[%s312 + $0x28] sm:$0xff]
          %v432 = vld [vmem:[%s312 + $0x30] sm:$0xff]
          %v433 = vld [vmem:[%s312 + $0x38] sm:$0xff]
          %v434 = vld [vmem:[%s312 + $0x40] sm:$0xff]
          %v435 = vld [vmem:[%s312 + $0x48] sm:$0xff]
          %v436 = vld [vmem:[%s312 + $0x50] sm:$0xff]
          %v437 = vld [vmem:[%s312 + $0x58] sm:$0xff]
          %v438 = vld [vmem:[%s312 + $0x60] sm:$0xff]
          %v439 = vld [vmem:[%s312 + $0x68] sm:$0xff]
          %v440 = vld [vmem:[%s312 + $0x70] sm:$0xff]
          %v441 = vld [vmem:[%s312 + $0x78] sm:$0xff]
          %v442 = vld [vmem:[%s312 + $0x80] sm:$0xff]
          %v443 = vld [vmem:[%s312 + $0x88] sm:$0xff]
          %v444 = vld [vmem:[%s312 + $0x90] sm:$0xff]
          %v445 = vld [vmem:[%s312 + $0x98] sm:$0xff]
          %v446 = vld [vmem:[%s312 + $0xa0] sm:$0xff]
          %v447 = vld [vmem:[%s312 + $0xa8] sm:$0xff]
          %v448 = vld [vmem:[%s312 + $0xb0] sm:$0xff]
          %v449 = vld [vmem:[%s312 + $0xb8] sm:$0xff]
          %v450 = vld [vmem:[%s312 + $0xc0] sm:$0xff]
          %v451 = vld [vmem:[%s312 + $0xc8] sm:$0xff]
          %v452 = vld [vmem:[%s312 + $0xd0] sm:$0xff]
          %v453 = vld [vmem:[%s312 + $0xd8] sm:$0xff]
          %v454 = vld [vmem:[%s312 + $0xe0] sm:$0xff]
          %v455 = vld [vmem:[%s312 + $0xe8] sm:$0xff]
          %v456 = vld [vmem:[%s312 + $0xf0] sm:$0xff]
          %v457 = vld [vmem:[%s312 + $0xf8] sm:$0xff]
          %v458 = vpack.c.bf16 %v428, %v426
          %v459 = vpack.c.bf16 %v429, %v427
          %v460 = vpack.c.bf16 %v432, %v430
          %v461 = vpack.c.bf16 %v433, %v431
          %v462 = vpack.c.bf16 %v436, %v434
          %v463 = vpack.c.bf16 %v437, %v435
          %v464 = vpack.c.bf16 %v440, %v438
          %v465 = vpack.c.bf16 %v441, %v439
          %v466 = vpack.c.bf16 %v444, %v442
          %v467 = vpack.c.bf16 %v445, %v443
          %v468 = vpack.c.bf16 %v448, %v446
          %v469 = vpack.c.bf16 %v449, %v447
          %v470 = vpack.c.bf16 %v452, %v450
          %v471 = vpack.c.bf16 %v453, %v451
          %v472 = vpack.c.bf16 %v456, %v454
          %v473 = vpack.c.bf16 %v457, %v455
          %v475 = vlaneseq
          %v476 = vshrl.u32 %v475, 7
          %v477 = vsub.s32 0, %v476
          %v478 = vrot.slane %v361, %v477
          %v479 = vlaneseq
          %v480 = vshrl.u32 %v479, 7
          %v481 = vsub.s32 1, %v480
          %v482 = vrot.slane %v361, %v481
          %v483 = vlaneseq
          %v484 = vshrl.u32 %v483, 7
          %v485 = vsub.s32 2, %v484
          %v486 = vrot.slane %v361, %v485
          %v487 = vlaneseq
          %v488 = vshrl.u32 %v487, 7
          %v489 = vsub.s32 3, %v488
          %v490 = vrot.slane %v361, %v489
          %v559 = vunpack.c.l.b16 %v362
          %v560 = vunpack.c.h.b16 %v362
          %v561 = vunpack.c.l.b16 %v363
          %v562 = vunpack.c.h.b16 %v363
          %v563 = vunpack.c.l.b16 %v364
          %v564 = vunpack.c.h.b16 %v364
          %v565 = vunpack.c.l.b16 %v365
          %v566 = vunpack.c.h.b16 %v365
          %v567 = vunpack.c.l.b16 %v366
          %v568 = vunpack.c.h.b16 %v366
          %v569 = vunpack.c.l.b16 %v367
          %v570 = vunpack.c.h.b16 %v367
          %v571 = vunpack.c.l.b16 %v368
          %v572 = vunpack.c.h.b16 %v368
          %v573 = vunpack.c.l.b16 %v369
          %v574 = vunpack.c.h.b16 %v369
          %v575 = vunpack.c.l.b16 %v370
          %v576 = vunpack.c.h.b16 %v370
          %v577 = vunpack.c.l.b16 %v371
          %v578 = vunpack.c.h.b16 %v371
          %v579 = vunpack.c.l.b16 %v372
          %v580 = vunpack.c.h.b16 %v372
          %v581 = vunpack.c.l.b16 %v373
          %v582 = vunpack.c.h.b16 %v373
          %v583 = vunpack.c.l.b16 %v374
          %v584 = vunpack.c.h.b16 %v374
          %v585 = vunpack.c.l.b16 %v375
          %v586 = vunpack.c.h.b16 %v375
          %v587 = vunpack.c.l.b16 %v376
          %v588 = vunpack.c.h.b16 %v376
          %v589 = vunpack.c.l.b16 %v377
          %v590 = vunpack.c.h.b16 %v377
          %v591 = vunpack.c.l.b16 %v378
          %v592 = vunpack.c.h.b16 %v378
          %v593 = vunpack.c.l.b16 %v379
          %v594 = vunpack.c.h.b16 %v379
          %v595 = vunpack.c.l.b16 %v380
          %v596 = vunpack.c.h.b16 %v380
          %v597 = vunpack.c.l.b16 %v381
          %v598 = vunpack.c.h.b16 %v381
          %v599 = vunpack.c.l.b16 %v382
          %v600 = vunpack.c.h.b16 %v382
          %v601 = vunpack.c.l.b16 %v383
          %v602 = vunpack.c.h.b16 %v383
          %v603 = vunpack.c.l.b16 %v384
          %v604 = vunpack.c.h.b16 %v384
          %v605 = vunpack.c.l.b16 %v385
          %v606 = vunpack.c.h.b16 %v385
          %v607 = vunpack.c.l.b16 %v386
          %v608 = vunpack.c.h.b16 %v386
          %v609 = vunpack.c.l.b16 %v387
          %v610 = vunpack.c.h.b16 %v387
          %v611 = vunpack.c.l.b16 %v388
          %v612 = vunpack.c.h.b16 %v388
          %v613 = vunpack.c.l.b16 %v389
          %v614 = vunpack.c.h.b16 %v389
          %v615 = vunpack.c.l.b16 %v390
          %v616 = vunpack.c.h.b16 %v390
          %v617 = vunpack.c.l.b16 %v391
          %v618 = vunpack.c.h.b16 %v391
          %v619 = vunpack.c.l.b16 %v392
          %v620 = vunpack.c.h.b16 %v392
          %v621 = vunpack.c.l.b16 %v393
          %v622 = vunpack.c.h.b16 %v393
          %v623 = vunpack.c.l.b16 %v394
          %v624 = vunpack.c.h.b16 %v394
          %v625 = vunpack.c.l.b16 %v395
          %v626 = vunpack.c.h.b16 %v395
          %v627 = vunpack.c.l.b16 %v396
          %v628 = vunpack.c.h.b16 %v396
          %v629 = vunpack.c.l.b16 %v397
          %v630 = vunpack.c.h.b16 %v397
          %v631 = vunpack.c.l.b16 %v398
          %v632 = vunpack.c.h.b16 %v398
          %v633 = vunpack.c.l.b16 %v399
          %v634 = vunpack.c.h.b16 %v399
          %v635 = vunpack.c.l.b16 %v400
          %v636 = vunpack.c.h.b16 %v400
          %v637 = vunpack.c.l.b16 %v401
          %v638 = vunpack.c.h.b16 %v401
          %v639 = vunpack.c.l.b16 %v402
          %v640 = vunpack.c.h.b16 %v402
          %v641 = vunpack.c.l.b16 %v403
          %v642 = vunpack.c.h.b16 %v403
          %v643 = vunpack.c.l.b16 %v404
          %v644 = vunpack.c.h.b16 %v404
          %v645 = vunpack.c.l.b16 %v405
          %v646 = vunpack.c.h.b16 %v405
          %v647 = vunpack.c.l.b16 %v406
          %v648 = vunpack.c.h.b16 %v406
          %v649 = vunpack.c.l.b16 %v407
          %v650 = vunpack.c.h.b16 %v407
          %v651 = vunpack.c.l.b16 %v408
          %v652 = vunpack.c.h.b16 %v408
          %v653 = vunpack.c.l.b16 %v409
          %v654 = vunpack.c.h.b16 %v409
          %v655 = vunpack.c.l.b16 %v410
          %v656 = vunpack.c.h.b16 %v410
          %v657 = vunpack.c.l.b16 %v411
          %v658 = vunpack.c.h.b16 %v411
          %v659 = vunpack.c.l.b16 %v412
          %v660 = vunpack.c.h.b16 %v412
          %v661 = vunpack.c.l.b16 %v413
          %v662 = vunpack.c.h.b16 %v413
          %v663 = vunpack.c.l.b16 %v414
          %v664 = vunpack.c.h.b16 %v414
          %v665 = vunpack.c.l.b16 %v415
          %v666 = vunpack.c.h.b16 %v415
          %v667 = vunpack.c.l.b16 %v416
          %v668 = vunpack.c.h.b16 %v416
          %v669 = vunpack.c.l.b16 %v417
          %v670 = vunpack.c.h.b16 %v417
          %v671 = vunpack.c.l.b16 %v418
          %v672 = vunpack.c.h.b16 %v418
          %v673 = vunpack.c.l.b16 %v419
          %v674 = vunpack.c.h.b16 %v419
          %v675 = vunpack.c.l.b16 %v420
          %v676 = vunpack.c.h.b16 %v420
          %v677 = vunpack.c.l.b16 %v421
          %v678 = vunpack.c.h.b16 %v421
          %v679 = vunpack.c.l.b16 %v422
          %v680 = vunpack.c.h.b16 %v422
          %v681 = vunpack.c.l.b16 %v423
          %v682 = vunpack.c.h.b16 %v423
          %v683 = vunpack.c.l.b16 %v424
          %v684 = vunpack.c.h.b16 %v424
          %v685 = vunpack.c.l.b16 %v425
          %v686 = vunpack.c.h.b16 %v425
          %v687 = vpack.c.b16 %v563, %v559
          %v688 = vpack.c.b16 %v564, %v560
          %v689 = vpack.c.b16 %v565, %v561
          %v690 = vpack.c.b16 %v566, %v562
          %v691 = vpack.c.b16 %v571, %v567
          %v692 = vpack.c.b16 %v572, %v568
          %v693 = vpack.c.b16 %v573, %v569
          %v694 = vpack.c.b16 %v574, %v570
          %v695 = vpack.c.b16 %v579, %v575
          %v696 = vpack.c.b16 %v580, %v576
          %v697 = vpack.c.b16 %v581, %v577
          %v698 = vpack.c.b16 %v582, %v578
          %v699 = vpack.c.b16 %v587, %v583
          %v700 = vpack.c.b16 %v588, %v584
          %v701 = vpack.c.b16 %v589, %v585
          %v702 = vpack.c.b16 %v590, %v586
          %v703 = vpack.c.b16 %v595, %v591
          %v704 = vpack.c.b16 %v596, %v592
          %v705 = vpack.c.b16 %v597, %v593
          %v706 = vpack.c.b16 %v598, %v594
          %v707 = vpack.c.b16 %v603, %v599
          %v708 = vpack.c.b16 %v604, %v600
          %v709 = vpack.c.b16 %v605, %v601
          %v710 = vpack.c.b16 %v606, %v602
          %v711 = vpack.c.b16 %v611, %v607
          %v712 = vpack.c.b16 %v612, %v608
          %v713 = vpack.c.b16 %v613, %v609
          %v714 = vpack.c.b16 %v614, %v610
          %v715 = vpack.c.b16 %v619, %v615
          %v716 = vpack.c.b16 %v620, %v616
          %v717 = vpack.c.b16 %v621, %v617
          %v718 = vpack.c.b16 %v622, %v618
          %v719 = vpack.c.b16 %v627, %v623
          %v720 = vpack.c.b16 %v628, %v624
          %v721 = vpack.c.b16 %v629, %v625
          %v722 = vpack.c.b16 %v630, %v626
          %v723 = vpack.c.b16 %v635, %v631
          %v724 = vpack.c.b16 %v636, %v632
          %v725 = vpack.c.b16 %v637, %v633
          %v726 = vpack.c.b16 %v638, %v634
          %v727 = vpack.c.b16 %v643, %v639
          %v728 = vpack.c.b16 %v644, %v640
          %v729 = vpack.c.b16 %v645, %v641
          %v730 = vpack.c.b16 %v646, %v642
          %v731 = vpack.c.b16 %v651, %v647
          %v732 = vpack.c.b16 %v652, %v648
          %v733 = vpack.c.b16 %v653, %v649
          %v734 = vpack.c.b16 %v654, %v650
          %v735 = vpack.c.b16 %v659, %v655
          %v736 = vpack.c.b16 %v660, %v656
          %v737 = vpack.c.b16 %v661, %v657
          %v738 = vpack.c.b16 %v662, %v658
          %v739 = vpack.c.b16 %v667, %v663
          %v740 = vpack.c.b16 %v668, %v664
          %v741 = vpack.c.b16 %v669, %v665
          %v742 = vpack.c.b16 %v670, %v666
          %v743 = vpack.c.b16 %v675, %v671
          %v744 = vpack.c.b16 %v676, %v672
          %v745 = vpack.c.b16 %v677, %v673
          %v746 = vpack.c.b16 %v678, %v674
          %v747 = vpack.c.b16 %v683, %v679
          %v748 = vpack.c.b16 %v684, %v680
          %v749 = vpack.c.b16 %v685, %v681
          %v750 = vpack.c.b16 %v686, %v682
          %815 = vmatprep.subr.bf16.mxu0 %v716
          %816 = vmatpush1.bf16.msra.mxu0 %v715
          %817 = vmatprep.subr.bf16.mxu0 %v712
          %818 = vmatpush1.bf16.msra.mxu0 %v711
          %819 = vmatprep.subr.bf16.mxu0 %v708
          %820 = vmatpush1.bf16.msra.mxu0 %v707
          %821 = vmatprep.subr.bf16.mxu0 %v704
          %822 = vmatpush1.bf16.msra.mxu0 %v703
          %823 = vmatprep.subr.bf16.mxu0 %v700
          %824 = vmatpush1.bf16.msra.mxu0 %v699
          %825 = vmatprep.subr.bf16.mxu0 %v696
          %826 = vmatpush1.bf16.msra.mxu0 %v695
          %827 = vmatprep.subr.bf16.mxu0 %v692
          %828 = vmatpush1.bf16.msra.mxu0 %v691
          %829 = vmatprep.subr.bf16.mxu0 %v688
          %830 = vmatpush1.bf16.msra.mxu0 %v687
          %831 = vmatprep.subr.bf16.mxu0 %v748
          %832 = vmatpush2.bf16.msra.mxu0 %v747
          %833 = vmatprep.subr.bf16.mxu0 %v744
          %834 = vmatpush2.bf16.msra.mxu0 %v743
          %835 = vmatprep.subr.bf16.mxu0 %v740
          %836 = vmatpush2.bf16.msra.mxu0 %v739
          %837 = vmatprep.subr.bf16.mxu0 %v736
          %838 = vmatpush2.bf16.msra.mxu0 %v735
          %839 = vmatprep.subr.bf16.mxu0 %v732
          %840 = vmatpush2.bf16.msra.mxu0 %v731
          %841 = vmatprep.subr.bf16.mxu0 %v728
          %842 = vmatpush2.bf16.msra.mxu0 %v727
          %843 = vmatprep.subr.bf16.mxu0 %v724
          %844 = vmatpush2.bf16.msra.mxu0 %v723
          %845 = vmatprep.subr.bf16.mxu0 %v720
          %846 = vmatpush2.bf16.msra.mxu0 %v719
          %847 = vmatprep.mubr.bf16.mxu0 %v459
          %848 = vmatmul.mubr.bf16.gmra.mxu0 %v458
          %v849 = vpop.f32.mrf.mxu0
          %v850 = vadd.f32 %v478, %v849
          %v851 = vpop.f32.mrf.mxu0
          %v852 = vadd.f32 %v482, %v851
          %v853 = vpop.f32.mrf.mxu0
          %v854 = vadd.f32 %v478, %v853
          %v855 = vpop.f32.mrf.mxu0
          %v856 = vadd.f32 %v482, %v855
          %857 = vmatprep.mubr.bf16.mxu0 %v461
          %858 = vmatmul.mubr.bf16.gmra.mxu0 %v460
          %v859 = vpop.f32.mrf.mxu0
          %v860 = vadd.f32 %v478, %v859
          %v861 = vpop.f32.mrf.mxu0
          %v862 = vadd.f32 %v482, %v861
          %v863 = vpop.f32.mrf.mxu0
          %v864 = vadd.f32 %v478, %v863
          %v865 = vpop.f32.mrf.mxu0
          %v866 = vadd.f32 %v482, %v865
          %867 = vmatprep.mubr.bf16.mxu0 %v463
          %868 = vmatmul.mubr.bf16.gmra.mxu0 %v462
          %v869 = vpop.f32.mrf.mxu0
          %v870 = vadd.f32 %v478, %v869
          %v871 = vpop.f32.mrf.mxu0
          %v872 = vadd.f32 %v482, %v871
          %v873 = vpop.f32.mrf.mxu0
          %v874 = vadd.f32 %v478, %v873
          %v875 = vpop.f32.mrf.mxu0
          %v876 = vadd.f32 %v482, %v875
          %877 = vmatprep.mubr.bf16.mxu0 %v465
          %878 = vmatmul.mubr.bf16.gmra.mxu0 %v464
          %v879 = vpop.f32.mrf.mxu0
          %v880 = vadd.f32 %v478, %v879
          %v881 = vpop.f32.mrf.mxu0
          %v882 = vadd.f32 %v482, %v881
          %v883 = vpop.f32.mrf.mxu0
          %v884 = vadd.f32 %v478, %v883
          %v885 = vpop.f32.mrf.mxu0
          %v886 = vadd.f32 %v482, %v885
          %887 = vmatprep.mubr.bf16.mxu0 %v467
          %888 = vmatmul.mubr.bf16.gmra.mxu0 %v466
          %v889 = vpop.f32.mrf.mxu0
          %v890 = vadd.f32 %v478, %v889
          %v891 = vpop.f32.mrf.mxu0
          %v892 = vadd.f32 %v482, %v891
          %v893 = vpop.f32.mrf.mxu0
          %v894 = vadd.f32 %v478, %v893
          %v895 = vpop.f32.mrf.mxu0
          %v896 = vadd.f32 %v482, %v895
          %897 = vmatprep.mubr.bf16.mxu0 %v469
          %898 = vmatmul.mubr.bf16.gmra.mxu0 %v468
          %v899 = vpop.f32.mrf.mxu0
          %v900 = vadd.f32 %v478, %v899
          %v901 = vpop.f32.mrf.mxu0
          %v902 = vadd.f32 %v482, %v901
          %v903 = vpop.f32.mrf.mxu0
          %v904 = vadd.f32 %v478, %v903
          %v905 = vpop.f32.mrf.mxu0
          %v906 = vadd.f32 %v482, %v905
          %907 = vmatprep.mubr.bf16.mxu0 %v471
          %908 = vmatmul.mubr.bf16.gmra.mxu0 %v470
          %v909 = vpop.f32.mrf.mxu0
          %v910 = vadd.f32 %v478, %v909
          %v911 = vpop.f32.mrf.mxu0
          %v912 = vadd.f32 %v482, %v911
          %v913 = vpop.f32.mrf.mxu0
          %v914 = vadd.f32 %v478, %v913
          %v915 = vpop.f32.mrf.mxu0
          %v916 = vadd.f32 %v482, %v915
          %917 = vmatprep.mubr.bf16.mxu0 %v473
          %918 = vmatmul.mubr.bf16.gmra.mxu0 %v472
          %v919 = vpop.f32.mrf.mxu0
          %v920 = vadd.f32 %v478, %v919
          %v921 = vpop.f32.mrf.mxu0
          %v922 = vadd.f32 %v482, %v921
          %v923 = vpop.f32.mrf.mxu0
          %v924 = vadd.f32 %v478, %v923
          %v925 = vpop.f32.mrf.mxu0
          %v926 = vadd.f32 %v482, %v925
          %927 = vdwg.mxu0
          %928 = vmatprep.subr.bf16.mxu0 %v718
          %929 = vmatpush1.bf16.msra.mxu0 %v717
          %930 = vmatprep.subr.bf16.mxu0 %v714
          %931 = vmatpush1.bf16.msra.mxu0 %v713
          %932 = vmatprep.subr.bf16.mxu0 %v710
          %933 = vmatpush1.bf16.msra.mxu0 %v709
          %934 = vmatprep.subr.bf16.mxu0 %v706
          %935 = vmatpush1.bf16.msra.mxu0 %v705
          %936 = vmatprep.subr.bf16.mxu0 %v702
          %937 = vmatpush1.bf16.msra.mxu0 %v701
          %938 = vmatprep.subr.bf16.mxu0 %v698
          %939 = vmatpush1.bf16.msra.mxu0 %v697
          %940 = vmatprep.subr.bf16.mxu0 %v694
          %941 = vmatpush1.bf16.msra.mxu0 %v693
          %942 = vmatprep.subr.bf16.mxu0 %v690
          %943 = vmatpush1.bf16.msra.mxu0 %v689
          %944 = vmatprep.subr.bf16.mxu0 %v750
          %945 = vmatpush2.bf16.msra.mxu0 %v749
          %946 = vmatprep.subr.bf16.mxu0 %v746
          %947 = vmatpush2.bf16.msra.mxu0 %v745
          %948 = vmatprep.subr.bf16.mxu0 %v742
          %949 = vmatpush2.bf16.msra.mxu0 %v741
          %950 = vmatprep.subr.bf16.mxu0 %v738
          %951 = vmatpush2.bf16.msra.mxu0 %v737
          %952 = vmatprep.subr.bf16.mxu0 %v734
          %953 = vmatpush2.bf16.msra.mxu0 %v733
          %954 = vmatprep.subr.bf16.mxu0 %v730
          %955 = vmatpush2.bf16.msra.mxu0 %v729
          %956 = vmatprep.subr.bf16.mxu0 %v726
          %957 = vmatpush2.bf16.msra.mxu0 %v725
          %958 = vmatprep.subr.bf16.mxu0 %v722
          %959 = vmatpush2.bf16.msra.mxu0 %v721
          %960 = vmatprep.mubr.bf16.mxu0 %v459
          %961 = vmatmul.mubr.bf16.gmra.mxu0 %v458
          %v962 = vpop.f32.mrf.mxu0
          %v963 = vadd.f32 %v486, %v962
          %v964 = vpop.f32.mrf.mxu0
          %v965 = vadd.f32 %v490, %v964
          %v966 = vpop.f32.mrf.mxu0
          %v967 = vadd.f32 %v486, %v966
          %v968 = vpop.f32.mrf.mxu0
          %v969 = vadd.f32 %v490, %v968
          %970 = vmatprep.mubr.bf16.mxu0 %v461
          %971 = vmatmul.mubr.bf16.gmra.mxu0 %v460
          %v972 = vpop.f32.mrf.mxu0
          %v973 = vadd.f32 %v486, %v972
          %v974 = vpop.f32.mrf.mxu0
          %v975 = vadd.f32 %v490, %v974
          %v976 = vpop.f32.mrf.mxu0
          %v977 = vadd.f32 %v486, %v976
          %v978 = vpop.f32.mrf.mxu0
          %v979 = vadd.f32 %v490, %v978
          %980 = vmatprep.mubr.bf16.mxu0 %v463
          %981 = vmatmul.mubr.bf16.gmra.mxu0 %v462
          %v982 = vpop.f32.mrf.mxu0
          %v983 = vadd.f32 %v486, %v982
          %v984 = vpop.f32.mrf.mxu0
          %v985 = vadd.f32 %v490, %v984
          %v986 = vpop.f32.mrf.mxu0
          %v987 = vadd.f32 %v486, %v986
          %v988 = vpop.f32.mrf.mxu0
          %v989 = vadd.f32 %v490, %v988
          %990 = vmatprep.mubr.bf16.mxu0 %v465
          %991 = vmatmul.mubr.bf16.gmra.mxu0 %v464
          %v992 = vpop.f32.mrf.mxu0
          %v993 = vadd.f32 %v486, %v992
          %v994 = vpop.f32.mrf.mxu0
          %v995 = vadd.f32 %v490, %v994
          %v996 = vpop.f32.mrf.mxu0
          %v997 = vadd.f32 %v486, %v996
          %v998 = vpop.f32.mrf.mxu0
          %v999 = vadd.f32 %v490, %v998
          %1000 = vmatprep.mubr.bf16.mxu0 %v467
          %1001 = vmatmul.mubr.bf16.gmra.mxu0 %v466
          %v1002 = vpop.f32.mrf.mxu0
          %v1003 = vadd.f32 %v486, %v1002
          %v1004 = vpop.f32.mrf.mxu0
          %v1005 = vadd.f32 %v490, %v1004
          %v1006 = vpop.f32.mrf.mxu0
          %v1007 = vadd.f32 %v486, %v1006
          %v1008 = vpop.f32.mrf.mxu0
          %v1009 = vadd.f32 %v490, %v1008
          %1010 = vmatprep.mubr.bf16.mxu0 %v469
          %1011 = vmatmul.mubr.bf16.gmra.mxu0 %v468
          %v1012 = vpop.f32.mrf.mxu0
          %v1013 = vadd.f32 %v486, %v1012
          %v1014 = vpop.f32.mrf.mxu0
          %v1015 = vadd.f32 %v490, %v1014
          %v1016 = vpop.f32.mrf.mxu0
          %v1017 = vadd.f32 %v486, %v1016
          %v1018 = vpop.f32.mrf.mxu0
          %v1019 = vadd.f32 %v490, %v1018
          %1020 = vmatprep.mubr.bf16.mxu0 %v471
          %1021 = vmatmul.mubr.bf16.gmra.mxu0 %v470
          %v1022 = vpop.f32.mrf.mxu0
          %v1023 = vadd.f32 %v486, %v1022
          %v1024 = vpop.f32.mrf.mxu0
          %v1025 = vadd.f32 %v490, %v1024
          %v1026 = vpop.f32.mrf.mxu0
          %v1027 = vadd.f32 %v486, %v1026
          %v1028 = vpop.f32.mrf.mxu0
          %v1029 = vadd.f32 %v490, %v1028
          %1030 = vmatprep.mubr.bf16.mxu0 %v473
          %1031 = vmatmul.mubr.bf16.gmra.mxu0 %v472
          %v1032 = vpop.f32.mrf.mxu0
          %v1033 = vadd.f32 %v486, %v1032
          %v1034 = vpop.f32.mrf.mxu0
          %v1035 = vadd.f32 %v490, %v1034
          %v1036 = vpop.f32.mrf.mxu0
          %v1037 = vadd.f32 %v486, %v1036
          %v1038 = vpop.f32.mrf.mxu0
          %v1039 = vadd.f32 %v490, %v1038
          %1040 = vdwg.mxu0
          %v1041 = vpack.c.bf16 %v854, %v850
          %v1042 = vpack.c.bf16 %v856, %v852
          %v1043 = vpack.c.bf16 %v864, %v860
          %v1044 = vpack.c.bf16 %v866, %v862
          %v1045 = vpack.c.bf16 %v874, %v870
          %v1046 = vpack.c.bf16 %v876, %v872
          %v1047 = vpack.c.bf16 %v884, %v880
          %v1048 = vpack.c.bf16 %v886, %v882
          %v1049 = vpack.c.bf16 %v894, %v890
          %v1050 = vpack.c.bf16 %v896, %v892
          %v1051 = vpack.c.bf16 %v904, %v900
          %v1052 = vpack.c.bf16 %v906, %v902
          %v1053 = vpack.c.bf16 %v914, %v910
          %v1054 = vpack.c.bf16 %v916, %v912
          %v1055 = vpack.c.bf16 %v924, %v920
          %v1056 = vpack.c.bf16 %v926, %v922
          %v1073 = vunpack.c.l.b16 %v1041
          %v1074 = vunpack.c.l.b16 %v1042
          %v1075 = vunpack.c.h.b16 %v1041
          %v1076 = vunpack.c.h.b16 %v1042
          %v1077 = vunpack.c.l.b16 %v1043
          %v1078 = vunpack.c.l.b16 %v1044
          %v1079 = vunpack.c.h.b16 %v1043
          %v1080 = vunpack.c.h.b16 %v1044
          %v1081 = vunpack.c.l.b16 %v1045
          %v1082 = vunpack.c.l.b16 %v1046
          %v1083 = vunpack.c.h.b16 %v1045
          %v1084 = vunpack.c.h.b16 %v1046
          %v1085 = vunpack.c.l.b16 %v1047
          %v1086 = vunpack.c.l.b16 %v1048
          %v1087 = vunpack.c.h.b16 %v1047
          %v1088 = vunpack.c.h.b16 %v1048
          %v1089 = vunpack.c.l.b16 %v1049
          %v1090 = vunpack.c.l.b16 %v1050
          %v1091 = vunpack.c.h.b16 %v1049
          %v1092 = vunpack.c.h.b16 %v1050
          %v1093 = vunpack.c.l.b16 %v1051
          %v1094 = vunpack.c.l.b16 %v1052
          %v1095 = vunpack.c.h.b16 %v1051
          %v1096 = vunpack.c.h.b16 %v1052
          %v1097 = vunpack.c.l.b16 %v1053
          %v1098 = vunpack.c.l.b16 %v1054
          %v1099 = vunpack.c.h.b16 %v1053
          %v1100 = vunpack.c.h.b16 %v1054
          %v1101 = vunpack.c.l.b16 %v1055
          %v1102 = vunpack.c.l.b16 %v1056
          %v1103 = vunpack.c.h.b16 %v1055
          %v1104 = vunpack.c.h.b16 %v1056
          %v1105 = vpack.c.b16 %v1074, %v1073
          %v1106 = vpack.c.b16 %v1076, %v1075
          %v1107 = vpack.c.b16 %v1078, %v1077
          %v1108 = vpack.c.b16 %v1080, %v1079
          %v1109 = vpack.c.b16 %v1082, %v1081
          %v1110 = vpack.c.b16 %v1084, %v1083
          %v1111 = vpack.c.b16 %v1086, %v1085
          %v1112 = vpack.c.b16 %v1088, %v1087
          %v1113 = vpack.c.b16 %v1090, %v1089
          %v1114 = vpack.c.b16 %v1092, %v1091
          %v1115 = vpack.c.b16 %v1094, %v1093
          %v1116 = vpack.c.b16 %v1096, %v1095
          %v1117 = vpack.c.b16 %v1098, %v1097
          %v1118 = vpack.c.b16 %v1100, %v1099
          %v1119 = vpack.c.b16 %v1102, %v1101
          %v1120 = vpack.c.b16 %v1104, %v1103
          %1137 = vst [vmem:[#allocation2] sm:$0xff] %v1105
          %1138 = vst [vmem:[#allocation2 + $0x8] sm:$0xff] %v1106
          %1139 = vst [vmem:[#allocation2 + $0x10] sm:$0xff] %v1107
          %1140 = vst [vmem:[#allocation2 + $0x18] sm:$0xff] %v1108
          %1141 = vst [vmem:[#allocation2 + $0x20] sm:$0xff] %v1109
          %1142 = vst [vmem:[#allocation2 + $0x28] sm:$0xff] %v1110
          %1143 = vst [vmem:[#allocation2 + $0x30] sm:$0xff] %v1111
          %1144 = vst [vmem:[#allocation2 + $0x38] sm:$0xff] %v1112
          %1145 = vst [vmem:[#allocation2 + $0x40] sm:$0xff] %v1113
          %1146 = vst [vmem:[#allocation2 + $0x48] sm:$0xff] %v1114
          %1147 = vst [vmem:[#allocation2 + $0x50] sm:$0xff] %v1115
          %1148 = vst [vmem:[#allocation2 + $0x58] sm:$0xff] %v1116
          %1149 = vst [vmem:[#allocation2 + $0x60] sm:$0xff] %v1117
          %1150 = vst [vmem:[#allocation2 + $0x68] sm:$0xff] %v1118
          %1151 = vst [vmem:[#allocation2 + $0x70] sm:$0xff] %v1119
          %1152 = vst [vmem:[#allocation2 + $0x78] sm:$0xff] %v1120
          %v1153 = vpack.c.bf16 %v967, %v963
          %v1154 = vpack.c.bf16 %v969, %v965
          %v1155 = vpack.c.bf16 %v977, %v973
          %v1156 = vpack.c.bf16 %v979, %v975
          %v1157 = vpack.c.bf16 %v987, %v983
          %v1158 = vpack.c.bf16 %v989, %v985
          %v1159 = vpack.c.bf16 %v997, %v993
          %v1160 = vpack.c.bf16 %v999, %v995
          %v1161 = vpack.c.bf16 %v1007, %v1003
          %v1162 = vpack.c.bf16 %v1009, %v1005
          %v1163 = vpack.c.bf16 %v1017, %v1013
          %v1164 = vpack.c.bf16 %v1019, %v1015
          %v1165 = vpack.c.bf16 %v1027, %v1023
          %v1166 = vpack.c.bf16 %v1029, %v1025
          %v1167 = vpack.c.bf16 %v1037, %v1033
          %v1168 = vpack.c.bf16 %v1039, %v1035
          %v1185 = vunpack.c.l.b16 %v1153
          %v1186 = vunpack.c.l.b16 %v1154
          %v1187 = vunpack.c.h.b16 %v1153
          %v1188 = vunpack.c.h.b16 %v1154
          %v1189 = vunpack.c.l.b16 %v1155
          %v1190 = vunpack.c.l.b16 %v1156
          %v1191 = vunpack.c.h.b16 %v1155
          %v1192 = vunpack.c.h.b16 %v1156
          %v1193 = vunpack.c.l.b16 %v1157
          %v1194 = vunpack.c.l.b16 %v1158
          %v1195 = vunpack.c.h.b16 %v1157
          %v1196 = vunpack.c.h.b16 %v1158
          %v1197 = vunpack.c.l.b16 %v1159
          %v1198 = vunpack.c.l.b16 %v1160
          %v1199 = vunpack.c.h.b16 %v1159
          %v1200 = vunpack.c.h.b16 %v1160
          %v1201 = vunpack.c.l.b16 %v1161
          %v1202 = vunpack.c.l.b16 %v1162
          %v1203 = vunpack.c.h.b16 %v1161
          %v1204 = vunpack.c.h.b16 %v1162
          %v1205 = vunpack.c.l.b16 %v1163
          %v1206 = vunpack.c.l.b16 %v1164
          %v1207 = vunpack.c.h.b16 %v1163
          %v1208 = vunpack.c.h.b16 %v1164
          %v1209 = vunpack.c.l.b16 %v1165
          %v1210 = vunpack.c.l.b16 %v1166
          %v1211 = vunpack.c.h.b16 %v1165
          %v1212 = vunpack.c.h.b16 %v1166
          %v1213 = vunpack.c.l.b16 %v1167
          %v1214 = vunpack.c.l.b16 %v1168
          %v1215 = vunpack.c.h.b16 %v1167
          %v1216 = vunpack.c.h.b16 %v1168
          %v1217 = vpack.c.b16 %v1186, %v1185
          %v1218 = vpack.c.b16 %v1188, %v1187
          %v1219 = vpack.c.b16 %v1190, %v1189
          %v1220 = vpack.c.b16 %v1192, %v1191
          %v1221 = vpack.c.b16 %v1194, %v1193
          %v1222 = vpack.c.b16 %v1196, %v1195
          %v1223 = vpack.c.b16 %v1198, %v1197
          %v1224 = vpack.c.b16 %v1200, %v1199
          %v1225 = vpack.c.b16 %v1202, %v1201
          %v1226 = vpack.c.b16 %v1204, %v1203
          %v1227 = vpack.c.b16 %v1206, %v1205
          %v1228 = vpack.c.b16 %v1208, %v1207
          %v1229 = vpack.c.b16 %v1210, %v1209
          %v1230 = vpack.c.b16 %v1212, %v1211
          %v1231 = vpack.c.b16 %v1214, %v1213
          %v1232 = vpack.c.b16 %v1216, %v1215
          %1249 = vst [vmem:[#allocation3] sm:$0xff] %v1217
          %1250 = vst [vmem:[#allocation3 + $0x8] sm:$0xff] %v1218
          %1251 = vst [vmem:[#allocation3 + $0x10] sm:$0xff] %v1219
          %1252 = vst [vmem:[#allocation3 + $0x18] sm:$0xff] %v1220
          %1253 = vst [vmem:[#allocation3 + $0x20] sm:$0xff] %v1221
          %1254 = vst [vmem:[#allocation3 + $0x28] sm:$0xff] %v1222
          %1255 = vst [vmem:[#allocation3 + $0x30] sm:$0xff] %v1223
          %1256 = vst [vmem:[#allocation3 + $0x38] sm:$0xff] %v1224
          %1257 = vst [vmem:[#allocation3 + $0x40] sm:$0xff] %v1225
          %1258 = vst [vmem:[#allocation3 + $0x48] sm:$0xff] %v1226
          %1259 = vst [vmem:[#allocation3 + $0x50] sm:$0xff] %v1227
          %1260 = vst [vmem:[#allocation3 + $0x58] sm:$0xff] %v1228
          %1261 = vst [vmem:[#allocation3 + $0x60] sm:$0xff] %v1229
          %1262 = vst [vmem:[#allocation3 + $0x68] sm:$0xff] %v1230
          %1263 = vst [vmem:[#allocation3 + $0x70] sm:$0xff] %v1231
          %1264 = vst [vmem:[#allocation3 + $0x78] sm:$0xff] %v1232
        $region68: #{tpu_custom_call.1} parent=47 // pred_fallthru
          _
        %s1265 = smul.u32 %s31, 128
        %s1266 = sshra.s32 %s1265, 3
        %s1267 = sand.u32 %s1265, 7
        %s1268 = smul.u32 %s1266, 2
        %s1269 = smul.addr %s1268, 8
        %s1270 = scalar_lea.vmem %s312, %s1269 [#allocation5]
        %v1271 = vld [vmem:[%s1270] sm:$0xff]
        %v1272 = vld [vmem:[%s1270 + $0x8] sm:$0xff]
        %v1273 = vld [vmem:[%s1270 + $0x10] sm:$0xff]
        %v1274 = vld [vmem:[%s1270 + $0x18] sm:$0xff]
        %v1275 = vld [vmem:[%s1270 + $0x20] sm:$0xff]
        %v1276 = vld [vmem:[%s1270 + $0x28] sm:$0xff]
        %v1277 = vld [vmem:[%s1270 + $0x30] sm:$0xff]
        %v1278 = vld [vmem:[%s1270 + $0x38] sm:$0xff]
        %v1279 = vld [vmem:[%s1270 + $0x40] sm:$0xff]
        %v1280 = vld [vmem:[%s1270 + $0x48] sm:$0xff]
        %v1281 = vld [vmem:[%s1270 + $0x50] sm:$0xff]
        %v1282 = vld [vmem:[%s1270 + $0x58] sm:$0xff]
        %v1283 = vld [vmem:[%s1270 + $0x60] sm:$0xff]
        %v1284 = vld [vmem:[%s1270 + $0x68] sm:$0xff]
        %v1285 = vld [vmem:[%s1270 + $0x70] sm:$0xff]
        %v1286 = vld [vmem:[%s1270 + $0x78] sm:$0xff]
        %v1287 = vld [vmem:[%s1270 + $0x80] sm:$0xff]
        %v1288 = vld [vmem:[%s1270 + $0x88] sm:$0xff]
        %v1289 = vld [vmem:[%s1270 + $0x90] sm:$0xff]
        %v1290 = vld [vmem:[%s1270 + $0x98] sm:$0xff]
        %v1291 = vld [vmem:[%s1270 + $0xa0] sm:$0xff]
        %v1292 = vld [vmem:[%s1270 + $0xa8] sm:$0xff]
        %v1293 = vld [vmem:[%s1270 + $0xb0] sm:$0xff]
        %v1294 = vld [vmem:[%s1270 + $0xb8] sm:$0xff]
        %v1295 = vld [vmem:[%s1270 + $0xc0] sm:$0xff]
        %v1296 = vld [vmem:[%s1270 + $0xc8] sm:$0xff]
        %v1297 = vld [vmem:[%s1270 + $0xd0] sm:$0xff]
        %v1298 = vld [vmem:[%s1270 + $0xd8] sm:$0xff]
        %v1299 = vld [vmem:[%s1270 + $0xe0] sm:$0xff]
        %v1300 = vld [vmem:[%s1270 + $0xe8] sm:$0xff]
        %v1301 = vld [vmem:[%s1270 + $0xf0] sm:$0xff]
        %v1302 = vld [vmem:[%s1270 + $0xf8] sm:$0xff]
        %v1303 = vpack.c.bf16 %v1273, %v1271
        %v1304 = vpack.c.bf16 %v1274, %v1272
        %v1305 = vpack.c.bf16 %v1277, %v1275
        %v1306 = vpack.c.bf16 %v1278, %v1276
        %v1307 = vpack.c.bf16 %v1281, %v1279
        %v1308 = vpack.c.bf16 %v1282, %v1280
        %v1309 = vpack.c.bf16 %v1285, %v1283
        %v1310 = vpack.c.bf16 %v1286, %v1284
        %v1311 = vpack.c.bf16 %v1289, %v1287
        %v1312 = vpack.c.bf16 %v1290, %v1288
        %v1313 = vpack.c.bf16 %v1293, %v1291
        %v1314 = vpack.c.bf16 %v1294, %v1292
        %v1315 = vpack.c.bf16 %v1297, %v1295
        %v1316 = vpack.c.bf16 %v1298, %v1296
        %v1317 = vpack.c.bf16 %v1301, %v1299
        %v1318 = vpack.c.bf16 %v1302, %v1300
        %v1319 = vld [vmem:[#allocation8] sm:$0xff]
        %v1320 = vld [vmem:[#allocation8 + $0x8] sm:$0xff]
        %v1321 = vld [vmem:[#allocation8 + $0x10] sm:$0xff]
        %v1322 = vld [vmem:[#allocation8 + $0x18] sm:$0xff]
        %v1323 = vld [vmem:[#allocation8 + $0x20] sm:$0xff]
        %v1324 = vld [vmem:[#allocation8 + $0x28] sm:$0xff]
        %v1325 = vld [vmem:[#allocation8 + $0x30] sm:$0xff]
        %v1326 = vld [vmem:[#allocation8 + $0x38] sm:$0xff]
        %v1327 = vld [vmem:[#allocation8 + $0x40] sm:$0xff]
        %v1328 = vld [vmem:[#allocation8 + $0x48] sm:$0xff]
        %v1329 = vld [vmem:[#allocation8 + $0x50] sm:$0xff]
        %v1330 = vld [vmem:[#allocation8 + $0x58] sm:$0xff]
        %v1331 = vld [vmem:[#allocation8 + $0x60] sm:$0xff]
        %v1332 = vld [vmem:[#allocation8 + $0x68] sm:$0xff]
        %v1333 = vld [vmem:[#allocation8 + $0x70] sm:$0xff]
        %v1334 = vld [vmem:[#allocation8 + $0x78] sm:$0xff]
        %v1335 = vld [vmem:[#allocation8 + $0x80] sm:$0xff]
        %v1336 = vld [vmem:[#allocation8 + $0x88] sm:$0xff]
        %v1337 = vld [vmem:[#allocation8 + $0x90] sm:$0xff]
        %v1338 = vld [vmem:[#allocation8 + $0x98] sm:$0xff]
        %v1339 = vld [vmem:[#allocation8 + $0xa0] sm:$0xff]
        %v1340 = vld [vmem:[#allocation8 + $0xa8] sm:$0xff]
        %v1341 = vld [vmem:[#allocation8 + $0xb0] sm:$0xff]
        %v1342 = vld [vmem:[#allocation8 + $0xb8] sm:$0xff]
        %v1343 = vld [vmem:[#allocation8 + $0xc0] sm:$0xff]
        %v1344 = vld [vmem:[#allocation8 + $0xc8] sm:$0xff]
        %v1345 = vld [vmem:[#allocation8 + $0xd0] sm:$0xff]
        %v1346 = vld [vmem:[#allocation8 + $0xd8] sm:$0xff]
        %v1347 = vld [vmem:[#allocation8 + $0xe0] sm:$0xff]
        %v1348 = vld [vmem:[#allocation8 + $0xe8] sm:$0xff]
        %v1349 = vld [vmem:[#allocation8 + $0xf0] sm:$0xff]
        %v1350 = vld [vmem:[#allocation8 + $0xf8] sm:$0xff]
        %v1351 = vld [vmem:[%s2] sm:$0x3]
        %v1353 = vlaneseq
        %v1354 = vshrl.u32 %v1353, 7
        %v1355 = vsub.s32 0, %v1354
        %v1356 = vrot.slane %v1351, %v1355
        %v1357 = vlaneseq
        %v1358 = vshrl.u32 %v1357, 7
        %v1359 = vsub.s32 1, %v1358
        %v1360 = vrot.slane %v1351, %v1359
        %v1395 = vunpack.c.l.b16 %v1319
        %v1396 = vunpack.c.h.b16 %v1319
        %v1397 = vunpack.c.l.b16 %v1320
        %v1398 = vunpack.c.h.b16 %v1320
        %v1399 = vunpack.c.l.b16 %v1321
        %v1400 = vunpack.c.h.b16 %v1321
        %v1401 = vunpack.c.l.b16 %v1322
        %v1402 = vunpack.c.h.b16 %v1322
        %v1403 = vunpack.c.l.b16 %v1323
        %v1404 = vunpack.c.h.b16 %v1323
        %v1405 = vunpack.c.l.b16 %v1324
        %v1406 = vunpack.c.h.b16 %v1324
        %v1407 = vunpack.c.l.b16 %v1325
        %v1408 = vunpack.c.h.b16 %v1325
        %v1409 = vunpack.c.l.b16 %v1326
        %v1410 = vunpack.c.h.b16 %v1326
        %v1411 = vunpack.c.l.b16 %v1327
        %v1412 = vunpack.c.h.b16 %v1327
        %v1413 = vunpack.c.l.b16 %v1328
        %v1414 = vunpack.c.h.b16 %v1328
        %v1415 = vunpack.c.l.b16 %v1329
        %v1416 = vunpack.c.h.b16 %v1329
        %v1417 = vunpack.c.l.b16 %v1330
        %v1418 = vunpack.c.h.b16 %v1330
        %v1419 = vunpack.c.l.b16 %v1331
        %v1420 = vunpack.c.h.b16 %v1331
        %v1421 = vunpack.c.l.b16 %v1332
        %v1422 = vunpack.c.h.b16 %v1332
        %v1423 = vunpack.c.l.b16 %v1333
        %v1424 = vunpack.c.h.b16 %v1333
        %v1425 = vunpack.c.l.b16 %v1334
        %v1426 = vunpack.c.h.b16 %v1334
        %v1427 = vunpack.c.l.b16 %v1335
        %v1428 = vunpack.c.h.b16 %v1335
        %v1429 = vunpack.c.l.b16 %v1336
        %v1430 = vunpack.c.h.b16 %v1336
        %v1431 = vunpack.c.l.b16 %v1337
        %v1432 = vunpack.c.h.b16 %v1337
        %v1433 = vunpack.c.l.b16 %v1338
        %v1434 = vunpack.c.h.b16 %v1338
        %v1435 = vunpack.c.l.b16 %v1339
        %v1436 = vunpack.c.h.b16 %v1339
        %v1437 = vunpack.c.l.b16 %v1340
        %v1438 = vunpack.c.h.b16 %v1340
        %v1439 = vunpack.c.l.b16 %v1341
        %v1440 = vunpack.c.h.b16 %v1341
        %v1441 = vunpack.c.l.b16 %v1342
        %v1442 = vunpack.c.h.b16 %v1342
        %v1443 = vunpack.c.l.b16 %v1343
        %v1444 = vunpack.c.h.b16 %v1343
        %v1445 = vunpack.c.l.b16 %v1344
        %v1446 = vunpack.c.h.b16 %v1344
        %v1447 = vunpack.c.l.b16 %v1345
        %v1448 = vunpack.c.h.b16 %v1345
        %v1449 = vunpack.c.l.b16 %v1346
        %v1450 = vunpack.c.h.b16 %v1346
        %v1451 = vunpack.c.l.b16 %v1347
        %v1452 = vunpack.c.h.b16 %v1347
        %v1453 = vunpack.c.l.b16 %v1348
        %v1454 = vunpack.c.h.b16 %v1348
        %v1455 = vunpack.c.l.b16 %v1349
        %v1456 = vunpack.c.h.b16 %v1349
        %v1457 = vunpack.c.l.b16 %v1350
        %v1458 = vunpack.c.h.b16 %v1350
        %v1459 = vpack.c.b16 %v1397, %v1395
        %v1460 = vpack.c.b16 %v1398, %v1396
        %v1461 = vpack.c.b16 %v1401, %v1399
        %v1462 = vpack.c.b16 %v1402, %v1400
        %v1463 = vpack.c.b16 %v1405, %v1403
        %v1464 = vpack.c.b16 %v1406, %v1404
        %v1465 = vpack.c.b16 %v1409, %v1407
        %v1466 = vpack.c.b16 %v1410, %v1408
        %v1467 = vpack.c.b16 %v1413, %v1411
        %v1468 = vpack.c.b16 %v1414, %v1412
        %v1469 = vpack.c.b16 %v1417, %v1415
        %v1470 = vpack.c.b16 %v1418, %v1416
        %v1471 = vpack.c.b16 %v1421, %v1419
        %v1472 = vpack.c.b16 %v1422, %v1420
        %v1473 = vpack.c.b16 %v1425, %v1423
        %v1474 = vpack.c.b16 %v1426, %v1424
        %v1475 = vpack.c.b16 %v1429, %v1427
        %v1476 = vpack.c.b16 %v1430, %v1428
        %v1477 = vpack.c.b16 %v1433, %v1431
        %v1478 = vpack.c.b16 %v1434, %v1432
        %v1479 = vpack.c.b16 %v1437, %v1435
        %v1480 = vpack.c.b16 %v1438, %v1436
        %v1481 = vpack.c.b16 %v1441, %v1439
        %v1482 = vpack.c.b16 %v1442, %v1440
        %v1483 = vpack.c.b16 %v1445, %v1443
        %v1484 = vpack.c.b16 %v1446, %v1444
        %v1485 = vpack.c.b16 %v1449, %v1447
        %v1486 = vpack.c.b16 %v1450, %v1448
        %v1487 = vpack.c.b16 %v1453, %v1451
        %v1488 = vpack.c.b16 %v1454, %v1452
        %v1489 = vpack.c.b16 %v1457, %v1455
        %v1490 = vpack.c.b16 %v1458, %v1456
        %1523 = vmatprep.subr.bf16.mxu0 %v1474
        %1524 = vmatpush1.bf16.msra.mxu0 %v1473
        %1525 = vmatprep.subr.bf16.mxu0 %v1472
        %1526 = vmatpush1.bf16.msra.mxu0 %v1471
        %1527 = vmatprep.subr.bf16.mxu0 %v1470
        %1528 = vmatpush1.bf16.msra.mxu0 %v1469
        %1529 = vmatprep.subr.bf16.mxu0 %v1468
        %1530 = vmatpush1.bf16.msra.mxu0 %v1467
        %1531 = vmatprep.subr.bf16.mxu0 %v1466
        %1532 = vmatpush1.bf16.msra.mxu0 %v1465
        %1533 = vmatprep.subr.bf16.mxu0 %v1464
        %1534 = vmatpush1.bf16.msra.mxu0 %v1463
        %1535 = vmatprep.subr.bf16.mxu0 %v1462
        %1536 = vmatpush1.bf16.msra.mxu0 %v1461
        %1537 = vmatprep.subr.bf16.mxu0 %v1460
        %1538 = vmatpush1.bf16.msra.mxu0 %v1459
        %1539 = vmatprep.subr.bf16.mxu0 %v1490
        %1540 = vmatpush2.bf16.msra.mxu0 %v1489
        %1541 = vmatprep.subr.bf16.mxu0 %v1488
        %1542 = vmatpush2.bf16.msra.mxu0 %v1487
        %1543 = vmatprep.subr.bf16.mxu0 %v1486
        %1544 = vmatpush2.bf16.msra.mxu0 %v1485
        %1545 = vmatprep.subr.bf16.mxu0 %v1484
        %1546 = vmatpush2.bf16.msra.mxu0 %v1483
        %1547 = vmatprep.subr.bf16.mxu0 %v1482
        %1548 = vmatpush2.bf16.msra.mxu0 %v1481
        %1549 = vmatprep.subr.bf16.mxu0 %v1480
        %1550 = vmatpush2.bf16.msra.mxu0 %v1479
        %1551 = vmatprep.subr.bf16.mxu0 %v1478
        %1552 = vmatpush2.bf16.msra.mxu0 %v1477
        %1553 = vmatprep.subr.bf16.mxu0 %v1476
        %1554 = vmatpush2.bf16.msra.mxu0 %v1475
        %1555 = vmatprep.mubr.bf16.mxu0 %v1304
        %1556 = vmatmul.mubr.bf16.gmra.mxu0 %v1303
        %v1557 = vpop.f32.mrf.mxu0
        %v1558 = vadd.f32 %v1356, %v1557
        %v1559 = vpop.f32.mrf.mxu0
        %v1560 = vadd.f32 %v1360, %v1559
        %v1561 = vpop.f32.mrf.mxu0
        %v1562 = vadd.f32 %v1356, %v1561
        %v1563 = vpop.f32.mrf.mxu0
        %v1564 = vadd.f32 %v1360, %v1563
        %1565 = vmatprep.mubr.bf16.mxu0 %v1306
        %1566 = vmatmul.mubr.bf16.gmra.mxu0 %v1305
        %v1567 = vpop.f32.mrf.mxu0
        %v1568 = vadd.f32 %v1356, %v1567
        %v1569 = vpop.f32.mrf.mxu0
        %v1570 = vadd.f32 %v1360, %v1569
        %v1571 = vpop.f32.mrf.mxu0
        %v1572 = vadd.f32 %v1356, %v1571
        %v1573 = vpop.f32.mrf.mxu0
        %v1574 = vadd.f32 %v1360, %v1573
        %1575 = vmatprep.mubr.bf16.mxu0 %v1308
        %1576 = vmatmul.mubr.bf16.gmra.mxu0 %v1307
        %v1577 = vpop.f32.mrf.mxu0
        %v1578 = vadd.f32 %v1356, %v1577
        %v1579 = vpop.f32.mrf.mxu0
        %v1580 = vadd.f32 %v1360, %v1579
        %v1581 = vpop.f32.mrf.mxu0
        %v1582 = vadd.f32 %v1356, %v1581
        %v1583 = vpop.f32.mrf.mxu0
        %v1584 = vadd.f32 %v1360, %v1583
        %1585 = vmatprep.mubr.bf16.mxu0 %v1310
        %1586 = vmatmul.mubr.bf16.gmra.mxu0 %v1309
        %v1587 = vpop.f32.mrf.mxu0
        %v1588 = vadd.f32 %v1356, %v1587
        %v1589 = vpop.f32.mrf.mxu0
        %v1590 = vadd.f32 %v1360, %v1589
        %v1591 = vpop.f32.mrf.mxu0
        %v1592 = vadd.f32 %v1356, %v1591
        %v1593 = vpop.f32.mrf.mxu0
        %v1594 = vadd.f32 %v1360, %v1593
        %1595 = vmatprep.mubr.bf16.mxu0 %v1312
        %1596 = vmatmul.mubr.bf16.gmra.mxu0 %v1311
        %v1597 = vpop.f32.mrf.mxu0
        %v1598 = vadd.f32 %v1356, %v1597
        %v1599 = vpop.f32.mrf.mxu0
        %v1600 = vadd.f32 %v1360, %v1599
        %v1601 = vpop.f32.mrf.mxu0
        %v1602 = vadd.f32 %v1356, %v1601
        %v1603 = vpop.f32.mrf.mxu0
        %v1604 = vadd.f32 %v1360, %v1603
        %1605 = vmatprep.mubr.bf16.mxu0 %v1314
        %1606 = vmatmul.mubr.bf16.gmra.mxu0 %v1313
        %v1607 = vpop.f32.mrf.mxu0
        %v1608 = vadd.f32 %v1356, %v1607
        %v1609 = vpop.f32.mrf.mxu0
        %v1610 = vadd.f32 %v1360, %v1609
        %v1611 = vpop.f32.mrf.mxu0
        %v1612 = vadd.f32 %v1356, %v1611
        %v1613 = vpop.f32.mrf.mxu0
        %v1614 = vadd.f32 %v1360, %v1613
        %1615 = vmatprep.mubr.bf16.mxu0 %v1316
        %1616 = vmatmul.mubr.bf16.gmra.mxu0 %v1315
        %v1617 = vpop.f32.mrf.mxu0
        %v1618 = vadd.f32 %v1356, %v1617
        %v1619 = vpop.f32.mrf.mxu0
        %v1620 = vadd.f32 %v1360, %v1619
        %v1621 = vpop.f32.mrf.mxu0
        %v1622 = vadd.f32 %v1356, %v1621
        %v1623 = vpop.f32.mrf.mxu0
        %v1624 = vadd.f32 %v1360, %v1623
        %1625 = vmatprep.mubr.bf16.mxu0 %v1318
        %1626 = vmatmul.mubr.bf16.gmra.mxu0 %v1317
        %v1627 = vpop.f32.mrf.mxu0
        %v1628 = vadd.f32 %v1356, %v1627
        %v1629 = vpop.f32.mrf.mxu0
        %v1630 = vadd.f32 %v1360, %v1629
        %v1631 = vpop.f32.mrf.mxu0
        %v1632 = vadd.f32 %v1356, %v1631
        %v1633 = vpop.f32.mrf.mxu0
        %v1634 = vadd.f32 %v1360, %v1633
        %1635 = vdwg.mxu0
        %v1636 = vmul.f32 %v1558, 0.088388346
        %v1637 = vmul.f32 %v1560, 0.088388346
        %v1638 = vmul.f32 %v1562, 0.088388346
        %v1639 = vmul.f32 %v1564, 0.088388346
        %v1640 = vmul.f32 %v1568, 0.088388346
        %v1641 = vmul.f32 %v1570, 0.088388346
        %v1642 = vmul.f32 %v1572, 0.088388346
        %v1643 = vmul.f32 %v1574, 0.088388346
        %v1644 = vmul.f32 %v1578, 0.088388346
        %v1645 = vmul.f32 %v1580, 0.088388346
        %v1646 = vmul.f32 %v1582, 0.088388346
        %v1647 = vmul.f32 %v1584, 0.088388346
        %v1648 = vmul.f32 %v1588, 0.088388346
        %v1649 = vmul.f32 %v1590, 0.088388346
        %v1650 = vmul.f32 %v1592, 0.088388346
        %v1651 = vmul.f32 %v1594, 0.088388346
        %v1652 = vmul.f32 %v1598, 0.088388346
        %v1653 = vmul.f32 %v1600, 0.088388346
        %v1654 = vmul.f32 %v1602, 0.088388346
        %v1655 = vmul.f32 %v1604, 0.088388346
        %v1656 = vmul.f32 %v1608, 0.088388346
        %v1657 = vmul.f32 %v1610, 0.088388346
        %v1658 = vmul.f32 %v1612, 0.088388346
        %v1659 = vmul.f32 %v1614, 0.088388346
        %v1660 = vmul.f32 %v1618, 0.088388346
        %v1661 = vmul.f32 %v1620, 0.088388346
        %v1662 = vmul.f32 %v1622, 0.088388346
        %v1663 = vmul.f32 %v1624, 0.088388346
        %v1664 = vmul.f32 %v1628, 0.088388346
        %v1665 = vmul.f32 %v1630, 0.088388346
        %v1666 = vmul.f32 %v1632, 0.088388346
        %v1667 = vmul.f32 %v1634, 0.088388346
        %v1668 = vpack.c.bf16 %v1638, %v1636
        %v1669 = vpack.c.bf16 %v1639, %v1637
        %v1670 = vpack.c.bf16 %v1642, %v1640
        %v1671 = vpack.c.bf16 %v1643, %v1641
        %v1672 = vpack.c.bf16 %v1646, %v1644
        %v1673 = vpack.c.bf16 %v1647, %v1645
        %v1674 = vpack.c.bf16 %v1650, %v1648
        %v1675 = vpack.c.bf16 %v1651, %v1649
        %v1676 = vpack.c.bf16 %v1654, %v1652
        %v1677 = vpack.c.bf16 %v1655, %v1653
        %v1678 = vpack.c.bf16 %v1658, %v1656
        %v1679 = vpack.c.bf16 %v1659, %v1657
        %v1680 = vpack.c.bf16 %v1662, %v1660
        %v1681 = vpack.c.bf16 %v1663, %v1661
        %v1682 = vpack.c.bf16 %v1666, %v1664
        %v1683 = vpack.c.bf16 %v1667, %v1665
        %v1684 = vld [vmem:[#allocation2] sm:$0xf]
        %v1685 = vld [vmem:[#allocation2 + $0x8] sm:$0xf]
        %v1686 = vld [vmem:[#allocation2 + $0x10] sm:$0xf]
        %v1687 = vld [vmem:[#allocation2 + $0x18] sm:$0xf]
        %v1688 = vld [vmem:[#allocation2 + $0x20] sm:$0xf]
        %v1689 = vld [vmem:[#allocation2 + $0x28] sm:$0xf]
        %v1690 = vld [vmem:[#allocation2 + $0x30] sm:$0xf]
        %v1691 = vld [vmem:[#allocation2 + $0x38] sm:$0xf]
        %v1692 = vld [vmem:[#allocation2 + $0x40] sm:$0xf]
        %v1693 = vld [vmem:[#allocation2 + $0x48] sm:$0xf]
        %v1694 = vld [vmem:[#allocation2 + $0x50] sm:$0xf]
        %v1695 = vld [vmem:[#allocation2 + $0x58] sm:$0xf]
        %v1696 = vld [vmem:[#allocation2 + $0x60] sm:$0xf]
        %v1697 = vld [vmem:[#allocation2 + $0x68] sm:$0xf]
        %v1698 = vld [vmem:[#allocation2 + $0x70] sm:$0xf]
        %v1699 = vld [vmem:[#allocation2 + $0x78] sm:$0xf]
        %v1700 = vld [vmem:[#allocation3] sm:$0xf]
        %v1701 = vld [vmem:[#allocation3 + $0x8] sm:$0xf]
        %v1702 = vld [vmem:[#allocation3 + $0x10] sm:$0xf]
        %v1703 = vld [vmem:[#allocation3 + $0x18] sm:$0xf]
        %v1704 = vld [vmem:[#allocation3 + $0x20] sm:$0xf]
        %v1705 = vld [vmem:[#allocation3 + $0x28] sm:$0xf]
        %v1706 = vld [vmem:[#allocation3 + $0x30] sm:$0xf]
        %v1707 = vld [vmem:[#allocation3 + $0x38] sm:$0xf]
        %v1708 = vld [vmem:[#allocation3 + $0x40] sm:$0xf]
        %v1709 = vld [vmem:[#allocation3 + $0x48] sm:$0xf]
        %v1710 = vld [vmem:[#allocation3 + $0x50] sm:$0xf]
        %v1711 = vld [vmem:[#allocation3 + $0x58] sm:$0xf]
        %v1712 = vld [vmem:[#allocation3 + $0x60] sm:$0xf]
        %v1713 = vld [vmem:[#allocation3 + $0x68] sm:$0xf]
        %v1714 = vld [vmem:[#allocation3 + $0x70] sm:$0xf]
        %v1715 = vld [vmem:[#allocation3 + $0x78] sm:$0xf]
        %v1732 = vunpack.c.l.b16 %v1684
        %v1733 = vunpack.c.l.b16 %v1685
        %v1734 = vunpack.c.l.b16 %v1686
        %v1735 = vunpack.c.l.b16 %v1687
        %v1736 = vunpack.c.l.b16 %v1688
        %v1737 = vunpack.c.l.b16 %v1689
        %v1738 = vunpack.c.l.b16 %v1690
        %v1739 = vunpack.c.l.b16 %v1691
        %v1740 = vunpack.c.l.b16 %v1692
        %v1741 = vunpack.c.l.b16 %v1693
        %v1742 = vunpack.c.l.b16 %v1694
        %v1743 = vunpack.c.l.b16 %v1695
        %v1744 = vunpack.c.l.b16 %v1696
        %v1745 = vunpack.c.l.b16 %v1697
        %v1746 = vunpack.c.l.b16 %v1698
        %v1747 = vunpack.c.l.b16 %v1699
        %v1748 = vpack.c.b16 %v1733, %v1732
        %v1749 = vpack.c.b16 %v1735, %v1734
        %v1750 = vpack.c.b16 %v1737, %v1736
        %v1751 = vpack.c.b16 %v1739, %v1738
        %v1752 = vpack.c.b16 %v1741, %v1740
        %v1753 = vpack.c.b16 %v1743, %v1742
        %v1754 = vpack.c.b16 %v1745, %v1744
        %v1755 = vpack.c.b16 %v1747, %v1746
        %1764 = vmatprep.subr.bf16.mxu0 0
        %1765 = vmatpush1.bf16.xpose.msra.mxu0 %v1755
        %1766 = vmatprep.subr.bf16.mxu0 0
        %1767 = vmatpush1.bf16.xpose.msra.mxu0 %v1754
        %1768 = vmatprep.subr.bf16.mxu0 0
        %1769 = vmatpush1.bf16.xpose.msra.mxu0 %v1753
        %1770 = vmatprep.subr.bf16.mxu0 0
        %1771 = vmatpush1.bf16.xpose.msra.mxu0 %v1752
        %1772 = vmatprep.subr.bf16.mxu0 0
        %1773 = vmatpush1.bf16.xpose.msra.mxu0 %v1751
        %1774 = vmatprep.subr.bf16.mxu0 0
        %1775 = vmatpush1.bf16.xpose.msra.mxu0 %v1750
        %1776 = vmatprep.subr.bf16.mxu0 0
        %1777 = vmatpush1.bf16.xpose.msra.mxu0 %v1749
        %1778 = vmatprep.subr.bf16.mxu0 0
        %1779 = vmatpush1.bf16.xpose.msra.mxu0 %v1748
        %1780 = vmatprep.subr.bf16.mxu0 0
        %1781 = vmatpush2.bf16.xpose.msra.mxu0 0
        %1782 = vmatprep.subr.bf16.mxu0 0
        %1783 = vmatpush2.bf16.xpose.msra.mxu0 0
        %1784 = vmatprep.subr.bf16.mxu0 0
        %1785 = vmatpush2.bf16.xpose.msra.mxu0 0
        %1786 = vmatprep.subr.bf16.mxu0 0
        %1787 = vmatpush2.bf16.xpose.msra.mxu0 0
        %1788 = vmatprep.subr.bf16.mxu0 0
        %1789 = vmatpush2.bf16.xpose.msra.mxu0 0
        %1790 = vmatprep.subr.bf16.mxu0 0
        %1791 = vmatpush2.bf16.xpose.msra.mxu0 0
        %1792 = vmatprep.subr.bf16.mxu0 0
        %1793 = vmatpush2.bf16.xpose.msra.mxu0 0
        %1794 = vmatprep.subr.bf16.mxu0 0
        %1795 = vmatpush2.bf16.xpose.msra.mxu0 0
        %1796 = vmatprep.mubr.bf16.mxu0 0
        %1797 = vmatmul.mubr.bf16.gmra.mxu0 %v1668
        %v1798 = vpop.f32.mrf.mxu0
        %v1799 = vadd.f32 0.0, %v1798
        %v1800 = vpop.f32.mrf.mxu0
        %v1801 = vpop.f32.mrf.mxu0
        %v1802 = vadd.f32 0.0, %v1801
        %v1803 = vpop.f32.mrf.mxu0
        %1804 = vmatprep.mubr.bf16.mxu0 0
        %1805 = vmatmul.mubr.bf16.gmra.mxu0 %v1670
        %v1806 = vpop.f32.mrf.mxu0
        %v1807 = vadd.f32 0.0, %v1806
        %v1808 = vpop.f32.mrf.mxu0
        %v1809 = vpop.f32.mrf.mxu0
        %v1810 = vadd.f32 0.0, %v1809
        %v1811 = vpop.f32.mrf.mxu0
        %1812 = vmatprep.mubr.bf16.mxu0 0
        %1813 = vmatmul.mubr.bf16.gmra.mxu0 %v1672
        %v1814 = vpop.f32.mrf.mxu0
        %v1815 = vadd.f32 0.0, %v1814
        %v1816 = vpop.f32.mrf.mxu0
        %v1817 = vpop.f32.mrf.mxu0
        %v1818 = vadd.f32 0.0, %v1817
        %v1819 = vpop.f32.mrf.mxu0
        %1820 = vmatprep.mubr.bf16.mxu0 0
        %1821 = vmatmul.mubr.bf16.gmra.mxu0 %v1674
        %v1822 = vpop.f32.mrf.mxu0
        %v1823 = vadd.f32 0.0, %v1822
        %v1824 = vpop.f32.mrf.mxu0
        %v1825 = vpop.f32.mrf.mxu0
        %v1826 = vadd.f32 0.0, %v1825
        %v1827 = vpop.f32.mrf.mxu0
        %1828 = vmatprep.mubr.bf16.mxu0 0
        %1829 = vmatmul.mubr.bf16.gmra.mxu0 %v1676
        %v1830 = vpop.f32.mrf.mxu0
        %v1831 = vadd.f32 0.0, %v1830
        %v1832 = vpop.f32.mrf.mxu0
        %v1833 = vpop.f32.mrf.mxu0
        %v1834 = vadd.f32 0.0, %v1833
        %v1835 = vpop.f32.mrf.mxu0
        %1836 = vmatprep.mubr.bf16.mxu0 0
        %1837 = vmatmul.mubr.bf16.gmra.mxu0 %v1678
        %v1838 = vpop.f32.mrf.mxu0
        %v1839 = vadd.f32 0.0, %v1838
        %v1840 = vpop.f32.mrf.mxu0
        %v1841 = vpop.f32.mrf.mxu0
        %v1842 = vadd.f32 0.0, %v1841
        %v1843 = vpop.f32.mrf.mxu0
        %1844 = vmatprep.mubr.bf16.mxu0 0
        %1845 = vmatmul.mubr.bf16.gmra.mxu0 %v1680
        %v1846 = vpop.f32.mrf.mxu0
        %v1847 = vadd.f32 0.0, %v1846
        %v1848 = vpop.f32.mrf.mxu0
        %v1849 = vpop.f32.mrf.mxu0
        %v1850 = vadd.f32 0.0, %v1849
        %v1851 = vpop.f32.mrf.mxu0
        %1852 = vmatprep.mubr.bf16.mxu0 0
        %1853 = vmatmul.mubr.bf16.gmra.mxu0 %v1682
        %v1854 = vpop.f32.mrf.mxu0
        %v1855 = vadd.f32 0.0, %v1854
        %v1856 = vpop.f32.mrf.mxu0
        %v1857 = vpop.f32.mrf.mxu0
        %v1858 = vadd.f32 0.0, %v1857
        %v1859 = vpop.f32.mrf.mxu0
        %1860 = vdwg.mxu0
        %1861 = vmax.xlane.f32.xlu0 %v1799
        %v1862 = vpop.xlane.xlu0 %1861
        %1863 = vmax.xlane.f32.xlu0 %v1802
        %v1864 = vpop.xlane.xlu0 %1863
        %1865 = vmax.xlane.f32.xlu0 %v1807
        %v1866 = vpop.xlane.xlu0 %1865
        %1867 = vmax.xlane.f32.xlu0 %v1810
        %v1868 = vpop.xlane.xlu0 %1867
        %1869 = vmax.xlane.f32.xlu0 %v1815
        %v1870 = vpop.xlane.xlu0 %1869
        %1871 = vmax.xlane.f32.xlu0 %v1818
        %v1872 = vpop.xlane.xlu0 %1871
        %1873 = vmax.xlane.f32.xlu0 %v1823
        %v1874 = vpop.xlane.xlu0 %1873
        %1875 = vmax.xlane.f32.xlu0 %v1826
        %v1876 = vpop.xlane.xlu0 %1875
        %1877 = vmax.xlane.f32.xlu0 %v1831
        %v1878 = vpop.xlane.xlu0 %1877
        %1879 = vmax.xlane.f32.xlu0 %v1834
        %v1880 = vpop.xlane.xlu0 %1879
        %1881 = vmax.xlane.f32.xlu0 %v1839
        %v1882 = vpop.xlane.xlu0 %1881
        %1883 = vmax.xlane.f32.xlu0 %v1842
        %v1884 = vpop.xlane.xlu0 %1883
        %1885 = vmax.xlane.f32.xlu0 %v1847
        %v1886 = vpop.xlane.xlu0 %1885
        %1887 = vmax.xlane.f32.xlu0 %v1850
        %v1888 = vpop.xlane.xlu0 %1887
        %1889 = vmax.xlane.f32.xlu0 %v1855
        %v1890 = vpop.xlane.xlu0 %1889
        %1891 = vmax.xlane.f32.xlu0 %v1858
        %v1892 = vpop.xlane.xlu0 %1891
        %v1893 = vsub.f32 %v1799, %v1862
        %v1894 = vsub.f32 %v1802, %v1864
        %v1895 = vsub.f32 %v1807, %v1866
        %v1896 = vsub.f32 %v1810, %v1868
        %v1897 = vsub.f32 %v1815, %v1870
        %v1898 = vsub.f32 %v1818, %v1872
        %v1899 = vsub.f32 %v1823, %v1874
        %v1900 = vsub.f32 %v1826, %v1876
        %v1901 = vsub.f32 %v1831, %v1878
        %v1902 = vsub.f32 %v1834, %v1880
        %v1903 = vsub.f32 %v1839, %v1882
        %v1904 = vsub.f32 %v1842, %v1884
        %v1905 = vsub.f32 %v1847, %v1886
        %v1906 = vsub.f32 %v1850, %v1888
        %v1907 = vsub.f32 %v1855, %v1890
        %v1908 = vsub.f32 %v1858, %v1892
        %v1909 = vmul.f32 %v1893, 1.442695
        %v1910 = vpow.pop %v1909
        %v1911 = vmul.f32 %v1894, 1.442695
        %v1912 = vpow.pop %v1911
        %v1913 = vmul.f32 %v1895, 1.442695
        %v1914 = vpow.pop %v1913
        %v1915 = vmul.f32 %v1896, 1.442695
        %v1916 = vpow.pop %v1915
        %v1917 = vmul.f32 %v1897, 1.442695
        %v1918 = vpow.pop %v1917
        %v1919 = vmul.f32 %v1898, 1.442695
        %v1920 = vpow.pop %v1919
        %v1921 = vmul.f32 %v1899, 1.442695
        %v1922 = vpow.pop %v1921
        %v1923 = vmul.f32 %v1900, 1.442695
        %v1924 = vpow.pop %v1923
        %v1925 = vmul.f32 %v1901, 1.442695
        %v1926 = vpow.pop %v1925
        %v1927 = vmul.f32 %v1902, 1.442695
        %v1928 = vpow.pop %v1927
        %v1929 = vmul.f32 %v1903, 1.442695
        %v1930 = vpow.pop %v1929
        %v1931 = vmul.f32 %v1904, 1.442695
        %v1932 = vpow.pop %v1931
        %v1933 = vmul.f32 %v1905, 1.442695
        %v1934 = vpow.pop %v1933
        %v1935 = vmul.f32 %v1906, 1.442695
        %v1936 = vpow.pop %v1935
        %v1937 = vmul.f32 %v1907, 1.442695
        %v1938 = vpow.pop %v1937
        %v1939 = vmul.f32 %v1908, 1.442695
        %v1940 = vpow.pop %v1939
        %1941 = vadd.xlane.f32.xlu0 %v1910
        %v1942 = vpop.xlane.xlu0 %1941
        %1943 = vadd.xlane.f32.xlu0 %v1912
        %v1944 = vpop.xlane.xlu0 %1943
        %1945 = vadd.xlane.f32.xlu0 %v1914
        %v1946 = vpop.xlane.xlu0 %1945
        %1947 = vadd.xlane.f32.xlu0 %v1916
        %v1948 = vpop.xlane.xlu0 %1947
        %1949 = vadd.xlane.f32.xlu0 %v1918
        %v1950 = vpop.xlane.xlu0 %1949
        %1951 = vadd.xlane.f32.xlu0 %v1920
        %v1952 = vpop.xlane.xlu0 %1951
        %1953 = vadd.xlane.f32.xlu0 %v1922
        %v1954 = vpop.xlane.xlu0 %1953
        %1955 = vadd.xlane.f32.xlu0 %v1924
        %v1956 = vpop.xlane.xlu0 %1955
        %1957 = vadd.xlane.f32.xlu0 %v1926
        %v1958 = vpop.xlane.xlu0 %1957
        %1959 = vadd.xlane.f32.xlu0 %v1928
        %v1960 = vpop.xlane.xlu0 %1959
        %1961 = vadd.xlane.f32.xlu0 %v1930
        %v1962 = vpop.xlane.xlu0 %1961
        %1963 = vadd.xlane.f32.xlu0 %v1932
        %v1964 = vpop.xlane.xlu0 %1963
        %1965 = vadd.xlane.f32.xlu0 %v1934
        %v1966 = vpop.xlane.xlu0 %1965
        %1967 = vadd.xlane.f32.xlu0 %v1936
        %v1968 = vpop.xlane.xlu0 %1967
        %1969 = vadd.xlane.f32.xlu0 %v1938
        %v1970 = vpop.xlane.xlu0 %1969
        %1971 = vadd.xlane.f32.xlu0 %v1940
        %v1972 = vpop.xlane.xlu0 %1971
        %v1973 = vpack.c.bf16 %v1912, %v1910
        %v1974 = vpack.c.bf16 %v1916, %v1914
        %v1975 = vpack.c.bf16 %v1920, %v1918
        %v1976 = vpack.c.bf16 %v1924, %v1922
        %v1977 = vpack.c.bf16 %v1928, %v1926
        %v1978 = vpack.c.bf16 %v1932, %v1930
        %v1979 = vpack.c.bf16 %v1936, %v1934
        %v1980 = vpack.c.bf16 %v1940, %v1938
        %v1997 = vunpack.c.l.b16 %v1700
        %v1998 = vunpack.c.l.b16 %v1701
        %v1999 = vunpack.c.l.b16 %v1702
        %v2000 = vunpack.c.l.b16 %v1703
        %v2001 = vunpack.c.l.b16 %v1704
        %v2002 = vunpack.c.l.b16 %v1705
        %v2003 = vunpack.c.l.b16 %v1706
        %v2004 = vunpack.c.l.b16 %v1707
        %v2005 = vunpack.c.l.b16 %v1708
        %v2006 = vunpack.c.l.b16 %v1709
        %v2007 = vunpack.c.l.b16 %v1710
        %v2008 = vunpack.c.l.b16 %v1711
        %v2009 = vunpack.c.l.b16 %v1712
        %v2010 = vunpack.c.l.b16 %v1713
        %v2011 = vunpack.c.l.b16 %v1714
        %v2012 = vunpack.c.l.b16 %v1715
        %v2013 = vpack.c.b16 %v1998, %v1997
        %v2014 = vpack.c.b16 %v2000, %v1999
        %v2015 = vpack.c.b16 %v2002, %v2001
        %v2016 = vpack.c.b16 %v2004, %v2003
        %v2017 = vpack.c.b16 %v2006, %v2005
        %v2018 = vpack.c.b16 %v2008, %v2007
        %v2019 = vpack.c.b16 %v2010, %v2009
        %v2020 = vpack.c.b16 %v2012, %v2011
        %2029 = vmatprep.subr.bf16.mxu0 0
        %2030 = vmatpush1.bf16.msra.mxu0 %v2020
        %2031 = vmatprep.subr.bf16.mxu0 0
        %2032 = vmatpush1.bf16.msra.mxu0 %v2019
        %2033 = vmatprep.subr.bf16.mxu0 0
        %2034 = vmatpush1.bf16.msra.mxu0 %v2018
        %2035 = vmatprep.subr.bf16.mxu0 0
        %2036 = vmatpush1.bf16.msra.mxu0 %v2017
        %2037 = vmatprep.subr.bf16.mxu0 0
        %2038 = vmatpush1.bf16.msra.mxu0 %v2016
        %2039 = vmatprep.subr.bf16.mxu0 0
        %2040 = vmatpush1.bf16.msra.mxu0 %v2015
        %2041 = vmatprep.subr.bf16.mxu0 0
        %2042 = vmatpush1.bf16.msra.mxu0 %v2014
        %2043 = vmatprep.subr.bf16.mxu0 0
        %2044 = vmatpush1.bf16.msra.mxu0 %v2013
        %2045 = vmatprep.subr.bf16.mxu0 0
        %2046 = vmatpush2.bf16.msra.mxu0 0
        %2047 = vmatprep.subr.bf16.mxu0 0
        %2048 = vmatpush2.bf16.msra.mxu0 0
        %2049 = vmatprep.subr.bf16.mxu0 0
        %2050 = vmatpush2.bf16.msra.mxu0 0
        %2051 = vmatprep.subr.bf16.mxu0 0
        %2052 = vmatpush2.bf16.msra.mxu0 0
        %2053 = vmatprep.subr.bf16.mxu0 0
        %2054 = vmatpush2.bf16.msra.mxu0 0
        %2055 = vmatprep.subr.bf16.mxu0 0
        %2056 = vmatpush2.bf16.msra.mxu0 0
        %2057 = vmatprep.subr.bf16.mxu0 0
        %2058 = vmatpush2.bf16.msra.mxu0 0
        %2059 = vmatprep.subr.bf16.mxu0 0
        %2060 = vmatpush2.bf16.msra.mxu0 0
        %2061 = vmatprep.mubr.bf16.mxu0 0
        %2062 = vmatmul.mubr.bf16.gmra.mxu0 %v1973
        %v2063 = vpop.f32.mrf.mxu0
        %v2064 = vadd.f32 0.0, %v2063
        %v2065 = vpop.f32.mrf.mxu0
        %v2066 = vpop.f32.mrf.mxu0
        %v2067 = vadd.f32 0.0, %v2066
        %v2068 = vpop.f32.mrf.mxu0
        %2069 = vmatprep.mubr.bf16.mxu0 0
        %2070 = vmatmul.mubr.bf16.gmra.mxu0 %v1974
        %v2071 = vpop.f32.mrf.mxu0
        %v2072 = vadd.f32 0.0, %v2071
        %v2073 = vpop.f32.mrf.mxu0
        %v2074 = vpop.f32.mrf.mxu0
        %v2075 = vadd.f32 0.0, %v2074
        %v2076 = vpop.f32.mrf.mxu0
        %2077 = vmatprep.mubr.bf16.mxu0 0
        %2078 = vmatmul.mubr.bf16.gmra.mxu0 %v1975
        %v2079 = vpop.f32.mrf.mxu0
        %v2080 = vadd.f32 0.0, %v2079
        %v2081 = vpop.f32.mrf.mxu0
        %v2082 = vpop.f32.mrf.mxu0
        %v2083 = vadd.f32 0.0, %v2082
        %v2084 = vpop.f32.mrf.mxu0
        %2085 = vmatprep.mubr.bf16.mxu0 0
        %2086 = vmatmul.mubr.bf16.gmra.mxu0 %v1976
        %v2087 = vpop.f32.mrf.mxu0
        %v2088 = vadd.f32 0.0, %v2087
        %v2089 = vpop.f32.mrf.mxu0
        %v2090 = vpop.f32.mrf.mxu0
        %v2091 = vadd.f32 0.0, %v2090
        %v2092 = vpop.f32.mrf.mxu0
        %2093 = vmatprep.mubr.bf16.mxu0 0
        %2094 = vmatmul.mubr.bf16.gmra.mxu0 %v1977
        %v2095 = vpop.f32.mrf.mxu0
        %v2096 = vadd.f32 0.0, %v2095
        %v2097 = vpop.f32.mrf.mxu0
        %v2098 = vpop.f32.mrf.mxu0
        %v2099 = vadd.f32 0.0, %v2098
        %v2100 = vpop.f32.mrf.mxu0
        %2101 = vmatprep.mubr.bf16.mxu0 0
        %2102 = vmatmul.mubr.bf16.gmra.mxu0 %v1978
        %v2103 = vpop.f32.mrf.mxu0
        %v2104 = vadd.f32 0.0, %v2103
        %v2105 = vpop.f32.mrf.mxu0
        %v2106 = vpop.f32.mrf.mxu0
        %v2107 = vadd.f32 0.0, %v2106
        %v2108 = vpop.f32.mrf.mxu0
        %2109 = vmatprep.mubr.bf16.mxu0 0
        %2110 = vmatmul.mubr.bf16.gmra.mxu0 %v1979
        %v2111 = vpop.f32.mrf.mxu0
        %v2112 = vadd.f32 0.0, %v2111
        %v2113 = vpop.f32.mrf.mxu0
        %v2114 = vpop.f32.mrf.mxu0
        %v2115 = vadd.f32 0.0, %v2114
        %v2116 = vpop.f32.mrf.mxu0
        %2117 = vmatprep.mubr.bf16.mxu0 0
        %2118 = vmatmul.mubr.bf16.gmra.mxu0 %v1980
        %v2119 = vpop.f32.mrf.mxu0
        %v2120 = vadd.f32 0.0, %v2119
        %v2121 = vpop.f32.mrf.mxu0
        %v2122 = vpop.f32.mrf.mxu0
        %v2123 = vadd.f32 0.0, %v2122
        %v2124 = vpop.f32.mrf.mxu0
        %2125 = vdwg.mxu0
        %v2126 = vrcp.pop %v1942
        %v2127 = vrcp.pop %v1944
        %v2128 = vrcp.pop %v1946
        %v2129 = vrcp.pop %v1948
        %v2130 = vrcp.pop %v1950
        %v2131 = vrcp.pop %v1952
        %v2132 = vrcp.pop %v1954
        %v2133 = vrcp.pop %v1956
        %v2134 = vrcp.pop %v1958
        %v2135 = vrcp.pop %v1960
        %v2136 = vrcp.pop %v1962
        %v2137 = vrcp.pop %v1964
        %v2138 = vrcp.pop %v1966
        %v2139 = vrcp.pop %v1968
        %v2140 = vrcp.pop %v1970
        %v2141 = vrcp.pop %v1972
        %v2142 = vmul.f32 %v2064, %v2126
        %v2143 = vmul.f32 %v2067, %v2127
        %v2144 = vmul.f32 %v2072, %v2128
        %v2145 = vmul.f32 %v2075, %v2129
        %v2146 = vmul.f32 %v2080, %v2130
        %v2147 = vmul.f32 %v2083, %v2131
        %v2148 = vmul.f32 %v2088, %v2132
        %v2149 = vmul.f32 %v2091, %v2133
        %v2150 = vmul.f32 %v2096, %v2134
        %v2151 = vmul.f32 %v2099, %v2135
        %v2152 = vmul.f32 %v2104, %v2136
        %v2153 = vmul.f32 %v2107, %v2137
        %v2154 = vmul.f32 %v2112, %v2138
        %v2155 = vmul.f32 %v2115, %v2139
        %v2156 = vmul.f32 %v2120, %v2140
        %v2157 = vmul.f32 %v2123, %v2141
        %v2158 = vpack.c.bf16 %v2143, %v2142
        %v2159 = vpack.c.bf16 %v2145, %v2144
        %v2160 = vpack.c.bf16 %v2147, %v2146
        %v2161 = vpack.c.bf16 %v2149, %v2148
        %v2162 = vpack.c.bf16 %v2151, %v2150
        %v2163 = vpack.c.bf16 %v2153, %v2152
        %v2164 = vpack.c.bf16 %v2155, %v2154
        %v2165 = vpack.c.bf16 %v2157, %v2156
        %v2174 = vunpack.c.l.b16 %v2158
        %v2175 = vunpack.c.h.b16 %v2158
        %v2176 = vunpack.c.l.b16 %v2159
        %v2177 = vunpack.c.h.b16 %v2159
        %v2178 = vunpack.c.l.b16 %v2160
        %v2179 = vunpack.c.h.b16 %v2160
        %v2180 = vunpack.c.l.b16 %v2161
        %v2181 = vunpack.c.h.b16 %v2161
        %v2182 = vunpack.c.l.b16 %v2162
        %v2183 = vunpack.c.h.b16 %v2162
        %v2184 = vunpack.c.l.b16 %v2163
        %v2185 = vunpack.c.h.b16 %v2163
        %v2186 = vunpack.c.l.b16 %v2164
        %v2187 = vunpack.c.h.b16 %v2164
        %v2188 = vunpack.c.l.b16 %v2165
        %v2189 = vunpack.c.h.b16 %v2165
        %v2190 = vpack.c.b16 %v2174, %v2174
        %v2191 = vpack.c.b16 %v2175, %v2175
        %v2192 = vpack.c.b16 %v2176, %v2176
        %v2193 = vpack.c.b16 %v2177, %v2177
        %v2194 = vpack.c.b16 %v2178, %v2178
        %v2195 = vpack.c.b16 %v2179, %v2179
        %v2196 = vpack.c.b16 %v2180, %v2180
        %v2197 = vpack.c.b16 %v2181, %v2181
        %v2198 = vpack.c.b16 %v2182, %v2182
        %v2199 = vpack.c.b16 %v2183, %v2183
        %v2200 = vpack.c.b16 %v2184, %v2184
        %v2201 = vpack.c.b16 %v2185, %v2185
        %v2202 = vpack.c.b16 %v2186, %v2186
        %v2203 = vpack.c.b16 %v2187, %v2187
        %v2204 = vpack.c.b16 %v2188, %v2188
        %v2205 = vpack.c.b16 %v2189, %v2189
        %2222 = vst [vmem:[#allocation4] sm:$0xf] %v2190
        %2223 = vst [vmem:[#allocation4 + $0x8] sm:$0xf] %v2191
        %2224 = vst [vmem:[#allocation4 + $0x10] sm:$0xf] %v2192
        %2225 = vst [vmem:[#allocation4 + $0x18] sm:$0xf] %v2193
        %2226 = vst [vmem:[#allocation4 + $0x20] sm:$0xf] %v2194
        %2227 = vst [vmem:[#allocation4 + $0x28] sm:$0xf] %v2195
        %2228 = vst [vmem:[#allocation4 + $0x30] sm:$0xf] %v2196
        %2229 = vst [vmem:[#allocation4 + $0x38] sm:$0xf] %v2197
        %2230 = vst [vmem:[#allocation4 + $0x40] sm:$0xf] %v2198
        %2231 = vst [vmem:[#allocation4 + $0x48] sm:$0xf] %v2199
        %2232 = vst [vmem:[#allocation4 + $0x50] sm:$0xf] %v2200
        %2233 = vst [vmem:[#allocation4 + $0x58] sm:$0xf] %v2201
        %2234 = vst [vmem:[#allocation4 + $0x60] sm:$0xf] %v2202
        %2235 = vst [vmem:[#allocation4 + $0x68] sm:$0xf] %v2203
        %2236 = vst [vmem:[#allocation4 + $0x70] sm:$0xf] %v2204
        %2237 = vst [vmem:[#allocation4 + $0x78] sm:$0xf] %v2205
        %v2238 = vld [vmem:[#allocation2 + $0x4] sm:$0xf]
        %v2239 = vld [vmem:[#allocation2 + $0xc] sm:$0xf]
        %v2240 = vld [vmem:[#allocation2 + $0x14] sm:$0xf]
        %v2241 = vld [vmem:[#allocation2 + $0x1c] sm:$0xf]
        %v2242 = vld [vmem:[#allocation2 + $0x24] sm:$0xf]
        %v2243 = vld [vmem:[#allocation2 + $0x2c] sm:$0xf]
        %v2244 = vld [vmem:[#allocation2 + $0x34] sm:$0xf]
        %v2245 = vld [vmem:[#allocation2 + $0x3c] sm:$0xf]
        %v2246 = vld [vmem:[#allocation2 + $0x44] sm:$0xf]
        %v2247 = vld [vmem:[#allocation2 + $0x4c] sm:$0xf]
        %v2248 = vld [vmem:[#allocation2 + $0x54] sm:$0xf]
        %v2249 = vld [vmem:[#allocation2 + $0x5c] sm:$0xf]
        %v2250 = vld [vmem:[#allocation2 + $0x64] sm:$0xf]
        %v2251 = vld [vmem:[#allocation2 + $0x6c] sm:$0xf]
        %v2252 = vld [vmem:[#allocation2 + $0x74] sm:$0xf]
        %v2253 = vld [vmem:[#allocation2 + $0x7c] sm:$0xf]
        %v2254 = vld [vmem:[#allocation3 + $0x4] sm:$0xf]
        %v2255 = vld [vmem:[#allocation3 + $0xc] sm:$0xf]
        %v2256 = vld [vmem:[#allocation3 + $0x14] sm:$0xf]
        %v2257 = vld [vmem:[#allocation3 + $0x1c] sm:$0xf]
        %v2258 = vld [vmem:[#allocation3 + $0x24] sm:$0xf]
        %v2259 = vld [vmem:[#allocation3 + $0x2c] sm:$0xf]
        %v2260 = vld [vmem:[#allocation3 + $0x34] sm:$0xf]
        %v2261 = vld [vmem:[#allocation3 + $0x3c] sm:$0xf]
        %v2262 = vld [vmem:[#allocation3 + $0x44] sm:$0xf]
        %v2263 = vld [vmem:[#allocation3 + $0x4c] sm:$0xf]
        %v2264 = vld [vmem:[#allocation3 + $0x54] sm:$0xf]
        %v2265 = vld [vmem:[#allocation3 + $0x5c] sm:$0xf]
        %v2266 = vld [vmem:[#allocation3 + $0x64] sm:$0xf]
        %v2267 = vld [vmem:[#allocation3 + $0x6c] sm:$0xf]
        %v2268 = vld [vmem:[#allocation3 + $0x74] sm:$0xf]
        %v2269 = vld [vmem:[#allocation3 + $0x7c] sm:$0xf]
        %v2286 = vunpack.c.l.b16 %v2238
        %v2287 = vunpack.c.l.b16 %v2239
        %v2288 = vunpack.c.l.b16 %v2240
        %v2289 = vunpack.c.l.b16 %v2241
        %v2290 = vunpack.c.l.b16 %v2242
        %v2291 = vunpack.c.l.b16 %v2243
        %v2292 = vunpack.c.l.b16 %v2244
        %v2293 = vunpack.c.l.b16 %v2245
        %v2294 = vunpack.c.l.b16 %v2246
        %v2295 = vunpack.c.l.b16 %v2247
        %v2296 = vunpack.c.l.b16 %v2248
        %v2297 = vunpack.c.l.b16 %v2249
        %v2298 = vunpack.c.l.b16 %v2250
        %v2299 = vunpack.c.l.b16 %v2251
        %v2300 = vunpack.c.l.b16 %v2252
        %v2301 = vunpack.c.l.b16 %v2253
        %v2302 = vpack.c.b16 %v2287, %v2286
        %v2303 = vpack.c.b16 %v2289, %v2288
        %v2304 = vpack.c.b16 %v2291, %v2290
        %v2305 = vpack.c.b16 %v2293, %v2292
        %v2306 = vpack.c.b16 %v2295, %v2294
        %v2307 = vpack.c.b16 %v2297, %v2296
        %v2308 = vpack.c.b16 %v2299, %v2298
        %v2309 = vpack.c.b16 %v2301, %v2300
        %2318 = vmatprep.subr.bf16.mxu0 0
        %2319 = vmatpush1.bf16.xpose.msra.mxu0 %v2309
        %2320 = vmatprep.subr.bf16.mxu0 0
        %2321 = vmatpush1.bf16.xpose.msra.mxu0 %v2308
        %2322 = vmatprep.subr.bf16.mxu0 0
        %2323 = vmatpush1.bf16.xpose.msra.mxu0 %v2307
        %2324 = vmatprep.subr.bf16.mxu0 0
        %2325 = vmatpush1.bf16.xpose.msra.mxu0 %v2306
        %2326 = vmatprep.subr.bf16.mxu0 0
        %2327 = vmatpush1.bf16.xpose.msra.mxu0 %v2305
        %2328 = vmatprep.subr.bf16.mxu0 0
        %2329 = vmatpush1.bf16.xpose.msra.mxu0 %v2304
        %2330 = vmatprep.subr.bf16.mxu0 0
        %2331 = vmatpush1.bf16.xpose.msra.mxu0 %v2303
        %2332 = vmatprep.subr.bf16.mxu0 0
        %2333 = vmatpush1.bf16.xpose.msra.mxu0 %v2302
        %2334 = vmatprep.subr.bf16.mxu0 0
        %2335 = vmatpush2.bf16.xpose.msra.mxu0 0
        %2336 = vmatprep.subr.bf16.mxu0 0
        %2337 = vmatpush2.bf16.xpose.msra.mxu0 0
        %2338 = vmatprep.subr.bf16.mxu0 0
        %2339 = vmatpush2.bf16.xpose.msra.mxu0 0
        %2340 = vmatprep.subr.bf16.mxu0 0
        %2341 = vmatpush2.bf16.xpose.msra.mxu0 0
        %2342 = vmatprep.subr.bf16.mxu0 0
        %2343 = vmatpush2.bf16.xpose.msra.mxu0 0
        %2344 = vmatprep.subr.bf16.mxu0 0
        %2345 = vmatpush2.bf16.xpose.msra.mxu0 0
        %2346 = vmatprep.subr.bf16.mxu0 0
        %2347 = vmatpush2.bf16.xpose.msra.mxu0 0
        %2348 = vmatprep.subr.bf16.mxu0 0
        %2349 = vmatpush2.bf16.xpose.msra.mxu0 0
        %2350 = vmatprep.mubr.bf16.mxu0 0
        %2351 = vmatmul.mubr.bf16.gmra.mxu0 %v1669
        %v2352 = vpop.f32.mrf.mxu0
        %v2353 = vadd.f32 0.0, %v2352
        %v2354 = vpop.f32.mrf.mxu0
        %v2355 = vpop.f32.mrf.mxu0
        %v2356 = vadd.f32 0.0, %v2355
        %v2357 = vpop.f32.mrf.mxu0
        %2358 = vmatprep.mubr.bf16.mxu0 0
        %2359 = vmatmul.mubr.bf16.gmra.mxu0 %v1671
        %v2360 = vpop.f32.mrf.mxu0
        %v2361 = vadd.f32 0.0, %v2360
        %v2362 = vpop.f32.mrf.mxu0
        %v2363 = vpop.f32.mrf.mxu0
        %v2364 = vadd.f32 0.0, %v2363
        %v2365 = vpop.f32.mrf.mxu0
        %2366 = vmatprep.mubr.bf16.mxu0 0
        %2367 = vmatmul.mubr.bf16.gmra.mxu0 %v1673
        %v2368 = vpop.f32.mrf.mxu0
        %v2369 = vadd.f32 0.0, %v2368
        %v2370 = vpop.f32.mrf.mxu0
        %v2371 = vpop.f32.mrf.mxu0
        %v2372 = vadd.f32 0.0, %v2371
        %v2373 = vpop.f32.mrf.mxu0
        %2374 = vmatprep.mubr.bf16.mxu0 0
        %2375 = vmatmul.mubr.bf16.gmra.mxu0 %v1675
        %v2376 = vpop.f32.mrf.mxu0
        %v2377 = vadd.f32 0.0, %v2376
        %v2378 = vpop.f32.mrf.mxu0
        %v2379 = vpop.f32.mrf.mxu0
        %v2380 = vadd.f32 0.0, %v2379
        %v2381 = vpop.f32.mrf.mxu0
        %2382 = vmatprep.mubr.bf16.mxu0 0
        %2383 = vmatmul.mubr.bf16.gmra.mxu0 %v1677
        %v2384 = vpop.f32.mrf.mxu0
        %v2385 = vadd.f32 0.0, %v2384
        %v2386 = vpop.f32.mrf.mxu0
        %v2387 = vpop.f32.mrf.mxu0
        %v2388 = vadd.f32 0.0, %v2387
        %v2389 = vpop.f32.mrf.mxu0
        %2390 = vmatprep.mubr.bf16.mxu0 0
        %2391 = vmatmul.mubr.bf16.gmra.mxu0 %v1679
        %v2392 = vpop.f32.mrf.mxu0
        %v2393 = vadd.f32 0.0, %v2392
        %v2394 = vpop.f32.mrf.mxu0
        %v2395 = vpop.f32.mrf.mxu0
        %v2396 = vadd.f32 0.0, %v2395
        %v2397 = vpop.f32.mrf.mxu0
        %2398 = vmatprep.mubr.bf16.mxu0 0
        %2399 = vmatmul.mubr.bf16.gmra.mxu0 %v1681
        %v2400 = vpop.f32.mrf.mxu0
        %v2401 = vadd.f32 0.0, %v2400
        %v2402 = vpop.f32.mrf.mxu0
        %v2403 = vpop.f32.mrf.mxu0
        %v2404 = vadd.f32 0.0, %v2403
        %v2405 = vpop.f32.mrf.mxu0
        %2406 = vmatprep.mubr.bf16.mxu0 0
        %2407 = vmatmul.mubr.bf16.gmra.mxu0 %v1683
        %v2408 = vpop.f32.mrf.mxu0
        %v2409 = vadd.f32 0.0, %v2408
        %v2410 = vpop.f32.mrf.mxu0
        %v2411 = vpop.f32.mrf.mxu0
        %v2412 = vadd.f32 0.0, %v2411
        %v2413 = vpop.f32.mrf.mxu0
        %2414 = vdwg.mxu0
        %2415 = vmax.xlane.f32.xlu0 %v2353
        %v2416 = vpop.xlane.xlu0 %2415
        %2417 = vmax.xlane.f32.xlu0 %v2356
        %v2418 = vpop.xlane.xlu0 %2417
        %2419 = vmax.xlane.f32.xlu0 %v2361
        %v2420 = vpop.xlane.xlu0 %2419
        %2421 = vmax.xlane.f32.xlu0 %v2364
        %v2422 = vpop.xlane.xlu0 %2421
        %2423 = vmax.xlane.f32.xlu0 %v2369
        %v2424 = vpop.xlane.xlu0 %2423
        %2425 = vmax.xlane.f32.xlu0 %v2372
        %v2426 = vpop.xlane.xlu0 %2425
        %2427 = vmax.xlane.f32.xlu0 %v2377
        %v2428 = vpop.xlane.xlu0 %2427
        %2429 = vmax.xlane.f32.xlu0 %v2380
        %v2430 = vpop.xlane.xlu0 %2429
        %2431 = vmax.xlane.f32.xlu0 %v2385
        %v2432 = vpop.xlane.xlu0 %2431
        %2433 = vmax.xlane.f32.xlu0 %v2388
        %v2434 = vpop.xlane.xlu0 %2433
        %2435 = vmax.xlane.f32.xlu0 %v2393
        %v2436 = vpop.xlane.xlu0 %2435
        %2437 = vmax.xlane.f32.xlu0 %v2396
        %v2438 = vpop.xlane.xlu0 %2437
        %2439 = vmax.xlane.f32.xlu0 %v2401
        %v2440 = vpop.xlane.xlu0 %2439
        %2441 = vmax.xlane.f32.xlu0 %v2404
        %v2442 = vpop.xlane.xlu0 %2441
        %2443 = vmax.xlane.f32.xlu0 %v2409
        %v2444 = vpop.xlane.xlu0 %2443
        %2445 = vmax.xlane.f32.xlu0 %v2412
        %v2446 = vpop.xlane.xlu0 %2445
        %v2447 = vsub.f32 %v2353, %v2416
        %v2448 = vsub.f32 %v2356, %v2418
        %v2449 = vsub.f32 %v2361, %v2420
        %v2450 = vsub.f32 %v2364, %v2422
        %v2451 = vsub.f32 %v2369, %v2424
        %v2452 = vsub.f32 %v2372, %v2426
        %v2453 = vsub.f32 %v2377, %v2428
        %v2454 = vsub.f32 %v2380, %v2430
        %v2455 = vsub.f32 %v2385, %v2432
        %v2456 = vsub.f32 %v2388, %v2434
        %v2457 = vsub.f32 %v2393, %v2436
        %v2458 = vsub.f32 %v2396, %v2438
        %v2459 = vsub.f32 %v2401, %v2440
        %v2460 = vsub.f32 %v2404, %v2442
        %v2461 = vsub.f32 %v2409, %v2444
        %v2462 = vsub.f32 %v2412, %v2446
        %v2463 = vmul.f32 %v2447, 1.442695
        %v2464 = vpow.pop %v2463
        %v2465 = vmul.f32 %v2448, 1.442695
        %v2466 = vpow.pop %v2465
        %v2467 = vmul.f32 %v2449, 1.442695
        %v2468 = vpow.pop %v2467
        %v2469 = vmul.f32 %v2450, 1.442695
        %v2470 = vpow.pop %v2469
        %v2471 = vmul.f32 %v2451, 1.442695
        %v2472 = vpow.pop %v2471
        %v2473 = vmul.f32 %v2452, 1.442695
        %v2474 = vpow.pop %v2473
        %v2475 = vmul.f32 %v2453, 1.442695
        %v2476 = vpow.pop %v2475
        %v2477 = vmul.f32 %v2454, 1.442695
        %v2478 = vpow.pop %v2477
        %v2479 = vmul.f32 %v2455, 1.442695
        %v2480 = vpow.pop %v2479
        %v2481 = vmul.f32 %v2456, 1.442695
        %v2482 = vpow.pop %v2481
        %v2483 = vmul.f32 %v2457, 1.442695
        %v2484 = vpow.pop %v2483
        %v2485 = vmul.f32 %v2458, 1.442695
        %v2486 = vpow.pop %v2485
        %v2487 = vmul.f32 %v2459, 1.442695
        %v2488 = vpow.pop %v2487
        %v2489 = vmul.f32 %v2460, 1.442695
        %v2490 = vpow.pop %v2489
        %v2491 = vmul.f32 %v2461, 1.442695
        %v2492 = vpow.pop %v2491
        %v2493 = vmul.f32 %v2462, 1.442695
        %v2494 = vpow.pop %v2493
        %2495 = vadd.xlane.f32.xlu0 %v2464
        %v2496 = vpop.xlane.xlu0 %2495
        %2497 = vadd.xlane.f32.xlu0 %v2466
        %v2498 = vpop.xlane.xlu0 %2497
        %2499 = vadd.xlane.f32.xlu0 %v2468
        %v2500 = vpop.xlane.xlu0 %2499
        %2501 = vadd.xlane.f32.xlu0 %v2470
        %v2502 = vpop.xlane.xlu0 %2501
        %2503 = vadd.xlane.f32.xlu0 %v2472
        %v2504 = vpop.xlane.xlu0 %2503
        %2505 = vadd.xlane.f32.xlu0 %v2474
        %v2506 = vpop.xlane.xlu0 %2505
        %2507 = vadd.xlane.f32.xlu0 %v2476
        %v2508 = vpop.xlane.xlu0 %2507
        %2509 = vadd.xlane.f32.xlu0 %v2478
        %v2510 = vpop.xlane.xlu0 %2509
        %2511 = vadd.xlane.f32.xlu0 %v2480
        %v2512 = vpop.xlane.xlu0 %2511
        %2513 = vadd.xlane.f32.xlu0 %v2482
        %v2514 = vpop.xlane.xlu0 %2513
        %2515 = vadd.xlane.f32.xlu0 %v2484
        %v2516 = vpop.xlane.xlu0 %2515
        %2517 = vadd.xlane.f32.xlu0 %v2486
        %v2518 = vpop.xlane.xlu0 %2517
        %2519 = vadd.xlane.f32.xlu0 %v2488
        %v2520 = vpop.xlane.xlu0 %2519
        %2521 = vadd.xlane.f32.xlu0 %v2490
        %v2522 = vpop.xlane.xlu0 %2521
        %2523 = vadd.xlane.f32.xlu0 %v2492
        %v2524 = vpop.xlane.xlu0 %2523
        %2525 = vadd.xlane.f32.xlu0 %v2494
        %v2526 = vpop.xlane.xlu0 %2525
        %v2527 = vpack.c.bf16 %v2466, %v2464
        %v2528 = vpack.c.bf16 %v2470, %v2468
        %v2529 = vpack.c.bf16 %v2474, %v2472
        %v2530 = vpack.c.bf16 %v2478, %v2476
        %v2531 = vpack.c.bf16 %v2482, %v2480
        %v2532 = vpack.c.bf16 %v2486, %v2484
        %v2533 = vpack.c.bf16 %v2490, %v2488
        %v2534 = vpack.c.bf16 %v2494, %v2492
        %v2551 = vunpack.c.l.b16 %v2254
        %v2552 = vunpack.c.l.b16 %v2255
        %v2553 = vunpack.c.l.b16 %v2256
        %v2554 = vunpack.c.l.b16 %v2257
        %v2555 = vunpack.c.l.b16 %v2258
        %v2556 = vunpack.c.l.b16 %v2259
        %v2557 = vunpack.c.l.b16 %v2260
        %v2558 = vunpack.c.l.b16 %v2261
        %v2559 = vunpack.c.l.b16 %v2262
        %v2560 = vunpack.c.l.b16 %v2263
        %v2561 = vunpack.c.l.b16 %v2264
        %v2562 = vunpack.c.l.b16 %v2265
        %v2563 = vunpack.c.l.b16 %v2266
        %v2564 = vunpack.c.l.b16 %v2267
        %v2565 = vunpack.c.l.b16 %v2268
        %v2566 = vunpack.c.l.b16 %v2269
        %v2567 = vpack.c.b16 %v2552, %v2551
        %v2568 = vpack.c.b16 %v2554, %v2553
        %v2569 = vpack.c.b16 %v2556, %v2555
        %v2570 = vpack.c.b16 %v2558, %v2557
        %v2571 = vpack.c.b16 %v2560, %v2559
        %v2572 = vpack.c.b16 %v2562, %v2561
        %v2573 = vpack.c.b16 %v2564, %v2563
        %v2574 = vpack.c.b16 %v2566, %v2565
        %2583 = vmatprep.subr.bf16.mxu0 0
        %2584 = vmatpush1.bf16.msra.mxu0 %v2574
        %2585 = vmatprep.subr.bf16.mxu0 0
        %2586 = vmatpush1.bf16.msra.mxu0 %v2573
        %2587 = vmatprep.subr.bf16.mxu0 0
        %2588 = vmatpush1.bf16.msra.mxu0 %v2572
        %2589 = vmatprep.subr.bf16.mxu0 0
        %2590 = vmatpush1.bf16.msra.mxu0 %v2571
        %2591 = vmatprep.subr.bf16.mxu0 0
        %2592 = vmatpush1.bf16.msra.mxu0 %v2570
        %2593 = vmatprep.subr.bf16.mxu0 0
        %2594 = vmatpush1.bf16.msra.mxu0 %v2569
        %2595 = vmatprep.subr.bf16.mxu0 0
        %2596 = vmatpush1.bf16.msra.mxu0 %v2568
        %2597 = vmatprep.subr.bf16.mxu0 0
        %2598 = vmatpush1.bf16.msra.mxu0 %v2567
        %2599 = vmatprep.subr.bf16.mxu0 0
        %2600 = vmatpush2.bf16.msra.mxu0 0
        %2601 = vmatprep.subr.bf16.mxu0 0
        %2602 = vmatpush2.bf16.msra.mxu0 0
        %2603 = vmatprep.subr.bf16.mxu0 0
        %2604 = vmatpush2.bf16.msra.mxu0 0
        %2605 = vmatprep.subr.bf16.mxu0 0
        %2606 = vmatpush2.bf16.msra.mxu0 0
        %2607 = vmatprep.subr.bf16.mxu0 0
        %2608 = vmatpush2.bf16.msra.mxu0 0
        %2609 = vmatprep.subr.bf16.mxu0 0
        %2610 = vmatpush2.bf16.msra.mxu0 0
        %2611 = vmatprep.subr.bf16.mxu0 0
        %2612 = vmatpush2.bf16.msra.mxu0 0
        %2613 = vmatprep.subr.bf16.mxu0 0
        %2614 = vmatpush2.bf16.msra.mxu0 0
        %2615 = vmatprep.mubr.bf16.mxu0 0
        %2616 = vmatmul.mubr.bf16.gmra.mxu0 %v2527
        %v2617 = vpop.f32.mrf.mxu0
        %v2618 = vadd.f32 0.0, %v2617
        %v2619 = vpop.f32.mrf.mxu0
        %v2620 = vpop.f32.mrf.mxu0
        %v2621 = vadd.f32 0.0, %v2620
        %v2622 = vpop.f32.mrf.mxu0
        %2623 = vmatprep.mubr.bf16.mxu0 0
        %2624 = vmatmul.mubr.bf16.gmra.mxu0 %v2528
        %v2625 = vpop.f32.mrf.mxu0
        %v2626 = vadd.f32 0.0, %v2625
        %v2627 = vpop.f32.mrf.mxu0
        %v2628 = vpop.f32.mrf.mxu0
        %v2629 = vadd.f32 0.0, %v2628
        %v2630 = vpop.f32.mrf.mxu0
        %2631 = vmatprep.mubr.bf16.mxu0 0
        %2632 = vmatmul.mubr.bf16.gmra.mxu0 %v2529
        %v2633 = vpop.f32.mrf.mxu0
        %v2634 = vadd.f32 0.0, %v2633
        %v2635 = vpop.f32.mrf.mxu0
        %v2636 = vpop.f32.mrf.mxu0
        %v2637 = vadd.f32 0.0, %v2636
        %v2638 = vpop.f32.mrf.mxu0
        %2639 = vmatprep.mubr.bf16.mxu0 0
        %2640 = vmatmul.mubr.bf16.gmra.mxu0 %v2530
        %v2641 = vpop.f32.mrf.mxu0
        %v2642 = vadd.f32 0.0, %v2641
        %v2643 = vpop.f32.mrf.mxu0
        %v2644 = vpop.f32.mrf.mxu0
        %v2645 = vadd.f32 0.0, %v2644
        %v2646 = vpop.f32.mrf.mxu0
        %2647 = vmatprep.mubr.bf16.mxu0 0
        %2648 = vmatmul.mubr.bf16.gmra.mxu0 %v2531
        %v2649 = vpop.f32.mrf.mxu0
        %v2650 = vadd.f32 0.0, %v2649
        %v2651 = vpop.f32.mrf.mxu0
        %v2652 = vpop.f32.mrf.mxu0
        %v2653 = vadd.f32 0.0, %v2652
        %v2654 = vpop.f32.mrf.mxu0
        %2655 = vmatprep.mubr.bf16.mxu0 0
        %2656 = vmatmul.mubr.bf16.gmra.mxu0 %v2532
        %v2657 = vpop.f32.mrf.mxu0
        %v2658 = vadd.f32 0.0, %v2657
        %v2659 = vpop.f32.mrf.mxu0
        %v2660 = vpop.f32.mrf.mxu0
        %v2661 = vadd.f32 0.0, %v2660
        %v2662 = vpop.f32.mrf.mxu0
        %2663 = vmatprep.mubr.bf16.mxu0 0
        %2664 = vmatmul.mubr.bf16.gmra.mxu0 %v2533
        %v2665 = vpop.f32.mrf.mxu0
        %v2666 = vadd.f32 0.0, %v2665
        %v2667 = vpop.f32.mrf.mxu0
        %v2668 = vpop.f32.mrf.mxu0
        %v2669 = vadd.f32 0.0, %v2668
        %v2670 = vpop.f32.mrf.mxu0
        %2671 = vmatprep.mubr.bf16.mxu0 0
        %2672 = vmatmul.mubr.bf16.gmra.mxu0 %v2534
        %v2673 = vpop.f32.mrf.mxu0
        %v2674 = vadd.f32 0.0, %v2673
        %v2675 = vpop.f32.mrf.mxu0
        %v2676 = vpop.f32.mrf.mxu0
        %v2677 = vadd.f32 0.0, %v2676
        %v2678 = vpop.f32.mrf.mxu0
        %2679 = vdwg.mxu0
        %v2680 = vrcp.pop %v2496
        %v2681 = vrcp.pop %v2498
        %v2682 = vrcp.pop %v2500
        %v2683 = vrcp.pop %v2502
        %v2684 = vrcp.pop %v2504
        %v2685 = vrcp.pop %v2506
        %v2686 = vrcp.pop %v2508
        %v2687 = vrcp.pop %v2510
        %v2688 = vrcp.pop %v2512
        %v2689 = vrcp.pop %v2514
        %v2690 = vrcp.pop %v2516
        %v2691 = vrcp.pop %v2518
        %v2692 = vrcp.pop %v2520
        %v2693 = vrcp.pop %v2522
        %v2694 = vrcp.pop %v2524
        %v2695 = vrcp.pop %v2526
        %v2696 = vmul.f32 %v2618, %v2680
        %v2697 = vmul.f32 %v2621, %v2681
        %v2698 = vmul.f32 %v2626, %v2682
        %v2699 = vmul.f32 %v2629, %v2683
        %v2700 = vmul.f32 %v2634, %v2684
        %v2701 = vmul.f32 %v2637, %v2685
        %v2702 = vmul.f32 %v2642, %v2686
        %v2703 = vmul.f32 %v2645, %v2687
        %v2704 = vmul.f32 %v2650, %v2688
        %v2705 = vmul.f32 %v2653, %v2689
        %v2706 = vmul.f32 %v2658, %v2690
        %v2707 = vmul.f32 %v2661, %v2691
        %v2708 = vmul.f32 %v2666, %v2692
        %v2709 = vmul.f32 %v2669, %v2693
        %v2710 = vmul.f32 %v2674, %v2694
        %v2711 = vmul.f32 %v2677, %v2695
        %v2712 = vpack.c.bf16 %v2697, %v2696
        %v2713 = vpack.c.bf16 %v2699, %v2698
        %v2714 = vpack.c.bf16 %v2701, %v2700
        %v2715 = vpack.c.bf16 %v2703, %v2702
        %v2716 = vpack.c.bf16 %v2705, %v2704
        %v2717 = vpack.c.bf16 %v2707, %v2706
        %v2718 = vpack.c.bf16 %v2709, %v2708
        %v2719 = vpack.c.bf16 %v2711, %v2710
        %v2728 = vunpack.c.l.b16 %v2712
        %v2729 = vunpack.c.h.b16 %v2712
        %v2730 = vunpack.c.l.b16 %v2713
        %v2731 = vunpack.c.h.b16 %v2713
        %v2732 = vunpack.c.l.b16 %v2714
        %v2733 = vunpack.c.h.b16 %v2714
        %v2734 = vunpack.c.l.b16 %v2715
        %v2735 = vunpack.c.h.b16 %v2715
        %v2736 = vunpack.c.l.b16 %v2716
        %v2737 = vunpack.c.h.b16 %v2716
        %v2738 = vunpack.c.l.b16 %v2717
        %v2739 = vunpack.c.h.b16 %v2717
        %v2740 = vunpack.c.l.b16 %v2718
        %v2741 = vunpack.c.h.b16 %v2718
        %v2742 = vunpack.c.l.b16 %v2719
        %v2743 = vunpack.c.h.b16 %v2719
        %v2744 = vpack.c.b16 %v2728, %v2728
        %v2745 = vpack.c.b16 %v2729, %v2729
        %v2746 = vpack.c.b16 %v2730, %v2730
        %v2747 = vpack.c.b16 %v2731, %v2731
        %v2748 = vpack.c.b16 %v2732, %v2732
        %v2749 = vpack.c.b16 %v2733, %v2733
        %v2750 = vpack.c.b16 %v2734, %v2734
        %v2751 = vpack.c.b16 %v2735, %v2735
        %v2752 = vpack.c.b16 %v2736, %v2736
        %v2753 = vpack.c.b16 %v2737, %v2737
        %v2754 = vpack.c.b16 %v2738, %v2738
        %v2755 = vpack.c.b16 %v2739, %v2739
        %v2756 = vpack.c.b16 %v2740, %v2740
        %v2757 = vpack.c.b16 %v2741, %v2741
        %v2758 = vpack.c.b16 %v2742, %v2742
        %v2759 = vpack.c.b16 %v2743, %v2743
        %2776 = vst [vmem:[#allocation4 + $0x4] sm:$0xf] %v2744
        %2777 = vst [vmem:[#allocation4 + $0xc] sm:$0xf] %v2745
        %2778 = vst [vmem:[#allocation4 + $0x14] sm:$0xf] %v2746
        %2779 = vst [vmem:[#allocation4 + $0x1c] sm:$0xf] %v2747
        %2780 = vst [vmem:[#allocation4 + $0x24] sm:$0xf] %v2748
        %2781 = vst [vmem:[#allocation4 + $0x2c] sm:$0xf] %v2749
        %2782 = vst [vmem:[#allocation4 + $0x34] sm:$0xf] %v2750
        %2783 = vst [vmem:[#allocation4 + $0x3c] sm:$0xf] %v2751
        %2784 = vst [vmem:[#allocation4 + $0x44] sm:$0xf] %v2752
        %2785 = vst [vmem:[#allocation4 + $0x4c] sm:$0xf] %v2753
        %2786 = vst [vmem:[#allocation4 + $0x54] sm:$0xf] %v2754
        %2787 = vst [vmem:[#allocation4 + $0x5c] sm:$0xf] %v2755
        %2788 = vst [vmem:[#allocation4 + $0x64] sm:$0xf] %v2756
        %2789 = vst [vmem:[#allocation4 + $0x6c] sm:$0xf] %v2757
        %2790 = vst [vmem:[#allocation4 + $0x74] sm:$0xf] %v2758
        %2791 = vst [vmem:[#allocation4 + $0x7c] sm:$0xf] %v2759
        %v2792 = vld [vmem:[#allocation4] sm:$0xff]
        %v2793 = vld [vmem:[#allocation4 + $0x8] sm:$0xff]
        %v2794 = vld [vmem:[#allocation4 + $0x10] sm:$0xff]
        %v2795 = vld [vmem:[#allocation4 + $0x18] sm:$0xff]
        %v2796 = vld [vmem:[#allocation4 + $0x20] sm:$0xff]
        %v2797 = vld [vmem:[#allocation4 + $0x28] sm:$0xff]
        %v2798 = vld [vmem:[#allocation4 + $0x30] sm:$0xff]
        %v2799 = vld [vmem:[#allocation4 + $0x38] sm:$0xff]
        %v2800 = vld [vmem:[#allocation4 + $0x40] sm:$0xff]
        %v2801 = vld [vmem:[#allocation4 + $0x48] sm:$0xff]
        %v2802 = vld [vmem:[#allocation4 + $0x50] sm:$0xff]
        %v2803 = vld [vmem:[#allocation4 + $0x58] sm:$0xff]
        %v2804 = vld [vmem:[#allocation4 + $0x60] sm:$0xff]
        %v2805 = vld [vmem:[#allocation4 + $0x68] sm:$0xff]
        %v2806 = vld [vmem:[#allocation4 + $0x70] sm:$0xff]
        %v2807 = vld [vmem:[#allocation4 + $0x78] sm:$0xff]
        %v2808 = vld [vmem:[#allocation11] sm:$0xff]
        %v2809 = vld [vmem:[#allocation11 + $0x8] sm:$0xff]
        %v2810 = vld [vmem:[#allocation11 + $0x10] sm:$0xff]
        %v2811 = vld [vmem:[#allocation11 + $0x18] sm:$0xff]
        %v2812 = vld [vmem:[#allocation11 + $0x20] sm:$0xff]
        %v2813 = vld [vmem:[#allocation11 + $0x28] sm:$0xff]
        %v2814 = vld [vmem:[#allocation11 + $0x30] sm:$0xff]
        %v2815 = vld [vmem:[#allocation11 + $0x38] sm:$0xff]
        %v2816 = vld [vmem:[#allocation11 + $0x40] sm:$0xff]
        %v2817 = vld [vmem:[#allocation11 + $0x48] sm:$0xff]
        %v2818 = vld [vmem:[#allocation11 + $0x50] sm:$0xff]
        %v2819 = vld [vmem:[#allocation11 + $0x58] sm:$0xff]
        %v2820 = vld [vmem:[#allocation11 + $0x60] sm:$0xff]
        %v2821 = vld [vmem:[#allocation11 + $0x68] sm:$0xff]
        %v2822 = vld [vmem:[#allocation11 + $0x70] sm:$0xff]
        %v2823 = vld [vmem:[#allocation11 + $0x78] sm:$0xff]
        %v2824 = vld [vmem:[#allocation11 + $0x80] sm:$0xff]
        %v2825 = vld [vmem:[#allocation11 + $0x88] sm:$0xff]
        %v2826 = vld [vmem:[#allocation11 + $0x90] sm:$0xff]
        %v2827 = vld [vmem:[#allocation11 + $0x98] sm:$0xff]
        %v2828 = vld [vmem:[#allocation11 + $0xa0] sm:$0xff]
        %v2829 = vld [vmem:[#allocation11 + $0xa8] sm:$0xff]
        %v2830 = vld [vmem:[#allocation11 + $0xb0] sm:$0xff]
        %v2831 = vld [vmem:[#allocation11 + $0xb8] sm:$0xff]
        %v2832 = vld [vmem:[#allocation11 + $0xc0] sm:$0xff]
        %v2833 = vld [vmem:[#allocation11 + $0xc8] sm:$0xff]
        %v2834 = vld [vmem:[#allocation11 + $0xd0] sm:$0xff]
        %v2835 = vld [vmem:[#allocation11 + $0xd8] sm:$0xff]
        %v2836 = vld [vmem:[#allocation11 + $0xe0] sm:$0xff]
        %v2837 = vld [vmem:[#allocation11 + $0xe8] sm:$0xff]
        %v2838 = vld [vmem:[#allocation11 + $0xf0] sm:$0xff]
        %v2839 = vld [vmem:[#allocation11 + $0xf8] sm:$0xff]
        %v2840 = vld [vmem:[%s6] sm:$0x3]
        %v2842 = vlaneseq
        %v2843 = vshrl.u32 %v2842, 7
        %v2844 = vsub.s32 0, %v2843
        %v2845 = vrot.slane %v2840, %v2844
        %v2846 = vlaneseq
        %v2847 = vshrl.u32 %v2846, 7
        %v2848 = vsub.s32 1, %v2847
        %v2849 = vrot.slane %v2840, %v2848
        %v2868 = vunpack.c.l.b16 %v2792
        %v2869 = vunpack.c.h.b16 %v2792
        %v2870 = vunpack.c.l.b16 %v2793
        %v2871 = vunpack.c.h.b16 %v2793
        %v2872 = vunpack.c.l.b16 %v2794
        %v2873 = vunpack.c.h.b16 %v2794
        %v2874 = vunpack.c.l.b16 %v2795
        %v2875 = vunpack.c.h.b16 %v2795
        %v2876 = vunpack.c.l.b16 %v2796
        %v2877 = vunpack.c.h.b16 %v2796
        %v2878 = vunpack.c.l.b16 %v2797
        %v2879 = vunpack.c.h.b16 %v2797
        %v2880 = vunpack.c.l.b16 %v2798
        %v2881 = vunpack.c.h.b16 %v2798
        %v2882 = vunpack.c.l.b16 %v2799
        %v2883 = vunpack.c.h.b16 %v2799
        %v2884 = vunpack.c.l.b16 %v2800
        %v2885 = vunpack.c.h.b16 %v2800
        %v2886 = vunpack.c.l.b16 %v2801
        %v2887 = vunpack.c.h.b16 %v2801
        %v2888 = vunpack.c.l.b16 %v2802
        %v2889 = vunpack.c.h.b16 %v2802
        %v2890 = vunpack.c.l.b16 %v2803
        %v2891 = vunpack.c.h.b16 %v2803
        %v2892 = vunpack.c.l.b16 %v2804
        %v2893 = vunpack.c.h.b16 %v2804
        %v2894 = vunpack.c.l.b16 %v2805
        %v2895 = vunpack.c.h.b16 %v2805
        %v2896 = vunpack.c.l.b16 %v2806
        %v2897 = vunpack.c.h.b16 %v2806
        %v2898 = vunpack.c.l.b16 %v2807
        %v2899 = vunpack.c.h.b16 %v2807
        %v2900 = vpack.c.b16 %v2870, %v2868
        %v2901 = vpack.c.b16 %v2871, %v2869
        %v2902 = vpack.c.b16 %v2874, %v2872
        %v2903 = vpack.c.b16 %v2875, %v2873
        %v2904 = vpack.c.b16 %v2878, %v2876
        %v2905 = vpack.c.b16 %v2879, %v2877
        %v2906 = vpack.c.b16 %v2882, %v2880
        %v2907 = vpack.c.b16 %v2883, %v2881
        %v2908 = vpack.c.b16 %v2886, %v2884
        %v2909 = vpack.c.b16 %v2887, %v2885
        %v2910 = vpack.c.b16 %v2890, %v2888
        %v2911 = vpack.c.b16 %v2891, %v2889
        %v2912 = vpack.c.b16 %v2894, %v2892
        %v2913 = vpack.c.b16 %v2895, %v2893
        %v2914 = vpack.c.b16 %v2898, %v2896
        %v2915 = vpack.c.b16 %v2899, %v2897
        %v2964 = vunpack.c.l.b16 %v2808
        %v2965 = vunpack.c.h.b16 %v2808
        %v2966 = vunpack.c.l.b16 %v2809
        %v2967 = vunpack.c.h.b16 %v2809
        %v2968 = vunpack.c.l.b16 %v2810
        %v2969 = vunpack.c.h.b16 %v2810
        %v2970 = vunpack.c.l.b16 %v2811
        %v2971 = vunpack.c.h.b16 %v2811
        %v2972 = vunpack.c.l.b16 %v2812
        %v2973 = vunpack.c.h.b16 %v2812
        %v2974 = vunpack.c.l.b16 %v2813
        %v2975 = vunpack.c.h.b16 %v2813
        %v2976 = vunpack.c.l.b16 %v2814
        %v2977 = vunpack.c.h.b16 %v2814
        %v2978 = vunpack.c.l.b16 %v2815
        %v2979 = vunpack.c.h.b16 %v2815
        %v2980 = vunpack.c.l.b16 %v2816
        %v2981 = vunpack.c.h.b16 %v2816
        %v2982 = vunpack.c.l.b16 %v2817
        %v2983 = vunpack.c.h.b16 %v2817
        %v2984 = vunpack.c.l.b16 %v2818
        %v2985 = vunpack.c.h.b16 %v2818
        %v2986 = vunpack.c.l.b16 %v2819
        %v2987 = vunpack.c.h.b16 %v2819
        %v2988 = vunpack.c.l.b16 %v2820
        %v2989 = vunpack.c.h.b16 %v2820
        %v2990 = vunpack.c.l.b16 %v2821
        %v2991 = vunpack.c.h.b16 %v2821
        %v2992 = vunpack.c.l.b16 %v2822
        %v2993 = vunpack.c.h.b16 %v2822
        %v2994 = vunpack.c.l.b16 %v2823
        %v2995 = vunpack.c.h.b16 %v2823
        %v2996 = vunpack.c.l.b16 %v2824
        %v2997 = vunpack.c.h.b16 %v2824
        %v2998 = vunpack.c.l.b16 %v2825
        %v2999 = vunpack.c.h.b16 %v2825
        %v3000 = vunpack.c.l.b16 %v2826
        %v3001 = vunpack.c.h.b16 %v2826
        %v3002 = vunpack.c.l.b16 %v2827
        %v3003 = vunpack.c.h.b16 %v2827
        %v3004 = vunpack.c.l.b16 %v2828
        %v3005 = vunpack.c.h.b16 %v2828
        %v3006 = vunpack.c.l.b16 %v2829
        %v3007 = vunpack.c.h.b16 %v2829
        %v3008 = vunpack.c.l.b16 %v2830
        %v3009 = vunpack.c.h.b16 %v2830
        %v3010 = vunpack.c.l.b16 %v2831
        %v3011 = vunpack.c.h.b16 %v2831
        %v3012 = vunpack.c.l.b16 %v2832
        %v3013 = vunpack.c.h.b16 %v2832
        %v3014 = vunpack.c.l.b16 %v2833
        %v3015 = vunpack.c.h.b16 %v2833
        %v3016 = vunpack.c.l.b16 %v2834
        %v3017 = vunpack.c.h.b16 %v2834
        %v3018 = vunpack.c.l.b16 %v2835
        %v3019 = vunpack.c.h.b16 %v2835
        %v3020 = vunpack.c.l.b16 %v2836
        %v3021 = vunpack.c.h.b16 %v2836
        %v3022 = vunpack.c.l.b16 %v2837
        %v3023 = vunpack.c.h.b16 %v2837
        %v3024 = vunpack.c.l.b16 %v2838
        %v3025 = vunpack.c.h.b16 %v2838
        %v3026 = vunpack.c.l.b16 %v2839
        %v3027 = vunpack.c.h.b16 %v2839
        %v3028 = vpack.c.b16 %v2966, %v2964
        %v3029 = vpack.c.b16 %v2967, %v2965
        %v3030 = vpack.c.b16 %v2970, %v2968
        %v3031 = vpack.c.b16 %v2971, %v2969
        %v3032 = vpack.c.b16 %v2974, %v2972
        %v3033 = vpack.c.b16 %v2975, %v2973
        %v3034 = vpack.c.b16 %v2978, %v2976
        %v3035 = vpack.c.b16 %v2979, %v2977
        %v3036 = vpack.c.b16 %v2982, %v2980
        %v3037 = vpack.c.b16 %v2983, %v2981
        %v3038 = vpack.c.b16 %v2986, %v2984
        %v3039 = vpack.c.b16 %v2987, %v2985
        %v3040 = vpack.c.b16 %v2990, %v2988
        %v3041 = vpack.c.b16 %v2991, %v2989
        %v3042 = vpack.c.b16 %v2994, %v2992
        %v3043 = vpack.c.b16 %v2995, %v2993
        %v3044 = vpack.c.b16 %v2998, %v2996
        %v3045 = vpack.c.b16 %v2999, %v2997
        %v3046 = vpack.c.b16 %v3002, %v3000
        %v3047 = vpack.c.b16 %v3003, %v3001
        %v3048 = vpack.c.b16 %v3006, %v3004
        %v3049 = vpack.c.b16 %v3007, %v3005
        %v3050 = vpack.c.b16 %v3010, %v3008
        %v3051 = vpack.c.b16 %v3011, %v3009
        %v3052 = vpack.c.b16 %v3014, %v3012
        %v3053 = vpack.c.b16 %v3015, %v3013
        %v3054 = vpack.c.b16 %v3018, %v3016
        %v3055 = vpack.c.b16 %v3019, %v3017
        %v3056 = vpack.c.b16 %v3022, %v3020
        %v3057 = vpack.c.b16 %v3023, %v3021
        %v3058 = vpack.c.b16 %v3026, %v3024
        %v3059 = vpack.c.b16 %v3027, %v3025
        %3092 = vmatprep.subr.bf16.mxu0 %v3043
        %3093 = vmatpush1.bf16.msra.mxu0 %v3042
        %3094 = vmatprep.subr.bf16.mxu0 %v3041
        %3095 = vmatpush1.bf16.msra.mxu0 %v3040
        %3096 = vmatprep.subr.bf16.mxu0 %v3039
        %3097 = vmatpush1.bf16.msra.mxu0 %v3038
        %3098 = vmatprep.subr.bf16.mxu0 %v3037
        %3099 = vmatpush1.bf16.msra.mxu0 %v3036
        %3100 = vmatprep.subr.bf16.mxu0 %v3035
        %3101 = vmatpush1.bf16.msra.mxu0 %v3034
        %3102 = vmatprep.subr.bf16.mxu0 %v3033
        %3103 = vmatpush1.bf16.msra.mxu0 %v3032
        %3104 = vmatprep.subr.bf16.mxu0 %v3031
        %3105 = vmatpush1.bf16.msra.mxu0 %v3030
        %3106 = vmatprep.subr.bf16.mxu0 %v3029
        %3107 = vmatpush1.bf16.msra.mxu0 %v3028
        %3108 = vmatprep.subr.bf16.mxu0 %v3059
        %3109 = vmatpush2.bf16.msra.mxu0 %v3058
        %3110 = vmatprep.subr.bf16.mxu0 %v3057
        %3111 = vmatpush2.bf16.msra.mxu0 %v3056
        %3112 = vmatprep.subr.bf16.mxu0 %v3055
        %3113 = vmatpush2.bf16.msra.mxu0 %v3054
        %3114 = vmatprep.subr.bf16.mxu0 %v3053
        %3115 = vmatpush2.bf16.msra.mxu0 %v3052
        %3116 = vmatprep.subr.bf16.mxu0 %v3051
        %3117 = vmatpush2.bf16.msra.mxu0 %v3050
        %3118 = vmatprep.subr.bf16.mxu0 %v3049
        %3119 = vmatpush2.bf16.msra.mxu0 %v3048
        %3120 = vmatprep.subr.bf16.mxu0 %v3047
        %3121 = vmatpush2.bf16.msra.mxu0 %v3046
        %3122 = vmatprep.subr.bf16.mxu0 %v3045
        %3123 = vmatpush2.bf16.msra.mxu0 %v3044
        %3124 = vmatprep.mubr.bf16.mxu0 %v2901
        %3125 = vmatmul.mubr.bf16.gmra.mxu0 %v2900
        %v3126 = vpop.f32.mrf.mxu0
        %v3127 = vadd.f32 %v2845, %v3126
        %v3128 = vpop.f32.mrf.mxu0
        %v3129 = vadd.f32 %v2849, %v3128
        %v3130 = vpop.f32.mrf.mxu0
        %v3131 = vadd.f32 %v2845, %v3130
        %v3132 = vpop.f32.mrf.mxu0
        %v3133 = vadd.f32 %v2849, %v3132
        %3134 = vmatprep.mubr.bf16.mxu0 %v2903
        %3135 = vmatmul.mubr.bf16.gmra.mxu0 %v2902
        %v3136 = vpop.f32.mrf.mxu0
        %v3137 = vadd.f32 %v2845, %v3136
        %v3138 = vpop.f32.mrf.mxu0
        %v3139 = vadd.f32 %v2849, %v3138
        %v3140 = vpop.f32.mrf.mxu0
        %v3141 = vadd.f32 %v2845, %v3140
        %v3142 = vpop.f32.mrf.mxu0
        %v3143 = vadd.f32 %v2849, %v3142
        %3144 = vmatprep.mubr.bf16.mxu0 %v2905
        %3145 = vmatmul.mubr.bf16.gmra.mxu0 %v2904
        %v3146 = vpop.f32.mrf.mxu0
        %v3147 = vadd.f32 %v2845, %v3146
        %v3148 = vpop.f32.mrf.mxu0
        %v3149 = vadd.f32 %v2849, %v3148
        %v3150 = vpop.f32.mrf.mxu0
        %v3151 = vadd.f32 %v2845, %v3150
        %v3152 = vpop.f32.mrf.mxu0
        %v3153 = vadd.f32 %v2849, %v3152
        %3154 = vmatprep.mubr.bf16.mxu0 %v2907
        %3155 = vmatmul.mubr.bf16.gmra.mxu0 %v2906
        %v3156 = vpop.f32.mrf.mxu0
        %v3157 = vadd.f32 %v2845, %v3156
        %v3158 = vpop.f32.mrf.mxu0
        %v3159 = vadd.f32 %v2849, %v3158
        %v3160 = vpop.f32.mrf.mxu0
        %v3161 = vadd.f32 %v2845, %v3160
        %v3162 = vpop.f32.mrf.mxu0
        %v3163 = vadd.f32 %v2849, %v3162
        %3164 = vmatprep.mubr.bf16.mxu0 %v2909
        %3165 = vmatmul.mubr.bf16.gmra.mxu0 %v2908
        %v3166 = vpop.f32.mrf.mxu0
        %v3167 = vadd.f32 %v2845, %v3166
        %v3168 = vpop.f32.mrf.mxu0
        %v3169 = vadd.f32 %v2849, %v3168
        %v3170 = vpop.f32.mrf.mxu0
        %v3171 = vadd.f32 %v2845, %v3170
        %v3172 = vpop.f32.mrf.mxu0
        %v3173 = vadd.f32 %v2849, %v3172
        %3174 = vmatprep.mubr.bf16.mxu0 %v2911
        %3175 = vmatmul.mubr.bf16.gmra.mxu0 %v2910
        %v3176 = vpop.f32.mrf.mxu0
        %v3177 = vadd.f32 %v2845, %v3176
        %v3178 = vpop.f32.mrf.mxu0
        %v3179 = vadd.f32 %v2849, %v3178
        %v3180 = vpop.f32.mrf.mxu0
        %v3181 = vadd.f32 %v2845, %v3180
        %v3182 = vpop.f32.mrf.mxu0
        %v3183 = vadd.f32 %v2849, %v3182
        %3184 = vmatprep.mubr.bf16.mxu0 %v2913
        %3185 = vmatmul.mubr.bf16.gmra.mxu0 %v2912
        %v3186 = vpop.f32.mrf.mxu0
        %v3187 = vadd.f32 %v2845, %v3186
        %v3188 = vpop.f32.mrf.mxu0
        %v3189 = vadd.f32 %v2849, %v3188
        %v3190 = vpop.f32.mrf.mxu0
        %v3191 = vadd.f32 %v2845, %v3190
        %v3192 = vpop.f32.mrf.mxu0
        %v3193 = vadd.f32 %v2849, %v3192
        %3194 = vmatprep.mubr.bf16.mxu0 %v2915
        %3195 = vmatmul.mubr.bf16.gmra.mxu0 %v2914
        %v3196 = vpop.f32.mrf.mxu0
        %v3197 = vadd.f32 %v2845, %v3196
        %v3198 = vpop.f32.mrf.mxu0
        %v3199 = vadd.f32 %v2849, %v3198
        %v3200 = vpop.f32.mrf.mxu0
        %v3201 = vadd.f32 %v2845, %v3200
        %v3202 = vpop.f32.mrf.mxu0
        %v3203 = vadd.f32 %v2849, %v3202
        %3204 = vdwg.mxu0
        %3205 = vst [vmem:[%s354] sm:$0xff] %v3127
        %3206 = vst [vmem:[%s354 + $0x8] sm:$0xff] %v3129
        %3207 = vst [vmem:[%s354 + $0x10] sm:$0xff] %v3131
        %3208 = vst [vmem:[%s354 + $0x18] sm:$0xff] %v3133
        %3209 = vst [vmem:[%s354 + $0x20] sm:$0xff] %v3137
        %3210 = vst [vmem:[%s354 + $0x28] sm:$0xff] %v3139
        %3211 = vst [vmem:[%s354 + $0x30] sm:$0xff] %v3141
        %3212 = vst [vmem:[%s354 + $0x38] sm:$0xff] %v3143
        %3213 = vst [vmem:[%s354 + $0x40] sm:$0xff] %v3147
        %3214 = vst [vmem:[%s354 + $0x48] sm:$0xff] %v3149
        %3215 = vst [vmem:[%s354 + $0x50] sm:$0xff] %v3151
        %3216 = vst [vmem:[%s354 + $0x58] sm:$0xff] %v3153
        %3217 = vst [vmem:[%s354 + $0x60] sm:$0xff] %v3157
        %3218 = vst [vmem:[%s354 + $0x68] sm:$0xff] %v3159
        %3219 = vst [vmem:[%s354 + $0x70] sm:$0xff] %v3161
        %3220 = vst [vmem:[%s354 + $0x78] sm:$0xff] %v3163
        %3221 = vst [vmem:[%s354 + $0x80] sm:$0xff] %v3167
        %3222 = vst [vmem:[%s354 + $0x88] sm:$0xff] %v3169
        %3223 = vst [vmem:[%s354 + $0x90] sm:$0xff] %v3171
        %3224 = vst [vmem:[%s354 + $0x98] sm:$0xff] %v3173
        %3225 = vst [vmem:[%s354 + $0xa0] sm:$0xff] %v3177
        %3226 = vst [vmem:[%s354 + $0xa8] sm:$0xff] %v3179
        %3227 = vst [vmem:[%s354 + $0xb0] sm:$0xff] %v3181
        %3228 = vst [vmem:[%s354 + $0xb8] sm:$0xff] %v3183
        %3229 = vst [vmem:[%s354 + $0xc0] sm:$0xff] %v3187
        %3230 = vst [vmem:[%s354 + $0xc8] sm:$0xff] %v3189
        %3231 = vst [vmem:[%s354 + $0xd0] sm:$0xff] %v3191
        %3232 = vst [vmem:[%s354 + $0xd8] sm:$0xff] %v3193
        %3233 = vst [vmem:[%s354 + $0xe0] sm:$0xff] %v3197
        %3234 = vst [vmem:[%s354 + $0xe8] sm:$0xff] %v3199
        %3235 = vst [vmem:[%s354 + $0xf0] sm:$0xff] %v3201
        %3236 = vst [vmem:[%s354 + $0xf8] sm:$0xff] %v3203
        %s3237 = sand.u32 %s200, 1
        %s3238 = scalar_lea.sflag [#allocation7], %s3237
        %s3239 = sand.u32 %s200, 1
        %s3240 = smul.addr %s3239, 256
        %s3241 = scalar_lea.vmem [#allocation13], %s3240
        // Predicated region
        $region69: #{tpu_custom_call.1} parent=47 // pred_check
          %p3242 = pneg %p210
        $region70: #{tpu_custom_call.1} parent=47 // pred_check_branch
          %3244 = sbr.rel (%p3242) target = $region72
        $region71: #{tpu_custom_call.1} parent=47 // pred_region
          %s3245 = smul.u32 16, %s31
          %s3247 = ssub.s32 4096, 4096
          %3248 = vsyncadd %s3238, %s3247
          %s3249 = smul.addr %s3245, 2
          %s3250 = smul.addr %s30, 32
          %s3251 = sadd.s32 %s3249, %s3250
          %s3252 = smul.addr %s3251, 128
          %s3253 = scalar_lea.hbm %s7, %s3252
          %s3254 = sshll.u32 %s3241, 4
          %s3255 = int_to_ptr.vmem [resolvable:$true] %s3254
          %3260 = dma.vmem_to_hbm [thread:$0]  %s3255, 4096, %s3253, %s3238, 256, 256, 16
        $region72: #{tpu_custom_call.1} parent=47 // pred_fallthru
          _
      $region48: #{tpu_custom_call.1} parent=5 // pred_fallthru
        _
      %p3261 = scmp.le.s32.totalorder 2, %s21
      // Predicated region
      $region73: #{tpu_custom_call.1} parent=5 // pred_check
        %p3262 = pneg %p3261
      $region74: #{tpu_custom_call.1} parent=5 // pred_check_branch
        %3264 = sbr.rel (%p3262) target = $region76
      $region75: #{tpu_custom_call.1} parent=5 // pred_region
        %s3265 = ssub.s32 %s21, 2
        // Predicated region
        $region77: #{tpu_custom_call.1} parent=75 // pred_check
          %p3266 = pneg %p216
        $region78: #{tpu_custom_call.1} parent=75 // pred_check_branch
          %3268 = sbr.rel (%p3266) target = $region80
        $region79: #{tpu_custom_call.1} parent=75 // pred_region
          %s3269 = sand.u32 %s201, 1
          %s3270 = scalar_lea.sflag [#allocation7], %s3269
          %s3271 = sand.u32 %s201, 1
          %s3272 = smul.addr %s3271, 256
          %s3273 = scalar_lea.vmem [#allocation13], %s3272
          %3274 = dma.done %s3270, 4096
        $region80: #{tpu_custom_call.1} parent=75 // pred_fallthru
          _
      $region76: #{tpu_custom_call.1} parent=5 // pred_fallthru
        _
    $region6: #{tpu_custom_call.1} parent=1 // loop_footer
      %s25 = sadd.s32 1, %s21
    $region7: #{tpu_custom_call.1} parent=1 // loop_footer_branch
      %20 = sbr.rel target = $region3
    $region8: #{tpu_custom_call.1} parent=1 // loop_exit
      _
    %3275 = vsyncpa [#allocation6], 1
    %s3276 = scalar_lea.sflag [#allocation6], 1
    %3277 = vsyncpa %s3276, 1
    %3278 = vsyncpa [#allocation9], 1
    %3279 = vsyncpa [#allocation12], 1
    %3280 = vsyncpa [#allocation7], 1
    %s3281 = scalar_lea.sflag [#allocation7], 1
    %3282 = vsyncpa %s3281, 1

</llo_original>
